<compile_context>
chip_gen: v7x
topology: tpu7x:2x2x1
jax: 0.10.0
libtpu: 0.0.40
codegen_flags: <defaults>
</compile_context>

<pallas_src>
import jax
import jax.numpy as jnp
from jax import lax
from jax.experimental import pallas as pl
from jax.experimental.pallas import tpu as pltpu

# Static network dimensions (FashionMNIST 28x28x1 input).
H0 = W0 = 28
K = 5
C1 = 20            # conv1 out channels
H1 = W1 = 24       # conv1 output spatial
Hp1 = Wp1 = 12     # after pool1
C2 = 50            # conv2 out channels
H2 = W2 = 8        # conv2 output spatial
Hp2 = Wp2 = 4      # after pool2
F_IN = Hp2 * Wp2 * C2    # 800
F_HID = 500
F_OUT = 10

HALF = 256               # lane width of one W-parity half (>= 12*20=240, 4*50=200)
CONV_LANES = 2 * HALF    # 512
OUT_LANES = 128          # lane-padded logits width


# ----------------------------------------------------------------------------
# The fused kernel: NB samples per grid step.
# Activation layout: rows = h*NB + n, lanes = (w%2)*256 + (w//2)*C + c.
# ----------------------------------------------------------------------------
def _famnist_kernel(xw_ref, m1_ref, b1_ref, m2_ref, b2_ref,
                    wfc1_ref, bfc1_ref, wfc2_ref, bfc2_ref, out_ref):
    f32, bf16 = jnp.float32, jnp.bfloat16
    nb = xw_ref.shape[0] // H1          # samples per block (multiple of 8)

    # ---- conv1: one K=140 MXU contraction + bias + ReLU --------------------
    a1 = jnp.dot(xw_ref[...], m1_ref[...], preferred_element_type=f32)  # (24NB, 512)
    a1 = jnp.maximum(a1 + b1_ref[...], 0.0)

    # ---- pool1: W via aligned lane-half max, H via leading-dim pair max ----
    bw1 = jnp.maximum(a1[:, :HALF], a1[:, HALF:])          # (24NB, 256)
    bw1 = bw1.reshape(Hp1, 2, nb, HALF)
    bw1p = jnp.maximum(bw1[:, 0], bw1[:, 1])               # (12, NB, 256)

    # ---- conv2: 5 per-kh K=256 contractions, accumulated in f32 ------------
    def conv2_lhs(kh):
        return bw1p[kh:kh + H2].reshape(H2 * nb, HALF).astype(bf16)

    acc2 = jnp.dot(conv2_lhs(0), m2_ref[0], preferred_element_type=f32)
    for kh in range(1, K):
        acc2 = acc2 + jnp.dot(conv2_lhs(kh), m2_ref[kh], preferred_element_type=f32)
    a2 = jnp.maximum(acc2 + b2_ref[...], 0.0)              # (8NB, 512)

    # ---- pool2 --------------------------------------------------------------
    bw2 = jnp.maximum(a2[:, :HALF], a2[:, HALF:])          # (8NB, 256)
    bw2 = bw2.reshape(Hp2, 2, nb, HALF)
    bw2p = jnp.maximum(bw2[:, 0], bw2[:, 1])               # (4, NB, 256)

    # ---- fc1: single K=1024 contraction (aligned 256-lane concat) ----------
    lhs3 = jnp.concatenate([bw2p[i] for i in range(Hp2)], axis=-1)   # (NB, 1024)
    h = jnp.dot(lhs3.astype(bf16), wfc1_ref[...], preferred_element_type=f32)
    h = jnp.maximum(h + bfc1_ref[...], 0.0)                # (NB, 500)

    # ---- fc2 + log_softmax over the 128-lane padded block ------------------
    logits = jnp.dot(h.astype(bf16), wfc2_ref[...], preferred_element_type=f32)
    logits = logits + bfc2_ref[...]                        # pad lanes biased to -1e9
    mx = jnp.max(logits, axis=-1, keepdims=True)
    z = logits - mx
    lse = jnp.log(jnp.sum(jnp.exp(z), axis=-1, keepdims=True))
    out_ref[...] = z - lse


# ----------------------------------------------------------------------------
# One-time weight packing (PyTorch OIHW / (out,in) layouts -> kernel layout).
# ----------------------------------------------------------------------------
def prepare_params(p):
    f32, bf16 = jnp.float32, jnp.bfloat16

    def toeplitz(w_oihw, w_in, w_out):
        # (Co, Ci, K, K) -> (K, w_in*Ci, w_out, Co) per-kh block-Toeplitz.
        co, ci, kk, _ = w_oihw.shape
        wk = jnp.transpose(w_oihw, (2, 3, 1, 0))                 # (kh, kw, ci, co)
        wi = jnp.arange(w_in)[:, None]
        wo = jnp.arange(w_out)[None, :]
        kidx = wi - wo                                           # (w_in, w_out)
        valid = (kidx >= 0) & (kidx < kk)
        kidx = jnp.clip(kidx, 0, kk - 1)
        m = wk[:, kidx, :, :] * valid[None, :, :, None, None]    # (kh, wi, wo, ci, co)
        m = jnp.transpose(m, (0, 1, 3, 2, 4))                    # (kh, wi, ci, wo, co)
        return m.reshape(kk, w_in * ci, w_out, co).astype(f32)

    def lane_pack(m):
        """(..., w_out, c) -> (..., 512) with lane = (w%2)*256 + (w//2)*c_dim + c."""
        *lead, w_out, c = m.shape
        half = w_out // 2
        m = m.reshape(*lead, half, 2, c)
        m = jnp.swapaxes(m, -3, -2)                              # (..., 2, half, c)
        m = m.reshape(*lead, 2, half * c)
        m = jnp.pad(m, [(0, 0)] * (m.ndim - 1) + [(0, HALF - half * c)])
        return m.reshape(*lead, CONV_LANES)

    # conv1: (140, 512); conv2: (5, 256, 512) (16 zero-pad input rows per kh).
    m1 = lane_pack(toeplitz(p["conv1_w"], W0, W1)).reshape(K * W0, CONV_LANES)
    m2 = lane_pack(toeplitz(p["conv2_w"], Wp1, W2))              # (5, 240, 512)
    m2 = jnp.pad(m2, ((0, 0), (0, HALF - Wp1 * C1), (0, 0)))     # (5, 256, 512)

    b1 = lane_pack(jnp.broadcast_to(p["conv1_b"][None, :], (W1, C1))).reshape(1, CONV_LANES)
    b2 = lane_pack(jnp.broadcast_to(p["conv2_b"][None, :], (W2, C2))).reshape(1, CONV_LANES)

    # fc1: PyTorch flattens NCHW as (c, h, w); our lanes are hp2*256 + wp2*50 + c.
    wf = p["fc1_w"].reshape(F_HID, C2, Hp2, Wp2)
    wf = jnp.transpose(wf, (2, 3, 1, 0)).reshape(Hp2, Wp2 * C2, F_HID)
    wf = jnp.pad(wf, ((0, 0), (0, HALF - Wp2 * C2), (0, 0)))     # (4, 256, 500)
    wfc1 = wf.reshape(Hp2 * HALF, F_HID)

    # fc2: pad to 128 output lanes (zero weights, -1e9 bias on pad lanes).
    wfc2 = jnp.pad(jnp.transpose(p["fc2_w"]), ((0, 0), (0, OUT_LANES - F_OUT)))
    bfc2 = jnp.concatenate([p["fc2_b"].astype(f32),
                            jnp.full((OUT_LANES - F_OUT,), -1e9, f32)]).reshape(1, OUT_LANES)

    return {
        "m1": m1.astype(bf16), "b1": b1.astype(f32),
        "m2": m2.astype(bf16), "b2": b2.astype(f32),
        "wfc1": wfc1.astype(bf16), "bfc1": p["fc1_b"].reshape(1, F_HID).astype(f32),
        "wfc2": wfc2.astype(bf16), "bfc2": bfc2.astype(f32),
    }


# ----------------------------------------------------------------------------
# Wrapper: im2row over H once (outside the kernel), batch-blocked grid.
# ----------------------------------------------------------------------------
def famnist_forward(x_nchw, pk, nb=8):
    assert nb % 8 == 0, "nb must be a multiple of 8 (sublane tile)"
    n = x_nchw.shape[0]
    n_blk = -(-n // nb)                  # cdiv
    n_pad = n_blk * nb

    x3 = x_nchw.reshape(n, H0, W0).astype(jnp.float32)
    if n_pad != n:
        x3 = jnp.pad(x3, ((0, n_pad - n), (0, 0), (0, 0)))

    # im2row along H: xw[ho, n, kh*28 + w] = x[n, ho+kh, w]; reorder rows to
    # (block, ho, n-in-block) so each grid step reads one dense (192, 140) slab.
    xw = jnp.stack([x3[:, ho:ho + K, :].reshape(n_pad, K * W0) for ho in range(H1)],
                   axis=0)                                        # (24, n_pad, 140)
    xw = xw.reshape(H1, n_blk, nb, K * W0).transpose(1, 0, 2, 3)
    xw = xw.reshape(n_blk * H1 * nb, K * W0).astype(jnp.bfloat16)

    const2 = lambda i: (0, 0)
    const3 = lambda i: (0, 0, 0)

    out = pl.pallas_call(
        _famnist_kernel,
        out_shape=jax.ShapeDtypeStruct((n_pad, OUT_LANES), jnp.float32),
        grid=(n_blk,),
        in_specs=[
            pl.BlockSpec((H1 * nb, K * W0), lambda i: (i, 0)),      # xw (per-block)
            pl.BlockSpec((K * W0, CONV_LANES), const2),             # m1
            pl.BlockSpec((1, CONV_LANES), const2),                  # b1
            pl.BlockSpec((K, HALF, CONV_LANES), const3),            # m2
            pl.BlockSpec((1, CONV_LANES), const2),                  # b2
            pl.BlockSpec((Hp2 * HALF, F_HID), const2),              # wfc1
            pl.BlockSpec((1, F_HID), const2),                       # bfc1
            pl.BlockSpec((F_HID, OUT_LANES), const2),               # wfc2
            pl.BlockSpec((1, OUT_LANES), const2),                   # bfc2
        ],
        out_specs=pl.BlockSpec((nb, OUT_LANES), lambda i: (i, 0)),
        compiler_params=pltpu.CompilerParams(
            dimension_semantics=("parallel",),
            vmem_limit_bytes=32 * 1024 * 1024),
    )(xw, pk["m1"], pk["b1"], pk["m2"], pk["b2"],
      pk["wfc1"], pk["bfc1"], pk["wfc2"], pk["bfc2"])
    return out[:n, :F_OUT]


# ----------------------------------------------------------------------------
# Pure-JAX reference mimicking the PyTorch module exactly (f32).
# ----------------------------------------------------------------------------
def _ref_forward(x, p):
    dn = ("NCHW", "OIHW", "NCHW")
    hp = lax.Precision.HIGHEST
    y = lax.conv_general_dilated(x, p["conv1_w"], (1, 1), "VALID",
                                 dimension_numbers=dn, precision=hp)
    y = jax.nn.relu(y + p["conv1_b"].reshape(1, -1, 1, 1))
    y = lax.reduce_window(y, -jnp.inf, lax.max, (1, 1, 2, 2), (1, 1, 2, 2), "VALID")
    y = lax.conv_general_dilated(y, p["conv2_w"], (1, 1), "VALID",
                                 dimension_numbers=dn, precision=hp)
    y = jax.nn.relu(y + p["conv2_b"].reshape(1, -1, 1, 1))
    y = lax.reduce_window(y, -jnp.inf, lax.max, (1, 1, 2, 2), (1, 1, 2, 2), "VALID")
    y = y.reshape(y.shape[0], -1)                                 # NCHW flatten (c,h,w)
    y = jax.nn.relu(jnp.dot(y, p["fc1_w"].T, precision=hp) + p["fc1_b"])
    y = jnp.dot(y, p["fc2_w"].T, precision=hp) + p["fc2_b"]
    return jax.nn.log_softmax(y, axis=-1)


if __name__ == "__main__":
    key = jax.random.PRNGKey(0)
    kx, k1, k2, k3, k4, k5, k6, k7, k8 = jax.random.split(key, 9)

    N = 16                                 # 2 grid steps at NB=8 (feeds both v7x TCs)
    x = jax.random.normal(kx, (N, 1, H0, W0), jnp.float32)
    params = {
        "conv1_w": 0.1 * jax.random.normal(k1, (C1, 1, K, K), jnp.float32),
        "conv1_b": 0.1 * jax.random.normal(k2, (C1,), jnp.float32),
        "conv2_w": 0.05 * jax.random.normal(k3, (C2, C1, K, K), jnp.float32),
        "conv2_b": 0.1 * jax.random.normal(k4, (C2,), jnp.float32),
        "fc1_w": 0.05 * jax.random.normal(k5, (F_HID, F_IN), jnp.float32),
        "fc1_b": 0.1 * jax.random.normal(k6, (F_HID,), jnp.float32),
        "fc2_w": 0.05 * jax.random.normal(k7, (F_OUT, F_HID), jnp.float32),
        "fc2_b": 0.1 * jax.random.normal(k8, (F_OUT,), jnp.float32),
    }

    packed = prepare_params(params)        # one-time weight packing (bf16)
    fwd = jax.jit(famnist_forward, static_argnames=("nb",))
    out = jax.block_until_ready(fwd(x, packed))

    ref = jax.block_until_ready(_ref_forward(x, params))
    assert out.shape == ref.shape == (N, F_OUT)
    # bf16 MXU operands vs f32 reference -> slightly looser tolerance than pure f32.
    assert jnp.allclose(out, ref, rtol=2e-2, atol=2e-2), "mismatch vs JAX reference"
    print("KERNEL_OK")
</pallas_src>

<mosaic_0001>
module attributes {stable_mosaic.version = 11 : i64} {
  func.func @_famnist_kernel(%arg0: i32, %arg1: memref<192x140xbf16, #tpu.memory_space<vmem>>, %arg2: memref<140x512xbf16, #tpu.memory_space<vmem>>, %arg3: memref<1x512xf32, #tpu.memory_space<vmem>>, %arg4: memref<5x256x512xbf16, #tpu.memory_space<vmem>>, %arg5: memref<1x512xf32, #tpu.memory_space<vmem>>, %arg6: memref<1024x500xbf16, #tpu.memory_space<vmem>>, %arg7: memref<1x500xf32, #tpu.memory_space<vmem>>, %arg8: memref<500x128xbf16, #tpu.memory_space<vmem>>, %arg9: memref<1x128xf32, #tpu.memory_space<vmem>>, %arg10: memref<8x128xf32, #tpu.memory_space<vmem>>) attributes {dimension_semantics = [#tpu.dimension_semantics<parallel>], iteration_bounds = array<i64: 2>, scalar_prefetch = 0 : i64, scratch_operands = 0 : i64, tpu.core_type = #tpu.core_type<tc>, window_params = [{transform_indices = @transform_0, window_bounds = array<i64: 192, 140>}, {pipeline_mode = #tpu.pipeline_mode<synchronous>, transform_indices = @transform_1, window_bounds = array<i64: 140, 512>}, {pipeline_mode = #tpu.pipeline_mode<synchronous>, transform_indices = @transform_2, window_bounds = array<i64: 1, 512>}, {pipeline_mode = #tpu.pipeline_mode<synchronous>, transform_indices = @transform_3, window_bounds = array<i64: 5, 256, 512>}, {pipeline_mode = #tpu.pipeline_mode<synchronous>, transform_indices = @transform_4, window_bounds = array<i64: 1, 512>}, {pipeline_mode = #tpu.pipeline_mode<synchronous>, transform_indices = @transform_5, window_bounds = array<i64: 1024, 500>}, {pipeline_mode = #tpu.pipeline_mode<synchronous>, transform_indices = @transform_6, window_bounds = array<i64: 1, 500>}, {pipeline_mode = #tpu.pipeline_mode<synchronous>, transform_indices = @transform_7, window_bounds = array<i64: 500, 128>}, {pipeline_mode = #tpu.pipeline_mode<synchronous>, transform_indices = @transform_8, window_bounds = array<i64: 1, 128>}, {transform_indices = @transform_9, window_bounds = array<i64: 8, 128>}]} {
    %c0 = arith.constant 0 : index
    %c0_0 = arith.constant 0 : index
    %0 = vector.load %arg1[%c0, %c0_0] : memref<192x140xbf16, #tpu.memory_space<vmem>>, vector<192x140xbf16>
    %c0_1 = arith.constant 0 : index
    %c0_2 = arith.constant 0 : index
    %1 = vector.load %arg2[%c0_1, %c0_2] : memref<140x512xbf16, #tpu.memory_space<vmem>>, vector<140x512xbf16>
    %cst = arith.constant dense<0.000000e+00> : vector<192x512xf32>
    %2 = tpu.matmul %0, %1, %cst {dimension_numbers = #tpu.dot_dimension_numbers<[1], [0], [0], [1], [0, 0, 1, 1], [], []>} : vector<192x140xbf16>, vector<140x512xbf16>, vector<192x512xf32> -> vector<192x512xf32>
    %c0_3 = arith.constant 0 : index
    %c0_4 = arith.constant 0 : index
    %3 = vector.load %arg3[%c0_3, %c0_4] : memref<1x512xf32, #tpu.memory_space<vmem>>, vector<1x512xf32>
    %4 = vector.broadcast %3 : vector<1x512xf32> to vector<192x512xf32>
    %5 = arith.addf %2, %4 : vector<192x512xf32>
    %cst_5 = arith.constant 0.000000e+00 : f32
    %6 = vector.broadcast %cst_5 : f32 to vector<192x512xf32>
    %7 = arith.maximumf %5, %6 : vector<192x512xf32>
    %8 = vector.extract_strided_slice %7 {offsets = [0, 0], sizes = [192, 256], strides = [1, 1]} : vector<192x512xf32> to vector<192x256xf32>
    %9 = vector.extract_strided_slice %7 {offsets = [0, 256], sizes = [192, 256], strides = [1, 1]} : vector<192x512xf32> to vector<192x256xf32>
    %10 = arith.maximumf %8, %9 : vector<192x256xf32>
    %11 = vector.shape_cast %10 : vector<192x256xf32> to vector<12x2x8x256xf32>
    %12 = vector.extract_strided_slice %11 {offsets = [0, 0, 0, 0], sizes = [12, 1, 8, 256], strides = [1, 1, 1, 1]} : vector<12x2x8x256xf32> to vector<12x1x8x256xf32>
    %13 = vector.shape_cast %12 : vector<12x1x8x256xf32> to vector<12x8x256xf32>
    %14 = vector.extract_strided_slice %11 {offsets = [0, 1, 0, 0], sizes = [12, 1, 8, 256], strides = [1, 1, 1, 1]} : vector<12x2x8x256xf32> to vector<12x1x8x256xf32>
    %15 = vector.shape_cast %14 : vector<12x1x8x256xf32> to vector<12x8x256xf32>
    %16 = arith.maximumf %13, %15 : vector<12x8x256xf32>
    %17 = vector.extract_strided_slice %16 {offsets = [0, 0, 0], sizes = [8, 8, 256], strides = [1, 1, 1]} : vector<12x8x256xf32> to vector<8x8x256xf32>
    %18 = vector.shape_cast %17 : vector<8x8x256xf32> to vector<64x256xf32>
    %19 = arith.truncf %18 : vector<64x256xf32> to vector<64x256xbf16>
    %c0_6 = arith.constant 0 : index
    %c0_7 = arith.constant 0 : index
    %c0_8 = arith.constant 0 : index
    %20 = vector.load %arg4[%c0_6, %c0_7, %c0_8] : memref<5x256x512xbf16, #tpu.memory_space<vmem>>, vector<1x256x512xbf16>
    %21 = vector.shape_cast %20 : vector<1x256x512xbf16> to vector<256x512xbf16>
    %cst_9 = arith.constant dense<0.000000e+00> : vector<64x512xf32>
    %22 = tpu.matmul %19, %21, %cst_9 {dimension_numbers = #tpu.dot_dimension_numbers<[1], [0], [0], [1], [0, 0, 1, 1], [], []>} : vector<64x256xbf16>, vector<256x512xbf16>, vector<64x512xf32> -> vector<64x512xf32>
    %23 = vector.extract_strided_slice %16 {offsets = [1, 0, 0], sizes = [8, 8, 256], strides = [1, 1, 1]} : vector<12x8x256xf32> to vector<8x8x256xf32>
    %24 = vector.shape_cast %23 : vector<8x8x256xf32> to vector<64x256xf32>
    %25 = arith.truncf %24 : vector<64x256xf32> to vector<64x256xbf16>
    %c1 = arith.constant 1 : index
    %c0_10 = arith.constant 0 : index
    %c0_11 = arith.constant 0 : index
    %26 = vector.load %arg4[%c1, %c0_10, %c0_11] : memref<5x256x512xbf16, #tpu.memory_space<vmem>>, vector<1x256x512xbf16>
    %27 = vector.shape_cast %26 : vector<1x256x512xbf16> to vector<256x512xbf16>
    %cst_12 = arith.constant dense<0.000000e+00> : vector<64x512xf32>
    %28 = tpu.matmul %25, %27, %cst_12 {dimension_numbers = #tpu.dot_dimension_numbers<[1], [0], [0], [1], [0, 0, 1, 1], [], []>} : vector<64x256xbf16>, vector<256x512xbf16>, vector<64x512xf32> -> vector<64x512xf32>
    %29 = arith.addf %22, %28 : vector<64x512xf32>
    %30 = vector.extract_strided_slice %16 {offsets = [2, 0, 0], sizes = [8, 8, 256], strides = [1, 1, 1]} : vector<12x8x256xf32> to vector<8x8x256xf32>
    %31 = vector.shape_cast %30 : vector<8x8x256xf32> to vector<64x256xf32>
    %32 = arith.truncf %31 : vector<64x256xf32> to vector<64x256xbf16>
    %c2 = arith.constant 2 : index
    %c0_13 = arith.constant 0 : index
    %c0_14 = arith.constant 0 : index
    %33 = vector.load %arg4[%c2, %c0_13, %c0_14] : memref<5x256x512xbf16, #tpu.memory_space<vmem>>, vector<1x256x512xbf16>
    %34 = vector.shape_cast %33 : vector<1x256x512xbf16> to vector<256x512xbf16>
    %cst_15 = arith.constant dense<0.000000e+00> : vector<64x512xf32>
    %35 = tpu.matmul %32, %34, %cst_15 {dimension_numbers = #tpu.dot_dimension_numbers<[1], [0], [0], [1], [0, 0, 1, 1], [], []>} : vector<64x256xbf16>, vector<256x512xbf16>, vector<64x512xf32> -> vector<64x512xf32>
    %36 = arith.addf %29, %35 : vector<64x512xf32>
    %37 = vector.extract_strided_slice %16 {offsets = [3, 0, 0], sizes = [8, 8, 256], strides = [1, 1, 1]} : vector<12x8x256xf32> to vector<8x8x256xf32>
    %38 = vector.shape_cast %37 : vector<8x8x256xf32> to vector<64x256xf32>
    %39 = arith.truncf %38 : vector<64x256xf32> to vector<64x256xbf16>
    %c3 = arith.constant 3 : index
    %c0_16 = arith.constant 0 : index
    %c0_17 = arith.constant 0 : index
    %40 = vector.load %arg4[%c3, %c0_16, %c0_17] : memref<5x256x512xbf16, #tpu.memory_space<vmem>>, vector<1x256x512xbf16>
    %41 = vector.shape_cast %40 : vector<1x256x512xbf16> to vector<256x512xbf16>
    %cst_18 = arith.constant dense<0.000000e+00> : vector<64x512xf32>
    %42 = tpu.matmul %39, %41, %cst_18 {dimension_numbers = #tpu.dot_dimension_numbers<[1], [0], [0], [1], [0, 0, 1, 1], [], []>} : vector<64x256xbf16>, vector<256x512xbf16>, vector<64x512xf32> -> vector<64x512xf32>
    %43 = arith.addf %36, %42 : vector<64x512xf32>
    %44 = vector.extract_strided_slice %16 {offsets = [4, 0, 0], sizes = [8, 8, 256], strides = [1, 1, 1]} : vector<12x8x256xf32> to vector<8x8x256xf32>
    %45 = vector.shape_cast %44 : vector<8x8x256xf32> to vector<64x256xf32>
    %46 = arith.truncf %45 : vector<64x256xf32> to vector<64x256xbf16>
    %c4 = arith.constant 4 : index
    %c0_19 = arith.constant 0 : index
    %c0_20 = arith.constant 0 : index
    %47 = vector.load %arg4[%c4, %c0_19, %c0_20] : memref<5x256x512xbf16, #tpu.memory_space<vmem>>, vector<1x256x512xbf16>
    %48 = vector.shape_cast %47 : vector<1x256x512xbf16> to vector<256x512xbf16>
    %cst_21 = arith.constant dense<0.000000e+00> : vector<64x512xf32>
    %49 = tpu.matmul %46, %48, %cst_21 {dimension_numbers = #tpu.dot_dimension_numbers<[1], [0], [0], [1], [0, 0, 1, 1], [], []>} : vector<64x256xbf16>, vector<256x512xbf16>, vector<64x512xf32> -> vector<64x512xf32>
    %50 = arith.addf %43, %49 : vector<64x512xf32>
    %c0_22 = arith.constant 0 : index
    %c0_23 = arith.constant 0 : index
    %51 = vector.load %arg5[%c0_22, %c0_23] : memref<1x512xf32, #tpu.memory_space<vmem>>, vector<1x512xf32>
    %52 = vector.broadcast %51 : vector<1x512xf32> to vector<64x512xf32>
    %53 = arith.addf %50, %52 : vector<64x512xf32>
    %cst_24 = arith.constant 0.000000e+00 : f32
    %54 = vector.broadcast %cst_24 : f32 to vector<64x512xf32>
    %55 = arith.maximumf %53, %54 : vector<64x512xf32>
    %56 = vector.extract_strided_slice %55 {offsets = [0, 0], sizes = [64, 256], strides = [1, 1]} : vector<64x512xf32> to vector<64x256xf32>
    %57 = vector.extract_strided_slice %55 {offsets = [0, 256], sizes = [64, 256], strides = [1, 1]} : vector<64x512xf32> to vector<64x256xf32>
    %58 = arith.maximumf %56, %57 : vector<64x256xf32>
    %59 = vector.shape_cast %58 : vector<64x256xf32> to vector<4x2x8x256xf32>
    %60 = vector.extract_strided_slice %59 {offsets = [0, 0, 0, 0], sizes = [4, 1, 8, 256], strides = [1, 1, 1, 1]} : vector<4x2x8x256xf32> to vector<4x1x8x256xf32>
    %61 = vector.shape_cast %60 : vector<4x1x8x256xf32> to vector<4x8x256xf32>
    %62 = vector.extract_strided_slice %59 {offsets = [0, 1, 0, 0], sizes = [4, 1, 8, 256], strides = [1, 1, 1, 1]} : vector<4x2x8x256xf32> to vector<4x1x8x256xf32>
    %63 = vector.shape_cast %62 : vector<4x1x8x256xf32> to vector<4x8x256xf32>
    %64 = arith.maximumf %61, %63 : vector<4x8x256xf32>
    %65 = vector.extract_strided_slice %64 {offsets = [0, 0, 0], sizes = [1, 8, 256], strides = [1, 1, 1]} : vector<4x8x256xf32> to vector<1x8x256xf32>
    %66 = vector.shape_cast %65 : vector<1x8x256xf32> to vector<8x256xf32>
    %67 = vector.extract_strided_slice %64 {offsets = [1, 0, 0], sizes = [1, 8, 256], strides = [1, 1, 1]} : vector<4x8x256xf32> to vector<1x8x256xf32>
    %68 = vector.shape_cast %67 : vector<1x8x256xf32> to vector<8x256xf32>
    %69 = vector.extract_strided_slice %64 {offsets = [2, 0, 0], sizes = [1, 8, 256], strides = [1, 1, 1]} : vector<4x8x256xf32> to vector<1x8x256xf32>
    %70 = vector.shape_cast %69 : vector<1x8x256xf32> to vector<8x256xf32>
    %71 = vector.extract_strided_slice %64 {offsets = [3, 0, 0], sizes = [1, 8, 256], strides = [1, 1, 1]} : vector<4x8x256xf32> to vector<1x8x256xf32>
    %72 = vector.shape_cast %71 : vector<1x8x256xf32> to vector<8x256xf32>
    %73 = tpu.concatenate %66, %68, %70, %72 in 1 : vector<8x256xf32>, vector<8x256xf32>, vector<8x256xf32>, vector<8x256xf32> -> vector<8x1024xf32>
    %74 = arith.truncf %73 : vector<8x1024xf32> to vector<8x1024xbf16>
    %c0_25 = arith.constant 0 : index
    %c0_26 = arith.constant 0 : index
    %75 = vector.load %arg6[%c0_25, %c0_26] : memref<1024x500xbf16, #tpu.memory_space<vmem>>, vector<1024x500xbf16>
    %cst_27 = arith.constant dense<0.000000e+00> : vector<8x500xf32>
    %76 = tpu.matmul %74, %75, %cst_27 {dimension_numbers = #tpu.dot_dimension_numbers<[1], [0], [0], [1], [0, 0, 1, 1], [], []>} : vector<8x1024xbf16>, vector<1024x500xbf16>, vector<8x500xf32> -> vector<8x500xf32>
    %c0_28 = arith.constant 0 : index
    %c0_29 = arith.constant 0 : index
    %77 = vector.load %arg7[%c0_28, %c0_29] : memref<1x500xf32, #tpu.memory_space<vmem>>, vector<1x500xf32>
    %78 = vector.broadcast %77 : vector<1x500xf32> to vector<8x500xf32>
    %79 = arith.addf %76, %78 : vector<8x500xf32>
    %cst_30 = arith.constant 0.000000e+00 : f32
    %80 = vector.broadcast %cst_30 : f32 to vector<8x500xf32>
    %81 = arith.maximumf %79, %80 : vector<8x500xf32>
    %82 = arith.truncf %81 : vector<8x500xf32> to vector<8x500xbf16>
    %c0_31 = arith.constant 0 : index
    %c0_32 = arith.constant 0 : index
    %83 = vector.load %arg8[%c0_31, %c0_32] : memref<500x128xbf16, #tpu.memory_space<vmem>>, vector<500x128xbf16>
    %cst_33 = arith.constant dense<0.000000e+00> : vector<8x128xf32>
    %84 = tpu.matmul %82, %83, %cst_33 {dimension_numbers = #tpu.dot_dimension_numbers<[1], [0], [0], [1], [0, 0, 1, 1], [], []>} : vector<8x500xbf16>, vector<500x128xbf16>, vector<8x128xf32> -> vector<8x128xf32>
    %c0_34 = arith.constant 0 : index
    %c0_35 = arith.constant 0 : index
    %85 = vector.load %arg9[%c0_34, %c0_35] : memref<1x128xf32, #tpu.memory_space<vmem>>, vector<1x128xf32>
    %86 = vector.broadcast %85 : vector<1x128xf32> to vector<8x128xf32>
    %87 = arith.addf %84, %86 : vector<8x128xf32>
    %cst_36 = arith.constant dense<0xFF800000> : vector<8xf32>
    %88 = vector.multi_reduction <maximumf>, %87, %cst_36 [1] : vector<8x128xf32> to vector<8xf32>
    %89 = vector.shape_cast %88 : vector<8xf32> to vector<8x1xf32>
    %90 = vector.broadcast %89 : vector<8x1xf32> to vector<8x128xf32>
    %91 = arith.subf %87, %90 : vector<8x128xf32>
    %92 = math.exp %91 : vector<8x128xf32>
    %cst_37 = arith.constant dense<0.000000e+00> : vector<8xf32>
    %93 = vector.multi_reduction <add>, %92, %cst_37 [1] : vector<8x128xf32> to vector<8xf32>
    %94 = vector.shape_cast %93 : vector<8xf32> to vector<8x1xf32>
    %95 = math.log %94 : vector<8x1xf32>
    %96 = vector.broadcast %95 : vector<8x1xf32> to vector<8x128xf32>
    %97 = arith.subf %91, %96 : vector<8x128xf32>
    %c0_38 = arith.constant 0 : index
    %c0_39 = arith.constant 0 : index
    %98 = vector.load %arg10[%c0_38, %c0_39] : memref<8x128xf32, #tpu.memory_space<vmem>>, vector<8x128xf32>
    tpu.vector_store %arg10[%c0_38, %c0_39], %97 {strides = array<i32>} : memref<8x128xf32, #tpu.memory_space<vmem>>, vector<8x128xf32>,
    return
  }
  func.func @transform_0(%arg0: i32) -> (i32, i32) {
    %c0_i32 = arith.constant 0 : i32
    %c0_i32_0 = arith.constant 0 : i32
    return %arg0, %c0_i32 : i32, i32
  }
  func.func @transform_1(%arg0: i32) -> (i32, i32) {
    %c0_i32 = arith.constant 0 : i32
    %c0_i32_0 = arith.constant 0 : i32
    %c0_i32_1 = arith.constant 0 : i32
    return %c0_i32, %c0_i32_0 : i32, i32
  }
  func.func @transform_2(%arg0: i32) -> (i32, i32) {
    %c0_i32 = arith.constant 0 : i32
    %c0_i32_0 = arith.constant 0 : i32
    %c0_i32_1 = arith.constant 0 : i32
    return %c0_i32, %c0_i32_0 : i32, i32
  }
  func.func @transform_3(%arg0: i32) -> (i32, i32, i32) {
    %c0_i32 = arith.constant 0 : i32
    %c0_i32_0 = arith.constant 0 : i32
    %c0_i32_1 = arith.constant 0 : i32
    %c0_i32_2 = arith.constant 0 : i32
    return %c0_i32, %c0_i32_0, %c0_i32_1 : i32, i32, i32
  }
  func.func @transform_4(%arg0: i32) -> (i32, i32) {
    %c0_i32 = arith.constant 0 : i32
    %c0_i32_0 = arith.constant 0 : i32
    %c0_i32_1 = arith.constant 0 : i32
    return %c0_i32, %c0_i32_0 : i32, i32
  }
  func.func @transform_5(%arg0: i32) -> (i32, i32) {
    %c0_i32 = arith.constant 0 : i32
    %c0_i32_0 = arith.constant 0 : i32
    %c0_i32_1 = arith.constant 0 : i32
    return %c0_i32, %c0_i32_0 : i32, i32
  }
  func.func @transform_6(%arg0: i32) -> (i32, i32) {
    %c0_i32 = arith.constant 0 : i32
    %c0_i32_0 = arith.constant 0 : i32
    %c0_i32_1 = arith.constant 0 : i32
    return %c0_i32, %c0_i32_0 : i32, i32
  }
  func.func @transform_7(%arg0: i32) -> (i32, i32) {
    %c0_i32 = arith.constant 0 : i32
    %c0_i32_0 = arith.constant 0 : i32
    %c0_i32_1 = arith.constant 0 : i32
    return %c0_i32, %c0_i32_0 : i32, i32
  }
  func.func @transform_8(%arg0: i32) -> (i32, i32) {
    %c0_i32 = arith.constant 0 : i32
    %c0_i32_0 = arith.constant 0 : i32
    %c0_i32_1 = arith.constant 0 : i32
    return %c0_i32, %c0_i32_0 : i32, i32
  }
  func.func @transform_9(%arg0: i32) -> (i32, i32) {
    %c0_i32 = arith.constant 0 : i32
    %c0_i32_0 = arith.constant 0 : i32
    return %arg0, %c0_i32 : i32, i32
  }
}

</mosaic_0001>

<llo_original>
// kernel: famnist_forward.1
$region0: #{famnist_forward.1}
  #allocation0 [shape = 'u32[]', space=smem, size = 0x4, offset = 0x4, fixed_abs, tag = 'smem constant byte address 0x4 - core index']
  #allocation1 [shape = 'u32[144,128]{1,0:T(1,128)}', space=vmem, size = 0x12000, scoped, tag = 'internal scratch']
  %s0 = inlined_call_operand.vmem [shape: bf16[384,140], index: 0, kind: input, shape index: {}]
  %s1 = inlined_call_operand.vmem [shape: bf16[140,512], index: 1, kind: input, shape index: {}]
  %s2 = inlined_call_operand.vmem [shape: f32[1,512], index: 2, kind: input, shape index: {}]
  %s3 = inlined_call_operand.vmem [shape: bf16[5,256,512], index: 3, kind: input, shape index: {}]
  %s4 = inlined_call_operand.vmem [shape: f32[1,512], index: 4, kind: input, shape index: {}]
  %s5 = inlined_call_operand.vmem [shape: bf16[1024,500], index: 5, kind: input, shape index: {}]
  %s6 = inlined_call_operand.vmem [shape: f32[1,500], index: 6, kind: input, shape index: {}]
  %s7 = inlined_call_operand.vmem [shape: bf16[500,128], index: 7, kind: input, shape index: {}]
  %s8 = inlined_call_operand.vmem [shape: f32[1,128], index: 8, kind: input, shape index: {}]
  %s9 = inlined_call_operand.hbm [shape: f32[16,128], index: 9, kind: output, shape index: {}]
  %s10 = sld [smem:[#allocation0]]
  $region69: #{famnist_forward.1} parent=0
    _
  %s12 = ssub.s32 1, %s10
  %s13 = scalar_select 0, %s12, %s10
  $region1: #{famnist_forward.1} parent=0
    #allocation2 [shape = 'u8[8192]{0}', space=vmem, size = 0x2000, scoped, tag = 'output window, operand 0']
    #allocation3 [shape = 's32[2]{0}', space=sflag, size = 0x8, scoped, tag = 'scoped memory for famnist_forward.1']
    %14 = vsyncpa [#allocation3], 0
    %s15 = scalar_lea.sflag [#allocation3], 1
    %16 = vsyncpa %s15, 0
    loop: start=0, step=1, limit=4
    $region2: #{famnist_forward.1} parent=1 // loop_pre_header
      _
    $region3: #{famnist_forward.1} parent=1 // loop_header
      %s18 = sphi 0, %s22
      %p19 = scmp.ge.s32.totalorder %s18, 4
      %s28 = sphi 0, %s30
      %s31 = sphi 0, %s28
      %s32 = sphi 0, %s31
      %s48 = sphi 0, %s32
      %s52 = sphi 0, %s52
      %s54 = sphi 0, %s52
      %s55 = sphi 0, %s54
      %s69 = sphi 0, %s55
      %s73 = sphi 0, %s73
      %s75 = sphi 0, %s73
      %s76 = sphi 0, %s75
      %s90 = sphi 0, %s76
      %s94 = sphi 0, %s94
      %s96 = sphi 0, %s94
      %s97 = sphi 0, %s96
      %s111 = sphi 0, %s97
      %s115 = sphi 0, %s115
      %s117 = sphi 0, %s115
      %s118 = sphi 0, %s117
      %s132 = sphi 0, %s118
      %s136 = sphi 0, %s136
      %s138 = sphi 0, %s136
      %s139 = sphi 0, %s138
      %s153 = sphi 0, %s139
      %s157 = sphi 0, %s157
      %s159 = sphi 0, %s157
      %s160 = sphi 0, %s159
      %s174 = sphi 0, %s160
      %s178 = sphi 0, %s178
      %s180 = sphi 0, %s178
      %s181 = sphi 0, %s180
      %s195 = sphi 0, %s181
      %s199 = sphi 0, %s199
      %s201 = sphi 0, %s199
      %s202 = sphi 0, %s201
      %s216 = sphi 0, %s202
      %s222 = sphi 0, %s224
      %s225 = sphi 0, %s222
      %s226 = sphi 0, %s225
      %s242 = sphi 0, %s226
    $region4: #{famnist_forward.1} parent=1 // loop_header_branch
      %21 = sbr.rel (%p19) target = $region8
    $region5: #{famnist_forward.1} parent=1 // loop_body
      %s23 = ssub.s32 %s18, 1
      %s24 = ssub.s32 %s18, 2
      %s25 = sadd.s32 %s18, 1
      %s26 = ssub.s32 %s18, %s25
      %p27 = scmp.eq.s32.totalorder %s26, 0
      %s29 = sadd.s32 %s28, 1
      %s30 = scalar_select %p27, %s28, %s29
      %p33 = pneg %p27
      %p34 = scmp.eq.s32.totalorder %s18, 1
      %p35 = por %p33, %p34
      %p36 = scmp.ne.s32.totalorder %s28, %s31
      %p37 = scmp.eq.s32.totalorder %s18, 0
      %p38 = por %p36, %p37
      %p39 = scmp.ne.s32.totalorder %s28, %s31
      %p40 = scmp.eq.s32.totalorder %s23, 1
      %p41 = por %p39, %p40
      %p42 = scmp.ne.s32.totalorder %s31, %s32
      %p43 = scmp.eq.s32.totalorder %s23, 0
      %p44 = por %p42, %p43
      %p45 = scmp.ne.s32.totalorder %s31, %s32
      %p46 = scmp.eq.s32.totalorder %s24, 1
      %p47 = por %p45, %p46
      %p49 = scmp.ne.s32.totalorder %s32, %s48
      %p50 = scmp.eq.s32.totalorder %s24, 0
      %p51 = por %p49, %p50
      %s53 = sadd.s32 %s52, 1
      %p56 = scmp.eq.s32.totalorder %s18, 1
      %p57 = scmp.ne.s32.totalorder %s52, %s54
      %p58 = scmp.eq.s32.totalorder %s18, 0
      %p59 = por %p57, %p58
      %p60 = scmp.ne.s32.totalorder %s52, %s54
      %p61 = scmp.eq.s32.totalorder %s23, 1
      %p62 = por %p60, %p61
      %p63 = scmp.ne.s32.totalorder %s54, %s55
      %p64 = scmp.eq.s32.totalorder %s23, 0
      %p65 = por %p63, %p64
      %p66 = scmp.ne.s32.totalorder %s54, %s55
      %p67 = scmp.eq.s32.totalorder %s24, 1
      %p68 = por %p66, %p67
      %p70 = scmp.ne.s32.totalorder %s55, %s69
      %p71 = scmp.eq.s32.totalorder %s24, 0
      %p72 = por %p70, %p71
      %s74 = sadd.s32 %s73, 1
      %p77 = scmp.eq.s32.totalorder %s18, 1
      %p78 = scmp.ne.s32.totalorder %s73, %s75
      %p79 = scmp.eq.s32.totalorder %s18, 0
      %p80 = por %p78, %p79
      %p81 = scmp.ne.s32.totalorder %s73, %s75
      %p82 = scmp.eq.s32.totalorder %s23, 1
      %p83 = por %p81, %p82
      %p84 = scmp.ne.s32.totalorder %s75, %s76
      %p85 = scmp.eq.s32.totalorder %s23, 0
      %p86 = por %p84, %p85
      %p87 = scmp.ne.s32.totalorder %s75, %s76
      %p88 = scmp.eq.s32.totalorder %s24, 1
      %p89 = por %p87, %p88
      %p91 = scmp.ne.s32.totalorder %s76, %s90
      %p92 = scmp.eq.s32.totalorder %s24, 0
      %p93 = por %p91, %p92
      %s95 = sadd.s32 %s94, 1
      %p98 = scmp.eq.s32.totalorder %s18, 1
      %p99 = scmp.ne.s32.totalorder %s94, %s96
      %p100 = scmp.eq.s32.totalorder %s18, 0
      %p101 = por %p99, %p100
      %p102 = scmp.ne.s32.totalorder %s94, %s96
      %p103 = scmp.eq.s32.totalorder %s23, 1
      %p104 = por %p102, %p103
      %p105 = scmp.ne.s32.totalorder %s96, %s97
      %p106 = scmp.eq.s32.totalorder %s23, 0
      %p107 = por %p105, %p106
      %p108 = scmp.ne.s32.totalorder %s96, %s97
      %p109 = scmp.eq.s32.totalorder %s24, 1
      %p110 = por %p108, %p109
      %p112 = scmp.ne.s32.totalorder %s97, %s111
      %p113 = scmp.eq.s32.totalorder %s24, 0
      %p114 = por %p112, %p113
      %s116 = sadd.s32 %s115, 1
      %p119 = scmp.eq.s32.totalorder %s18, 1
      %p120 = scmp.ne.s32.totalorder %s115, %s117
      %p121 = scmp.eq.s32.totalorder %s18, 0
      %p122 = por %p120, %p121
      %p123 = scmp.ne.s32.totalorder %s115, %s117
      %p124 = scmp.eq.s32.totalorder %s23, 1
      %p125 = por %p123, %p124
      %p126 = scmp.ne.s32.totalorder %s117, %s118
      %p127 = scmp.eq.s32.totalorder %s23, 0
      %p128 = por %p126, %p127
      %p129 = scmp.ne.s32.totalorder %s117, %s118
      %p130 = scmp.eq.s32.totalorder %s24, 1
      %p131 = por %p129, %p130
      %p133 = scmp.ne.s32.totalorder %s118, %s132
      %p134 = scmp.eq.s32.totalorder %s24, 0
      %p135 = por %p133, %p134
      %s137 = sadd.s32 %s136, 1
      %p140 = scmp.eq.s32.totalorder %s18, 1
      %p141 = scmp.ne.s32.totalorder %s136, %s138
      %p142 = scmp.eq.s32.totalorder %s18, 0
      %p143 = por %p141, %p142
      %p144 = scmp.ne.s32.totalorder %s136, %s138
      %p145 = scmp.eq.s32.totalorder %s23, 1
      %p146 = por %p144, %p145
      %p147 = scmp.ne.s32.totalorder %s138, %s139
      %p148 = scmp.eq.s32.totalorder %s23, 0
      %p149 = por %p147, %p148
      %p150 = scmp.ne.s32.totalorder %s138, %s139
      %p151 = scmp.eq.s32.totalorder %s24, 1
      %p152 = por %p150, %p151
      %p154 = scmp.ne.s32.totalorder %s139, %s153
      %p155 = scmp.eq.s32.totalorder %s24, 0
      %p156 = por %p154, %p155
      %s158 = sadd.s32 %s157, 1
      %p161 = scmp.eq.s32.totalorder %s18, 1
      %p162 = scmp.ne.s32.totalorder %s157, %s159
      %p163 = scmp.eq.s32.totalorder %s18, 0
      %p164 = por %p162, %p163
      %p165 = scmp.ne.s32.totalorder %s157, %s159
      %p166 = scmp.eq.s32.totalorder %s23, 1
      %p167 = por %p165, %p166
      %p168 = scmp.ne.s32.totalorder %s159, %s160
      %p169 = scmp.eq.s32.totalorder %s23, 0
      %p170 = por %p168, %p169
      %p171 = scmp.ne.s32.totalorder %s159, %s160
      %p172 = scmp.eq.s32.totalorder %s24, 1
      %p173 = por %p171, %p172
      %p175 = scmp.ne.s32.totalorder %s160, %s174
      %p176 = scmp.eq.s32.totalorder %s24, 0
      %p177 = por %p175, %p176
      %s179 = sadd.s32 %s178, 1
      %p182 = scmp.eq.s32.totalorder %s18, 1
      %p183 = scmp.ne.s32.totalorder %s178, %s180
      %p184 = scmp.eq.s32.totalorder %s18, 0
      %p185 = por %p183, %p184
      %p186 = scmp.ne.s32.totalorder %s178, %s180
      %p187 = scmp.eq.s32.totalorder %s23, 1
      %p188 = por %p186, %p187
      %p189 = scmp.ne.s32.totalorder %s180, %s181
      %p190 = scmp.eq.s32.totalorder %s23, 0
      %p191 = por %p189, %p190
      %p192 = scmp.ne.s32.totalorder %s180, %s181
      %p193 = scmp.eq.s32.totalorder %s24, 1
      %p194 = por %p192, %p193
      %p196 = scmp.ne.s32.totalorder %s181, %s195
      %p197 = scmp.eq.s32.totalorder %s24, 0
      %p198 = por %p196, %p197
      %s200 = sadd.s32 %s199, 1
      %p203 = scmp.eq.s32.totalorder %s18, 1
      %p204 = scmp.ne.s32.totalorder %s199, %s201
      %p205 = scmp.eq.s32.totalorder %s18, 0
      %p206 = por %p204, %p205
      %p207 = scmp.ne.s32.totalorder %s199, %s201
      %p208 = scmp.eq.s32.totalorder %s23, 1
      %p209 = por %p207, %p208
      %p210 = scmp.ne.s32.totalorder %s201, %s202
      %p211 = scmp.eq.s32.totalorder %s23, 0
      %p212 = por %p210, %p211
      %p213 = scmp.ne.s32.totalorder %s201, %s202
      %p214 = scmp.eq.s32.totalorder %s24, 1
      %p215 = por %p213, %p214
      %p217 = scmp.ne.s32.totalorder %s202, %s216
      %p218 = scmp.eq.s32.totalorder %s24, 0
      %p219 = por %p217, %p218
      %s220 = ssub.s32 %s18, %s25
      %p221 = scmp.eq.s32.totalorder %s220, 0
      %s223 = sadd.s32 %s222, 1
      %s224 = scalar_select %p221, %s222, %s223
      %p227 = pneg %p221
      %p228 = scmp.eq.s32.totalorder %s18, 1
      %p229 = por %p227, %p228
      %p230 = scmp.ne.s32.totalorder %s222, %s225
      %p231 = scmp.eq.s32.totalorder %s18, 0
      %p232 = por %p230, %p231
      %p233 = scmp.ne.s32.totalorder %s222, %s225
      %p234 = scmp.eq.s32.totalorder %s23, 1
      %p235 = por %p233, %p234
      %p236 = scmp.ne.s32.totalorder %s225, %s226
      %p237 = scmp.eq.s32.totalorder %s23, 0
      %p238 = por %p236, %p237
      %p239 = scmp.ne.s32.totalorder %s225, %s226
      %p240 = scmp.eq.s32.totalorder %s24, 1
      %p241 = por %p239, %p240
      %p243 = scmp.ne.s32.totalorder %s226, %s242
      %p244 = scmp.eq.s32.totalorder %s24, 0
      %p245 = por %p243, %p244
      %p246 = scmp.le.s32.totalorder 1, %s18
      %p247 = scmp.lt.s32.totalorder %s18, 3
      %p248 = pnand %p246, %p247
      %p249 = pneg %p248
      // Predicated region
      $region9: #{famnist_forward.1} parent=5 // pred_check
        _
      $region10: #{famnist_forward.1} parent=5 // pred_check_branch
        %251 = sbr.rel (%p248) target = $region12
      $region11: #{famnist_forward.1} parent=5 // pred_region
        %s252 = ssub.s32 %s18, 1
        // Predicated region
        $region13: #{famnist_forward.1} parent=11 // pred_check
          %p253 = pneg %p65
        $region14: #{famnist_forward.1} parent=11 // pred_check_branch
          %255 = sbr.rel (%p253) target = $region16
        $region15: #{famnist_forward.1} parent=11 // pred_region
          _
        $region16: #{famnist_forward.1} parent=11 // pred_fallthru
          _
        // Predicated region
        $region17: #{famnist_forward.1} parent=11 // pred_check
          %p256 = pneg %p86
        $region18: #{famnist_forward.1} parent=11 // pred_check_branch
          %258 = sbr.rel (%p256) target = $region20
        $region19: #{famnist_forward.1} parent=11 // pred_region
          _
        $region20: #{famnist_forward.1} parent=11 // pred_fallthru
          _
        // Predicated region
        $region21: #{famnist_forward.1} parent=11 // pred_check
          %p259 = pneg %p107
        $region22: #{famnist_forward.1} parent=11 // pred_check_branch
          %261 = sbr.rel (%p259) target = $region24
        $region23: #{famnist_forward.1} parent=11 // pred_region
          _
        $region24: #{famnist_forward.1} parent=11 // pred_fallthru
          _
        // Predicated region
        $region25: #{famnist_forward.1} parent=11 // pred_check
          %p262 = pneg %p128
        $region26: #{famnist_forward.1} parent=11 // pred_check_branch
          %264 = sbr.rel (%p262) target = $region28
        $region27: #{famnist_forward.1} parent=11 // pred_region
          _
        $region28: #{famnist_forward.1} parent=11 // pred_fallthru
          _
        // Predicated region
        $region29: #{famnist_forward.1} parent=11 // pred_check
          %p265 = pneg %p149
        $region30: #{famnist_forward.1} parent=11 // pred_check_branch
          %267 = sbr.rel (%p265) target = $region32
        $region31: #{famnist_forward.1} parent=11 // pred_region
          _
        $region32: #{famnist_forward.1} parent=11 // pred_fallthru
          _
        // Predicated region
        $region33: #{famnist_forward.1} parent=11 // pred_check
          %p268 = pneg %p170
        $region34: #{famnist_forward.1} parent=11 // pred_check_branch
          %270 = sbr.rel (%p268) target = $region36
        $region35: #{famnist_forward.1} parent=11 // pred_region
          _
        $region36: #{famnist_forward.1} parent=11 // pred_fallthru
          _
        // Predicated region
        $region37: #{famnist_forward.1} parent=11 // pred_check
          %p271 = pneg %p191
        $region38: #{famnist_forward.1} parent=11 // pred_check_branch
          %273 = sbr.rel (%p271) target = $region40
        $region39: #{famnist_forward.1} parent=11 // pred_region
          _
        $region40: #{famnist_forward.1} parent=11 // pred_fallthru
          _
        // Predicated region
        $region41: #{famnist_forward.1} parent=11 // pred_check
          %p274 = pneg %p212
        $region42: #{famnist_forward.1} parent=11 // pred_check_branch
          %276 = sbr.rel (%p274) target = $region44
        $region43: #{famnist_forward.1} parent=11 // pred_region
          _
        $region44: #{famnist_forward.1} parent=11 // pred_fallthru
          _
      $region12: #{famnist_forward.1} parent=5 // pred_fallthru
        _
      %p277 = scmp.lt.s32.totalorder %s18, 2
      // Predicated region
      $region45: #{famnist_forward.1} parent=5 // pred_check
        %p278 = pneg %p277
      $region46: #{famnist_forward.1} parent=5 // pred_check_branch
        %280 = sbr.rel (%p278) target = $region48
      $region47: #{famnist_forward.1} parent=5 // pred_region
        // Predicated region
        $region49: #{famnist_forward.1} parent=47 // pred_check
          %p281 = pneg %p38
        $region50: #{famnist_forward.1} parent=47 // pred_check_branch
          %283 = sbr.rel (%p281) target = $region52
        $region51: #{famnist_forward.1} parent=47 // pred_region
          %s284 = smul.u32 24, %s18
          %p285 = scmp.lt.s32.totalorder %s284, 47
          %s286 = scalar_select %p285, %s284, 47
          %s287 = smul.addr %s286, 2
          %s288 = smul.addr %s287, 4
          %s289 = scalar_lea.vmem %s0, %s288
          %s290 = smul.u32 24, %s18
        $region52: #{famnist_forward.1} parent=47 // pred_fallthru
          _
      $region48: #{famnist_forward.1} parent=5 // pred_fallthru
        _
      %p291 = scmp.le.s32.totalorder 1, %s18
      %p292 = scmp.lt.s32.totalorder %s18, 3
      %p293 = pnand %p291, %p292
      %p294 = pneg %p293
      // Predicated region
      $region53: #{famnist_forward.1} parent=5 // pred_check
        _
      $region54: #{famnist_forward.1} parent=5 // pred_check_branch
        %296 = sbr.rel (%p293) target = $region56
      $region55: #{famnist_forward.1} parent=5 // pred_region
        %s297 = ssub.s32 %s18, 1
        %s298 = smul.u32 24, %s23
        %p299 = scmp.lt.s32.totalorder %s298, 47
        %s300 = scalar_select %p299, %s298, 47
        %s301 = smul.addr %s300, 2
        %s302 = smul.addr %s301, 4
        %s303 = scalar_lea.vmem %s0, %s302
        %p304 = pneg %p44
        %p305 = pneg %p41
        %p306 = pneg %p65
        %p307 = pneg %p62
        %p308 = pneg %p86
        %p309 = pneg %p83
        %p310 = pneg %p107
        %p311 = pneg %p104
        %p312 = pneg %p128
        %p313 = pneg %p125
        %p314 = pneg %p149
        %p315 = pneg %p146
        %p316 = pneg %p170
        %p317 = pneg %p167
        %p318 = pneg %p191
        %p319 = pneg %p188
        %p320 = pneg %p212
        %p321 = pneg %p209
        %p322 = pneg %p238
        %p323 = pneg %p235
        %s324 = sand.u32 %s225, 1
        %s325 = scalar_lea.sflag [#allocation3], %s324
        %s326 = sand.u32 %s225, 1
        %s327 = smul.addr %s326, 8
        %s328 = scalar_lea.vmem [#allocation2], %s327
        %s329 = smul.u32 24, %s23
        %p330 = scmp.lt.s32.totalorder %s329, 47
        %s331 = scalar_select %p330, %s329, 47
        %s332 = smul.addr %s331, 2
        %s333 = smul.addr %s332, 4
        %s334 = scalar_lea.vmem %s0, %s333
        %s335 = smul.u32 24, %s23
        %v337 = vld [vmem:[%s334] sm:$0xff]
        %v338 = vld [vmem:[%s334 + $0x8] sm:$0xff]
        %v339 = vld [vmem:[%s334 + $0x10] sm:$0xff]
        %v340 = vld [vmem:[%s334 + $0x18] sm:$0xff]
        %v341 = vld [vmem:[%s334 + $0x20] sm:$0xff]
        %v342 = vld [vmem:[%s334 + $0x28] sm:$0xff]
        %v343 = vld [vmem:[%s334 + $0x30] sm:$0xff]
        %v344 = vld [vmem:[%s334 + $0x38] sm:$0xff]
        %v345 = vld [vmem:[%s334 + $0x40] sm:$0xff]
        %v346 = vld [vmem:[%s334 + $0x48] sm:$0xff]
        %v347 = vld [vmem:[%s334 + $0x50] sm:$0xff]
        %v348 = vld [vmem:[%s334 + $0x58] sm:$0xff]
        %v349 = vld [vmem:[%s334 + $0x60] sm:$0xff]
        %v350 = vld [vmem:[%s334 + $0x68] sm:$0xff]
        %v351 = vld [vmem:[%s334 + $0x70] sm:$0xff]
        %v352 = vld [vmem:[%s334 + $0x78] sm:$0xff]
        %v353 = vld [vmem:[%s334 + $0x80] sm:$0xff]
        %v354 = vld [vmem:[%s334 + $0x88] sm:$0xff]
        %v355 = vld [vmem:[%s334 + $0x90] sm:$0xff]
        %v356 = vld [vmem:[%s334 + $0x98] sm:$0xff]
        %v357 = vld [vmem:[%s334 + $0xa0] sm:$0xff]
        %v358 = vld [vmem:[%s334 + $0xa8] sm:$0xff]
        %v359 = vld [vmem:[%s334 + $0xb0] sm:$0xff]
        %v360 = vld [vmem:[%s334 + $0xb8] sm:$0xff]
        %v361 = vld [vmem:[%s1] sm:$0xff]
        %v362 = vld [vmem:[%s1 + $0x8] sm:$0xff]
        %v363 = vld [vmem:[%s1 + $0x10] sm:$0xff]
        %v364 = vld [vmem:[%s1 + $0x18] sm:$0xff]
        %v365 = vld [vmem:[%s1 + $0x20] sm:$0xff]
        %v366 = vld [vmem:[%s1 + $0x28] sm:$0xff]
        %v367 = vld [vmem:[%s1 + $0x30] sm:$0xff]
        %v368 = vld [vmem:[%s1 + $0x38] sm:$0xff]
        %v369 = vld [vmem:[%s1 + $0x40] sm:$0xff]
        %v370 = vld [vmem:[%s1 + $0x48] sm:$0xff]
        %v371 = vld [vmem:[%s1 + $0x50] sm:$0xff]
        %v372 = vld [vmem:[%s1 + $0x58] sm:$0xff]
        %v373 = vld [vmem:[%s1 + $0x60] sm:$0xff]
        %v374 = vld [vmem:[%s1 + $0x68] sm:$0xff]
        %v375 = vld [vmem:[%s1 + $0x70] sm:$0xff]
        %v376 = vld [vmem:[%s1 + $0x78] sm:$0xff]
        %v377 = vld [vmem:[%s1 + $0x80] sm:$0xff]
        %v378 = vld [vmem:[%s1 + $0x88] sm:$0xff]
        %v379 = vld [vmem:[%s1 + $0x90] sm:$0xff]
        %v380 = vld [vmem:[%s1 + $0x98] sm:$0xff]
        %v381 = vld [vmem:[%s1 + $0xa0] sm:$0xff]
        %v382 = vld [vmem:[%s1 + $0xa8] sm:$0xff]
        %v383 = vld [vmem:[%s1 + $0xb0] sm:$0xff]
        %v384 = vld [vmem:[%s1 + $0xb8] sm:$0xff]
        %v385 = vld [vmem:[%s1 + $0xc0] sm:$0xff]
        %v386 = vld [vmem:[%s1 + $0xc8] sm:$0xff]
        %v387 = vld [vmem:[%s1 + $0xd0] sm:$0xff]
        %v388 = vld [vmem:[%s1 + $0xd8] sm:$0xff]
        %v389 = vld [vmem:[%s1 + $0xe0] sm:$0xff]
        %v390 = vld [vmem:[%s1 + $0xe8] sm:$0xff]
        %v391 = vld [vmem:[%s1 + $0xf0] sm:$0xff]
        %v392 = vld [vmem:[%s1 + $0xf8] sm:$0xff]
        %v393 = vld [vmem:[%s1 + $0x100] sm:$0xff]
        %v394 = vld [vmem:[%s1 + $0x108] sm:$0xff]
        %v395 = vld [vmem:[%s1 + $0x110] sm:$0x33]
        %v396 = vld [vmem:[%s1 + $0x118] sm:$0x33]
        %v397 = vld [vmem:[%s2] sm:$0xf]
        %v399 = vlaneseq
        %v400 = vshrl.u32 %v399, 7
        %v401 = vsub.s32 0, %v400
        %v402 = vrot.slane %v397, %v401
        %v403 = vlaneseq
        %v404 = vshrl.u32 %v403, 7
        %v405 = vsub.s32 1, %v404
        %v406 = vrot.slane %v397, %v405
        %v407 = vlaneseq
        %v408 = vshrl.u32 %v407, 7
        %v409 = vsub.s32 2, %v408
        %v410 = vrot.slane %v397, %v409
        %v411 = vlaneseq
        %v412 = vshrl.u32 %v411, 7
        %v413 = vsub.s32 3, %v412
        %v414 = vrot.slane %v397, %v413
        %v443 = vunpack.c.l.b16 %v337
        %v444 = vunpack.c.h.b16 %v337
        %v445 = vunpack.c.l.b16 %v338
        %v446 = vunpack.c.h.b16 %v338
        %v447 = vunpack.c.l.b16 %v339
        %v448 = vunpack.c.h.b16 %v339
        %v449 = vunpack.c.l.b16 %v340
        %v450 = vunpack.c.h.b16 %v340
        %v451 = vunpack.c.l.b16 %v341
        %v452 = vunpack.c.h.b16 %v341
        %v453 = vunpack.c.l.b16 %v342
        %v454 = vunpack.c.h.b16 %v342
        %v455 = vunpack.c.l.b16 %v343
        %v456 = vunpack.c.h.b16 %v343
        %v457 = vunpack.c.l.b16 %v344
        %v458 = vunpack.c.h.b16 %v344
        %v459 = vunpack.c.l.b16 %v345
        %v460 = vunpack.c.h.b16 %v345
        %v461 = vunpack.c.l.b16 %v346
        %v462 = vunpack.c.h.b16 %v346
        %v463 = vunpack.c.l.b16 %v347
        %v464 = vunpack.c.h.b16 %v347
        %v465 = vunpack.c.l.b16 %v348
        %v466 = vunpack.c.h.b16 %v348
        %v467 = vunpack.c.l.b16 %v349
        %v468 = vunpack.c.h.b16 %v349
        %v469 = vunpack.c.l.b16 %v350
        %v470 = vunpack.c.h.b16 %v350
        %v471 = vunpack.c.l.b16 %v351
        %v472 = vunpack.c.h.b16 %v351
        %v473 = vunpack.c.l.b16 %v352
        %v474 = vunpack.c.h.b16 %v352
        %v475 = vunpack.c.l.b16 %v353
        %v476 = vunpack.c.h.b16 %v353
        %v477 = vunpack.c.l.b16 %v354
        %v478 = vunpack.c.h.b16 %v354
        %v479 = vunpack.c.l.b16 %v355
        %v480 = vunpack.c.h.b16 %v355
        %v481 = vunpack.c.l.b16 %v356
        %v482 = vunpack.c.h.b16 %v356
        %v483 = vunpack.c.l.b16 %v357
        %v484 = vunpack.c.h.b16 %v357
        %v485 = vunpack.c.l.b16 %v358
        %v486 = vunpack.c.h.b16 %v358
        %v487 = vunpack.c.l.b16 %v359
        %v488 = vunpack.c.h.b16 %v359
        %v489 = vunpack.c.l.b16 %v360
        %v490 = vunpack.c.h.b16 %v360
        %v491 = vpack.c.b16 %v445, %v443
        %v492 = vpack.c.b16 %v446, %v444
        %v493 = vpack.c.b16 %v449, %v447
        %v494 = vpack.c.b16 %v450, %v448
        %v495 = vpack.c.b16 %v453, %v451
        %v496 = vpack.c.b16 %v454, %v452
        %v497 = vpack.c.b16 %v457, %v455
        %v498 = vpack.c.b16 %v458, %v456
        %v499 = vpack.c.b16 %v461, %v459
        %v500 = vpack.c.b16 %v462, %v460
        %v501 = vpack.c.b16 %v465, %v463
        %v502 = vpack.c.b16 %v466, %v464
        %v503 = vpack.c.b16 %v469, %v467
        %v504 = vpack.c.b16 %v470, %v468
        %v505 = vpack.c.b16 %v473, %v471
        %v506 = vpack.c.b16 %v474, %v472
        %v507 = vpack.c.b16 %v477, %v475
        %v508 = vpack.c.b16 %v478, %v476
        %v509 = vpack.c.b16 %v481, %v479
        %v510 = vpack.c.b16 %v482, %v480
        %v511 = vpack.c.b16 %v485, %v483
        %v512 = vpack.c.b16 %v486, %v484
        %v513 = vpack.c.b16 %v489, %v487
        %v514 = vpack.c.b16 %v490, %v488
        %v563 = vunpack.c.l.b16 %v361
        %v564 = vunpack.c.h.b16 %v361
        %v565 = vunpack.c.l.b16 %v362
        %v566 = vunpack.c.h.b16 %v362
        %v567 = vunpack.c.l.b16 %v363
        %v568 = vunpack.c.h.b16 %v363
        %v569 = vunpack.c.l.b16 %v364
        %v570 = vunpack.c.h.b16 %v364
        %v571 = vunpack.c.l.b16 %v365
        %v572 = vunpack.c.h.b16 %v365
        %v573 = vunpack.c.l.b16 %v366
        %v574 = vunpack.c.h.b16 %v366
        %v575 = vunpack.c.l.b16 %v367
        %v576 = vunpack.c.h.b16 %v367
        %v577 = vunpack.c.l.b16 %v368
        %v578 = vunpack.c.h.b16 %v368
        %v579 = vunpack.c.l.b16 %v369
        %v580 = vunpack.c.h.b16 %v369
        %v581 = vunpack.c.l.b16 %v370
        %v582 = vunpack.c.h.b16 %v370
        %v583 = vunpack.c.l.b16 %v371
        %v584 = vunpack.c.h.b16 %v371
        %v585 = vunpack.c.l.b16 %v372
        %v586 = vunpack.c.h.b16 %v372
        %v587 = vunpack.c.l.b16 %v373
        %v588 = vunpack.c.h.b16 %v373
        %v589 = vunpack.c.l.b16 %v374
        %v590 = vunpack.c.h.b16 %v374
        %v591 = vunpack.c.l.b16 %v375
        %v592 = vunpack.c.h.b16 %v375
        %v593 = vunpack.c.l.b16 %v376
        %v594 = vunpack.c.h.b16 %v376
        %v595 = vunpack.c.l.b16 %v377
        %v596 = vunpack.c.h.b16 %v377
        %v597 = vunpack.c.l.b16 %v378
        %v598 = vunpack.c.h.b16 %v378
        %v599 = vunpack.c.l.b16 %v379
        %v600 = vunpack.c.h.b16 %v379
        %v601 = vunpack.c.l.b16 %v380
        %v602 = vunpack.c.h.b16 %v380
        %v603 = vunpack.c.l.b16 %v381
        %v604 = vunpack.c.h.b16 %v381
        %v605 = vunpack.c.l.b16 %v382
        %v606 = vunpack.c.h.b16 %v382
        %v607 = vunpack.c.l.b16 %v383
        %v608 = vunpack.c.h.b16 %v383
        %v609 = vunpack.c.l.b16 %v384
        %v610 = vunpack.c.h.b16 %v384
        %v611 = vunpack.c.l.b16 %v385
        %v612 = vunpack.c.h.b16 %v385
        %v613 = vunpack.c.l.b16 %v386
        %v614 = vunpack.c.h.b16 %v386
        %v615 = vunpack.c.l.b16 %v387
        %v616 = vunpack.c.h.b16 %v387
        %v617 = vunpack.c.l.b16 %v388
        %v618 = vunpack.c.h.b16 %v388
        %v619 = vunpack.c.l.b16 %v389
        %v620 = vunpack.c.h.b16 %v389
        %v621 = vunpack.c.l.b16 %v390
        %v622 = vunpack.c.h.b16 %v390
        %v623 = vunpack.c.l.b16 %v391
        %v624 = vunpack.c.h.b16 %v391
        %v625 = vunpack.c.l.b16 %v392
        %v626 = vunpack.c.h.b16 %v392
        %v627 = vunpack.c.l.b16 %v393
        %v628 = vunpack.c.h.b16 %v393
        %v629 = vunpack.c.l.b16 %v394
        %v630 = vunpack.c.h.b16 %v394
        %v631 = vunpack.c.l.b16 %v395
        %v632 = vunpack.c.h.b16 %v395
        %v633 = vunpack.c.l.b16 %v396
        %v634 = vunpack.c.h.b16 %v396
        %v635 = vpack.c.b16 %v567, %v563
        %v636 = vpack.c.b16 %v568, %v564
        %v637 = vpack.c.b16 %v569, %v565
        %v638 = vpack.c.b16 %v570, %v566
        %v639 = vpack.c.b16 %v575, %v571
        %v640 = vpack.c.b16 %v576, %v572
        %v641 = vpack.c.b16 %v577, %v573
        %v642 = vpack.c.b16 %v578, %v574
        %v643 = vpack.c.b16 %v583, %v579
        %v644 = vpack.c.b16 %v584, %v580
        %v645 = vpack.c.b16 %v585, %v581
        %v646 = vpack.c.b16 %v586, %v582
        %v647 = vpack.c.b16 %v591, %v587
        %v648 = vpack.c.b16 %v592, %v588
        %v649 = vpack.c.b16 %v593, %v589
        %v650 = vpack.c.b16 %v594, %v590
        %v651 = vpack.c.b16 %v599, %v595
        %v652 = vpack.c.b16 %v600, %v596
        %v653 = vpack.c.b16 %v601, %v597
        %v654 = vpack.c.b16 %v602, %v598
        %v655 = vpack.c.b16 %v607, %v603
        %v656 = vpack.c.b16 %v608, %v604
        %v657 = vpack.c.b16 %v609, %v605
        %v658 = vpack.c.b16 %v610, %v606
        %v659 = vpack.c.b16 %v615, %v611
        %v660 = vpack.c.b16 %v616, %v612
        %v661 = vpack.c.b16 %v617, %v613
        %v662 = vpack.c.b16 %v618, %v614
        %v663 = vpack.c.b16 %v623, %v619
        %v664 = vpack.c.b16 %v624, %v620
        %v665 = vpack.c.b16 %v625, %v621
        %v666 = vpack.c.b16 %v626, %v622
        %v667 = vpack.c.b16 %v631, %v627
        %v668 = vpack.c.b16 %v632, %v628
        %v669 = vpack.c.b16 %v633, %v629
        %v670 = vpack.c.b16 %v634, %v630
        %vm703 = vcmask 97280
        %v705 = vsel %vm703, %v492, 0
        %v708 = vsel %vm703, %v494, 0
        %v711 = vsel %vm703, %v496, 0
        %v714 = vsel %vm703, %v498, 0
        %v717 = vsel %vm703, %v500, 0
        %v720 = vsel %vm703, %v502, 0
        %v723 = vsel %vm703, %v504, 0
        %v726 = vsel %vm703, %v506, 0
        %v729 = vsel %vm703, %v508, 0
        %v732 = vsel %vm703, %v510, 0
        %v735 = vsel %vm703, %v512, 0
        %v738 = vsel %vm703, %v514, 0
        %vm740 = vcmask 1045504
        %v742 = vsel %vm740, %v667, 0
        %v745 = vsel %vm740, %v668, 0
        %v748 = vsel %vm740, %v669, 0
        %v751 = vsel %vm740, %v670, 0
        %753 = vmatprep.subr.bf16.mxu0 %v636
        %754 = vmatpush1.bf16.msra.mxu0 %v635
        %755 = vmatprep.subr.bf16.mxu0 %v640
        %756 = vmatpush1.bf16.msra.mxu0 %v639
        %757 = vmatprep.subr.bf16.mxu0 %v644
        %758 = vmatpush1.bf16.msra.mxu0 %v643
        %759 = vmatprep.subr.bf16.mxu0 %v648
        %760 = vmatpush1.bf16.msra.mxu0 %v647
        %761 = vmatprep.subr.bf16.mxu0 %v652
        %762 = vmatpush1.bf16.msra.mxu0 %v651
        %763 = vmatprep.subr.bf16.mxu0 %v656
        %764 = vmatpush1.bf16.msra.mxu0 %v655
        %765 = vmatprep.subr.bf16.mxu0 %v660
        %766 = vmatpush1.bf16.msra.mxu0 %v659
        %767 = vmatprep.subr.bf16.mxu0 %v664
        %768 = vmatpush1.bf16.msra.mxu0 %v663
        %769 = vmatprep.subr.bf16.mxu0 %v745
        %770 = vmatpush1.bf16.msra.mxu0 %v742
        %771 = vmatprep.subr.bf16.mxu0 0
        %772 = vmatpush1.bf16.msra.mxu0 0
        %773 = vmatprep.subr.bf16.mxu0 0
        %774 = vmatpush1.bf16.msra.mxu0 0
        %775 = vmatprep.subr.bf16.mxu0 0
        %776 = vmatpush1.bf16.msra.mxu0 0
        %777 = vmatprep.subr.bf16.mxu0 0
        %778 = vmatpush1.bf16.msra.mxu0 0
        %779 = vmatprep.subr.bf16.mxu0 0
        %780 = vmatpush1.bf16.msra.mxu0 0
        %781 = vmatprep.subr.bf16.mxu0 0
        %782 = vmatpush1.bf16.msra.mxu0 0
        %783 = vmatprep.subr.bf16.mxu0 0
        %784 = vmatpush1.bf16.msra.mxu0 0
        %785 = vmatprep.mubr.bf16.mxu0 %v705
        %786 = vmatmul.mubr.bf16.gmra.mrb[0].mxu0 %v491
        %v787 = vpop.f32.mrb[0].mxu0
        %v788 = vadd.f32 %v402, %v787
        %v789 = vpop.f32.mrb[0].mxu0
        %v790 = vadd.f32 %v406, %v789
        %v791 = vpop.f32.mrb[0].mxu0
        %v792 = vadd.f32 %v402, %v791
        %v793 = vpop.f32.mrb[0].mxu0
        %v794 = vadd.f32 %v406, %v793
        %795 = vmatprep.mubr.bf16.mxu0 %v708
        %796 = vmatmul.mubr.bf16.gmra.mrb[0].mxu0 %v493
        %v797 = vpop.f32.mrb[0].mxu0
        %v798 = vadd.f32 %v402, %v797
        %v799 = vpop.f32.mrb[0].mxu0
        %v800 = vadd.f32 %v406, %v799
        %v801 = vpop.f32.mrb[0].mxu0
        %v802 = vadd.f32 %v402, %v801
        %v803 = vpop.f32.mrb[0].mxu0
        %v804 = vadd.f32 %v406, %v803
        %805 = vmatprep.mubr.bf16.mxu0 %v711
        %806 = vmatmul.mubr.bf16.gmra.mrb[0].mxu0 %v495
        %v807 = vpop.f32.mrb[0].mxu0
        %v808 = vadd.f32 %v402, %v807
        %v809 = vpop.f32.mrb[0].mxu0
        %v810 = vadd.f32 %v406, %v809
        %v811 = vpop.f32.mrb[0].mxu0
        %v812 = vadd.f32 %v402, %v811
        %v813 = vpop.f32.mrb[0].mxu0
        %v814 = vadd.f32 %v406, %v813
        %815 = vmatprep.mubr.bf16.mxu0 %v714
        %816 = vmatmul.mubr.bf16.gmra.mrb[0].mxu0 %v497
        %v817 = vpop.f32.mrb[0].mxu0
        %v818 = vadd.f32 %v402, %v817
        %v819 = vpop.f32.mrb[0].mxu0
        %v820 = vadd.f32 %v406, %v819
        %v821 = vpop.f32.mrb[0].mxu0
        %v822 = vadd.f32 %v402, %v821
        %v823 = vpop.f32.mrb[0].mxu0
        %v824 = vadd.f32 %v406, %v823
        %825 = vmatprep.mubr.bf16.mxu0 %v717
        %826 = vmatmul.mubr.bf16.gmra.mrb[0].mxu0 %v499
        %v827 = vpop.f32.mrb[0].mxu0
        %v828 = vadd.f32 %v402, %v827
        %v829 = vpop.f32.mrb[0].mxu0
        %v830 = vadd.f32 %v406, %v829
        %v831 = vpop.f32.mrb[0].mxu0
        %v832 = vadd.f32 %v402, %v831
        %v833 = vpop.f32.mrb[0].mxu0
        %v834 = vadd.f32 %v406, %v833
        %835 = vmatprep.mubr.bf16.mxu0 %v720
        %836 = vmatmul.mubr.bf16.gmra.mrb[0].mxu0 %v501
        %v837 = vpop.f32.mrb[0].mxu0
        %v838 = vadd.f32 %v402, %v837
        %v839 = vpop.f32.mrb[0].mxu0
        %v840 = vadd.f32 %v406, %v839
        %v841 = vpop.f32.mrb[0].mxu0
        %v842 = vadd.f32 %v402, %v841
        %v843 = vpop.f32.mrb[0].mxu0
        %v844 = vadd.f32 %v406, %v843
        %845 = vmatprep.mubr.bf16.mxu0 %v723
        %846 = vmatmul.mubr.bf16.gmra.mrb[0].mxu0 %v503
        %v847 = vpop.f32.mrb[0].mxu0
        %v848 = vadd.f32 %v402, %v847
        %v849 = vpop.f32.mrb[0].mxu0
        %v850 = vadd.f32 %v406, %v849
        %v851 = vpop.f32.mrb[0].mxu0
        %v852 = vadd.f32 %v402, %v851
        %v853 = vpop.f32.mrb[0].mxu0
        %v854 = vadd.f32 %v406, %v853
        %855 = vmatprep.mubr.bf16.mxu0 %v726
        %856 = vmatmul.mubr.bf16.gmra.mrb[0].mxu0 %v505
        %v857 = vpop.f32.mrb[0].mxu0
        %v858 = vadd.f32 %v402, %v857
        %v859 = vpop.f32.mrb[0].mxu0
        %v860 = vadd.f32 %v406, %v859
        %v861 = vpop.f32.mrb[0].mxu0
        %v862 = vadd.f32 %v402, %v861
        %v863 = vpop.f32.mrb[0].mxu0
        %v864 = vadd.f32 %v406, %v863
        %865 = vmatprep.mubr.bf16.mxu0 %v729
        %866 = vmatmul.mubr.bf16.gmra.mrb[0].mxu0 %v507
        %v867 = vpop.f32.mrb[0].mxu0
        %v868 = vadd.f32 %v402, %v867
        %v869 = vpop.f32.mrb[0].mxu0
        %v870 = vadd.f32 %v406, %v869
        %v871 = vpop.f32.mrb[0].mxu0
        %v872 = vadd.f32 %v402, %v871
        %v873 = vpop.f32.mrb[0].mxu0
        %v874 = vadd.f32 %v406, %v873
        %875 = vmatprep.mubr.bf16.mxu0 %v732
        %876 = vmatmul.mubr.bf16.gmra.mrb[0].mxu0 %v509
        %v877 = vpop.f32.mrb[0].mxu0
        %v878 = vadd.f32 %v402, %v877
        %v879 = vpop.f32.mrb[0].mxu0
        %v880 = vadd.f32 %v406, %v879
        %v881 = vpop.f32.mrb[0].mxu0
        %v882 = vadd.f32 %v402, %v881
        %v883 = vpop.f32.mrb[0].mxu0
        %v884 = vadd.f32 %v406, %v883
        %885 = vmatprep.mubr.bf16.mxu0 %v735
        %886 = vmatmul.mubr.bf16.gmra.mrb[0].mxu0 %v511
        %v887 = vpop.f32.mrb[0].mxu0
        %v888 = vadd.f32 %v402, %v887
        %v889 = vpop.f32.mrb[0].mxu0
        %v890 = vadd.f32 %v406, %v889
        %v891 = vpop.f32.mrb[0].mxu0
        %v892 = vadd.f32 %v402, %v891
        %v893 = vpop.f32.mrb[0].mxu0
        %v894 = vadd.f32 %v406, %v893
        %895 = vmatprep.mubr.bf16.mxu0 %v738
        %896 = vmatmul.mubr.bf16.gmra.mrb[0].mxu0 %v513
        %v897 = vpop.f32.mrb[0].mxu0
        %v898 = vadd.f32 %v402, %v897
        %v899 = vpop.f32.mrb[0].mxu0
        %v900 = vadd.f32 %v406, %v899
        %v901 = vpop.f32.mrb[0].mxu0
        %v902 = vadd.f32 %v402, %v901
        %v903 = vpop.f32.mrb[0].mxu0
        %v904 = vadd.f32 %v406, %v903
        %905 = vdwg.mxu0
        %906 = vmatprep.subr.bf16.mxu0 %v638
        %907 = vmatpush1.bf16.msra.mxu0 %v637
        %908 = vmatprep.subr.bf16.mxu0 %v642
        %909 = vmatpush1.bf16.msra.mxu0 %v641
        %910 = vmatprep.subr.bf16.mxu0 %v646
        %911 = vmatpush1.bf16.msra.mxu0 %v645
        %912 = vmatprep.subr.bf16.mxu0 %v650
        %913 = vmatpush1.bf16.msra.mxu0 %v649
        %914 = vmatprep.subr.bf16.mxu0 %v654
        %915 = vmatpush1.bf16.msra.mxu0 %v653
        %916 = vmatprep.subr.bf16.mxu0 %v658
        %917 = vmatpush1.bf16.msra.mxu0 %v657
        %918 = vmatprep.subr.bf16.mxu0 %v662
        %919 = vmatpush1.bf16.msra.mxu0 %v661
        %920 = vmatprep.subr.bf16.mxu0 %v666
        %921 = vmatpush1.bf16.msra.mxu0 %v665
        %922 = vmatprep.subr.bf16.mxu0 %v751
        %923 = vmatpush1.bf16.msra.mxu0 %v748
        %924 = vmatprep.subr.bf16.mxu0 0
        %925 = vmatpush1.bf16.msra.mxu0 0
        %926 = vmatprep.subr.bf16.mxu0 0
        %927 = vmatpush1.bf16.msra.mxu0 0
        %928 = vmatprep.subr.bf16.mxu0 0
        %929 = vmatpush1.bf16.msra.mxu0 0
        %930 = vmatprep.subr.bf16.mxu0 0
        %931 = vmatpush1.bf16.msra.mxu0 0
        %932 = vmatprep.subr.bf16.mxu0 0
        %933 = vmatpush1.bf16.msra.mxu0 0
        %934 = vmatprep.subr.bf16.mxu0 0
        %935 = vmatpush1.bf16.msra.mxu0 0
        %936 = vmatprep.subr.bf16.mxu0 0
        %937 = vmatpush1.bf16.msra.mxu0 0
        %938 = vmatprep.mubr.bf16.mxu0 %v705
        %939 = vmatmul.mubr.bf16.gmra.mrb[0].mxu0 %v491
        %v940 = vpop.f32.mrb[0].mxu0
        %v941 = vadd.f32 %v410, %v940
        %v942 = vpop.f32.mrb[0].mxu0
        %v943 = vadd.f32 %v414, %v942
        %v944 = vpop.f32.mrb[0].mxu0
        %v945 = vadd.f32 %v410, %v944
        %v946 = vpop.f32.mrb[0].mxu0
        %v947 = vadd.f32 %v414, %v946
        %948 = vmatprep.mubr.bf16.mxu0 %v708
        %949 = vmatmul.mubr.bf16.gmra.mrb[0].mxu0 %v493
        %v950 = vpop.f32.mrb[0].mxu0
        %v951 = vadd.f32 %v410, %v950
        %v952 = vpop.f32.mrb[0].mxu0
        %v953 = vadd.f32 %v414, %v952
        %v954 = vpop.f32.mrb[0].mxu0
        %v955 = vadd.f32 %v410, %v954
        %v956 = vpop.f32.mrb[0].mxu0
        %v957 = vadd.f32 %v414, %v956
        %958 = vmatprep.mubr.bf16.mxu0 %v711
        %959 = vmatmul.mubr.bf16.gmra.mrb[0].mxu0 %v495
        %v960 = vpop.f32.mrb[0].mxu0
        %v961 = vadd.f32 %v410, %v960
        %v962 = vpop.f32.mrb[0].mxu0
        %v963 = vadd.f32 %v414, %v962
        %v964 = vpop.f32.mrb[0].mxu0
        %v965 = vadd.f32 %v410, %v964
        %v966 = vpop.f32.mrb[0].mxu0
        %v967 = vadd.f32 %v414, %v966
        %968 = vmatprep.mubr.bf16.mxu0 %v714
        %969 = vmatmul.mubr.bf16.gmra.mrb[0].mxu0 %v497
        %v970 = vpop.f32.mrb[0].mxu0
        %v971 = vadd.f32 %v410, %v970
        %v972 = vpop.f32.mrb[0].mxu0
        %v973 = vadd.f32 %v414, %v972
        %v974 = vpop.f32.mrb[0].mxu0
        %v975 = vadd.f32 %v410, %v974
        %v976 = vpop.f32.mrb[0].mxu0
        %v977 = vadd.f32 %v414, %v976
        %978 = vmatprep.mubr.bf16.mxu0 %v717
        %979 = vmatmul.mubr.bf16.gmra.mrb[0].mxu0 %v499
        %v980 = vpop.f32.mrb[0].mxu0
        %v981 = vadd.f32 %v410, %v980
        %v982 = vpop.f32.mrb[0].mxu0
        %v983 = vadd.f32 %v414, %v982
        %v984 = vpop.f32.mrb[0].mxu0
        %v985 = vadd.f32 %v410, %v984
        %v986 = vpop.f32.mrb[0].mxu0
        %v987 = vadd.f32 %v414, %v986
        %988 = vmatprep.mubr.bf16.mxu0 %v720
        %989 = vmatmul.mubr.bf16.gmra.mrb[0].mxu0 %v501
        %v990 = vpop.f32.mrb[0].mxu0
        %v991 = vadd.f32 %v410, %v990
        %v992 = vpop.f32.mrb[0].mxu0
        %v993 = vadd.f32 %v414, %v992
        %v994 = vpop.f32.mrb[0].mxu0
        %v995 = vadd.f32 %v410, %v994
        %v996 = vpop.f32.mrb[0].mxu0
        %v997 = vadd.f32 %v414, %v996
        %998 = vmatprep.mubr.bf16.mxu0 %v723
        %999 = vmatmul.mubr.bf16.gmra.mrb[0].mxu0 %v503
        %v1000 = vpop.f32.mrb[0].mxu0
        %v1001 = vadd.f32 %v410, %v1000
        %v1002 = vpop.f32.mrb[0].mxu0
        %v1003 = vadd.f32 %v414, %v1002
        %v1004 = vpop.f32.mrb[0].mxu0
        %v1005 = vadd.f32 %v410, %v1004
        %v1006 = vpop.f32.mrb[0].mxu0
        %v1007 = vadd.f32 %v414, %v1006
        %1008 = vmatprep.mubr.bf16.mxu0 %v726
        %1009 = vmatmul.mubr.bf16.gmra.mrb[0].mxu0 %v505
        %v1010 = vpop.f32.mrb[0].mxu0
        %v1011 = vadd.f32 %v410, %v1010
        %v1012 = vpop.f32.mrb[0].mxu0
        %v1013 = vadd.f32 %v414, %v1012
        %v1014 = vpop.f32.mrb[0].mxu0
        %v1015 = vadd.f32 %v410, %v1014
        %v1016 = vpop.f32.mrb[0].mxu0
        %v1017 = vadd.f32 %v414, %v1016
        %1018 = vmatprep.mubr.bf16.mxu0 %v729
        %1019 = vmatmul.mubr.bf16.gmra.mrb[0].mxu0 %v507
        %v1020 = vpop.f32.mrb[0].mxu0
        %v1021 = vadd.f32 %v410, %v1020
        %v1022 = vpop.f32.mrb[0].mxu0
        %v1023 = vadd.f32 %v414, %v1022
        %v1024 = vpop.f32.mrb[0].mxu0
        %v1025 = vadd.f32 %v410, %v1024
        %v1026 = vpop.f32.mrb[0].mxu0
        %v1027 = vadd.f32 %v414, %v1026
        %1028 = vmatprep.mubr.bf16.mxu0 %v732
        %1029 = vmatmul.mubr.bf16.gmra.mrb[0].mxu0 %v509
        %v1030 = vpop.f32.mrb[0].mxu0
        %v1031 = vadd.f32 %v410, %v1030
        %v1032 = vpop.f32.mrb[0].mxu0
        %v1033 = vadd.f32 %v414, %v1032
        %v1034 = vpop.f32.mrb[0].mxu0
        %v1035 = vadd.f32 %v410, %v1034
        %v1036 = vpop.f32.mrb[0].mxu0
        %v1037 = vadd.f32 %v414, %v1036
        %1038 = vmatprep.mubr.bf16.mxu0 %v735
        %1039 = vmatmul.mubr.bf16.gmra.mrb[0].mxu0 %v511
        %v1040 = vpop.f32.mrb[0].mxu0
        %v1041 = vadd.f32 %v410, %v1040
        %v1042 = vpop.f32.mrb[0].mxu0
        %v1043 = vadd.f32 %v414, %v1042
        %v1044 = vpop.f32.mrb[0].mxu0
        %v1045 = vadd.f32 %v410, %v1044
        %v1046 = vpop.f32.mrb[0].mxu0
        %v1047 = vadd.f32 %v414, %v1046
        %1048 = vmatprep.mubr.bf16.mxu0 %v738
        %1049 = vmatmul.mubr.bf16.gmra.mrb[0].mxu0 %v513
        %v1050 = vpop.f32.mrb[0].mxu0
        %v1051 = vadd.f32 %v410, %v1050
        %v1052 = vpop.f32.mrb[0].mxu0
        %v1053 = vadd.f32 %v414, %v1052
        %v1054 = vpop.f32.mrb[0].mxu0
        %v1055 = vadd.f32 %v410, %v1054
        %v1056 = vpop.f32.mrb[0].mxu0
        %v1057 = vadd.f32 %v414, %v1056
        %1058 = vdwg.mxu0
        %v1059 = vmax.f32 %v788, 0.0
        %v1060 = vmax.f32 %v790, 0.0
        %v1061 = vmax.f32 %v941, 0.0
        %v1062 = vmax.f32 %v943, 0.0
        %v1063 = vmax.f32 %v792, 0.0
        %v1064 = vmax.f32 %v794, 0.0
        %v1065 = vmax.f32 %v945, 0.0
        %v1066 = vmax.f32 %v947, 0.0
        %v1067 = vmax.f32 %v798, 0.0
        %v1068 = vmax.f32 %v800, 0.0
        %v1069 = vmax.f32 %v951, 0.0
        %v1070 = vmax.f32 %v953, 0.0
        %v1071 = vmax.f32 %v802, 0.0
        %v1072 = vmax.f32 %v804, 0.0
        %v1073 = vmax.f32 %v955, 0.0
        %v1074 = vmax.f32 %v957, 0.0
        %v1075 = vmax.f32 %v808, 0.0
        %v1076 = vmax.f32 %v810, 0.0
        %v1077 = vmax.f32 %v961, 0.0
        %v1078 = vmax.f32 %v963, 0.0
        %v1079 = vmax.f32 %v812, 0.0
        %v1080 = vmax.f32 %v814, 0.0
        %v1081 = vmax.f32 %v965, 0.0
        %v1082 = vmax.f32 %v967, 0.0
        %v1083 = vmax.f32 %v818, 0.0
        %v1084 = vmax.f32 %v820, 0.0
        %v1085 = vmax.f32 %v971, 0.0
        %v1086 = vmax.f32 %v973, 0.0
        %v1087 = vmax.f32 %v822, 0.0
        %v1088 = vmax.f32 %v824, 0.0
        %v1089 = vmax.f32 %v975, 0.0
        %v1090 = vmax.f32 %v977, 0.0
        %v1091 = vmax.f32 %v828, 0.0
        %v1092 = vmax.f32 %v830, 0.0
        %v1093 = vmax.f32 %v981, 0.0
        %v1094 = vmax.f32 %v983, 0.0
        %v1095 = vmax.f32 %v832, 0.0
        %v1096 = vmax.f32 %v834, 0.0
        %v1097 = vmax.f32 %v985, 0.0
        %v1098 = vmax.f32 %v987, 0.0
        %v1099 = vmax.f32 %v838, 0.0
        %v1100 = vmax.f32 %v840, 0.0
        %v1101 = vmax.f32 %v991, 0.0
        %v1102 = vmax.f32 %v993, 0.0
        %v1103 = vmax.f32 %v842, 0.0
        %v1104 = vmax.f32 %v844, 0.0
        %v1105 = vmax.f32 %v995, 0.0
        %v1106 = vmax.f32 %v997, 0.0
        %v1107 = vmax.f32 %v848, 0.0
        %v1108 = vmax.f32 %v850, 0.0
        %v1109 = vmax.f32 %v1001, 0.0
        %v1110 = vmax.f32 %v1003, 0.0
        %v1111 = vmax.f32 %v852, 0.0
        %v1112 = vmax.f32 %v854, 0.0
        %v1113 = vmax.f32 %v1005, 0.0
        %v1114 = vmax.f32 %v1007, 0.0
        %v1115 = vmax.f32 %v858, 0.0
        %v1116 = vmax.f32 %v860, 0.0
        %v1117 = vmax.f32 %v1011, 0.0
        %v1118 = vmax.f32 %v1013, 0.0
        %v1119 = vmax.f32 %v862, 0.0
        %v1120 = vmax.f32 %v864, 0.0
        %v1121 = vmax.f32 %v1015, 0.0
        %v1122 = vmax.f32 %v1017, 0.0
        %v1123 = vmax.f32 %v868, 0.0
        %v1124 = vmax.f32 %v870, 0.0
        %v1125 = vmax.f32 %v1021, 0.0
        %v1126 = vmax.f32 %v1023, 0.0
        %v1127 = vmax.f32 %v872, 0.0
        %v1128 = vmax.f32 %v874, 0.0
        %v1129 = vmax.f32 %v1025, 0.0
        %v1130 = vmax.f32 %v1027, 0.0
        %v1131 = vmax.f32 %v878, 0.0
        %v1132 = vmax.f32 %v880, 0.0
        %v1133 = vmax.f32 %v1031, 0.0
        %v1134 = vmax.f32 %v1033, 0.0
        %v1135 = vmax.f32 %v882, 0.0
        %v1136 = vmax.f32 %v884, 0.0
        %v1137 = vmax.f32 %v1035, 0.0
        %v1138 = vmax.f32 %v1037, 0.0
        %v1139 = vmax.f32 %v888, 0.0
        %v1140 = vmax.f32 %v890, 0.0
        %v1141 = vmax.f32 %v1041, 0.0
        %v1142 = vmax.f32 %v1043, 0.0
        %v1143 = vmax.f32 %v892, 0.0
        %v1144 = vmax.f32 %v894, 0.0
        %v1145 = vmax.f32 %v1045, 0.0
        %v1146 = vmax.f32 %v1047, 0.0
        %v1147 = vmax.f32 %v898, 0.0
        %v1148 = vmax.f32 %v900, 0.0
        %v1149 = vmax.f32 %v1051, 0.0
        %v1150 = vmax.f32 %v1053, 0.0
        %v1151 = vmax.f32 %v902, 0.0
        %v1152 = vmax.f32 %v904, 0.0
        %v1153 = vmax.f32 %v1055, 0.0
        %v1154 = vmax.f32 %v1057, 0.0
        %v1155 = vmax.f32 %v1059, %v1061
        %v1156 = vmax.f32 %v1060, %v1062
        %v1157 = vmax.f32 %v1063, %v1065
        %v1158 = vmax.f32 %v1064, %v1066
        %v1159 = vmax.f32 %v1067, %v1069
        %v1160 = vmax.f32 %v1068, %v1070
        %v1161 = vmax.f32 %v1071, %v1073
        %v1162 = vmax.f32 %v1072, %v1074
        %v1163 = vmax.f32 %v1075, %v1077
        %v1164 = vmax.f32 %v1076, %v1078
        %v1165 = vmax.f32 %v1079, %v1081
        %v1166 = vmax.f32 %v1080, %v1082
        %v1167 = vmax.f32 %v1083, %v1085
        %v1168 = vmax.f32 %v1084, %v1086
        %v1169 = vmax.f32 %v1087, %v1089
        %v1170 = vmax.f32 %v1088, %v1090
        %v1171 = vmax.f32 %v1091, %v1093
        %v1172 = vmax.f32 %v1092, %v1094
        %v1173 = vmax.f32 %v1095, %v1097
        %v1174 = vmax.f32 %v1096, %v1098
        %v1175 = vmax.f32 %v1099, %v1101
        %v1176 = vmax.f32 %v1100, %v1102
        %v1177 = vmax.f32 %v1103, %v1105
        %v1178 = vmax.f32 %v1104, %v1106
        %v1179 = vmax.f32 %v1107, %v1109
        %v1180 = vmax.f32 %v1108, %v1110
        %v1181 = vmax.f32 %v1111, %v1113
        %v1182 = vmax.f32 %v1112, %v1114
        %v1183 = vmax.f32 %v1115, %v1117
        %v1184 = vmax.f32 %v1116, %v1118
        %v1185 = vmax.f32 %v1119, %v1121
        %v1186 = vmax.f32 %v1120, %v1122
        %v1187 = vmax.f32 %v1123, %v1125
        %v1188 = vmax.f32 %v1124, %v1126
        %v1189 = vmax.f32 %v1127, %v1129
        %v1190 = vmax.f32 %v1128, %v1130
        %v1191 = vmax.f32 %v1131, %v1133
        %v1192 = vmax.f32 %v1132, %v1134
        %v1193 = vmax.f32 %v1135, %v1137
        %v1194 = vmax.f32 %v1136, %v1138
        %v1195 = vmax.f32 %v1139, %v1141
        %v1196 = vmax.f32 %v1140, %v1142
        %v1197 = vmax.f32 %v1143, %v1145
        %v1198 = vmax.f32 %v1144, %v1146
        %v1199 = vmax.f32 %v1147, %v1149
        %v1200 = vmax.f32 %v1148, %v1150
        %v1201 = vmax.f32 %v1151, %v1153
        %v1202 = vmax.f32 %v1152, %v1154
        %v1203 = vmax.f32 %v1155, %v1157
        %v1204 = vmax.f32 %v1156, %v1158
        %v1205 = vmax.f32 %v1159, %v1161
        %v1206 = vmax.f32 %v1160, %v1162
        %v1207 = vmax.f32 %v1163, %v1165
        %v1208 = vmax.f32 %v1164, %v1166
        %v1209 = vmax.f32 %v1167, %v1169
        %v1210 = vmax.f32 %v1168, %v1170
        %v1211 = vmax.f32 %v1171, %v1173
        %v1212 = vmax.f32 %v1172, %v1174
        %v1213 = vmax.f32 %v1175, %v1177
        %v1214 = vmax.f32 %v1176, %v1178
        %v1215 = vmax.f32 %v1179, %v1181
        %v1216 = vmax.f32 %v1180, %v1182
        %v1217 = vmax.f32 %v1183, %v1185
        %v1218 = vmax.f32 %v1184, %v1186
        %v1219 = vmax.f32 %v1187, %v1189
        %v1220 = vmax.f32 %v1188, %v1190
        %v1221 = vmax.f32 %v1191, %v1193
        %v1222 = vmax.f32 %v1192, %v1194
        %v1223 = vmax.f32 %v1195, %v1197
        %v1224 = vmax.f32 %v1196, %v1198
        %v1225 = vmax.f32 %v1199, %v1201
        %v1226 = vmax.f32 %v1200, %v1202
        %v1227 = vpack.c.bf16 %v1205, %v1203
        %v1228 = vpack.c.bf16 %v1206, %v1204
        %v1229 = vpack.c.bf16 %v1209, %v1207
        %v1230 = vpack.c.bf16 %v1210, %v1208
        %v1231 = vpack.c.bf16 %v1213, %v1211
        %v1232 = vpack.c.bf16 %v1214, %v1212
        %v1233 = vpack.c.bf16 %v1217, %v1215
        %v1234 = vpack.c.bf16 %v1218, %v1216
        %v1235 = vld [vmem:[%s3] sm:$0xff]
        %v1236 = vld [vmem:[%s3 + $0x8] sm:$0xff]
        %v1237 = vld [vmem:[%s3 + $0x10] sm:$0xff]
        %v1238 = vld [vmem:[%s3 + $0x18] sm:$0xff]
        %v1239 = vld [vmem:[%s3 + $0x20] sm:$0xff]
        %v1240 = vld [vmem:[%s3 + $0x28] sm:$0xff]
        %v1241 = vld [vmem:[%s3 + $0x30] sm:$0xff]
        %v1242 = vld [vmem:[%s3 + $0x38] sm:$0xff]
        %v1243 = vld [vmem:[%s3 + $0x40] sm:$0xff]
        %v1244 = vld [vmem:[%s3 + $0x48] sm:$0xff]
        %v1245 = vld [vmem:[%s3 + $0x50] sm:$0xff]
        %v1246 = vld [vmem:[%s3 + $0x58] sm:$0xff]
        %v1247 = vld [vmem:[%s3 + $0x60] sm:$0xff]
        %v1248 = vld [vmem:[%s3 + $0x68] sm:$0xff]
        %v1249 = vld [vmem:[%s3 + $0x70] sm:$0xff]
        %v1250 = vld [vmem:[%s3 + $0x78] sm:$0xff]
        %v1251 = vld [vmem:[%s3 + $0x80] sm:$0xff]
        %v1252 = vld [vmem:[%s3 + $0x88] sm:$0xff]
        %v1253 = vld [vmem:[%s3 + $0x90] sm:$0xff]
        %v1254 = vld [vmem:[%s3 + $0x98] sm:$0xff]
        %v1255 = vld [vmem:[%s3 + $0xa0] sm:$0xff]
        %v1256 = vld [vmem:[%s3 + $0xa8] sm:$0xff]
        %v1257 = vld [vmem:[%s3 + $0xb0] sm:$0xff]
        %v1258 = vld [vmem:[%s3 + $0xb8] sm:$0xff]
        %v1259 = vld [vmem:[%s3 + $0xc0] sm:$0xff]
        %v1260 = vld [vmem:[%s3 + $0xc8] sm:$0xff]
        %v1261 = vld [vmem:[%s3 + $0xd0] sm:$0xff]
        %v1262 = vld [vmem:[%s3 + $0xd8] sm:$0xff]
        %v1263 = vld [vmem:[%s3 + $0xe0] sm:$0xff]
        %v1264 = vld [vmem:[%s3 + $0xe8] sm:$0xff]
        %v1265 = vld [vmem:[%s3 + $0xf0] sm:$0xff]
        %v1266 = vld [vmem:[%s3 + $0xf8] sm:$0xff]
        %v1267 = vld [vmem:[%s3 + $0x100] sm:$0xff]
        %v1268 = vld [vmem:[%s3 + $0x108] sm:$0xff]
        %v1269 = vld [vmem:[%s3 + $0x110] sm:$0xff]
        %v1270 = vld [vmem:[%s3 + $0x118] sm:$0xff]
        %v1271 = vld [vmem:[%s3 + $0x120] sm:$0xff]
        %v1272 = vld [vmem:[%s3 + $0x128] sm:$0xff]
        %v1273 = vld [vmem:[%s3 + $0x130] sm:$0xff]
        %v1274 = vld [vmem:[%s3 + $0x138] sm:$0xff]
        %v1275 = vld [vmem:[%s3 + $0x140] sm:$0xff]
        %v1276 = vld [vmem:[%s3 + $0x148] sm:$0xff]
        %v1277 = vld [vmem:[%s3 + $0x150] sm:$0xff]
        %v1278 = vld [vmem:[%s3 + $0x158] sm:$0xff]
        %v1279 = vld [vmem:[%s3 + $0x160] sm:$0xff]
        %v1280 = vld [vmem:[%s3 + $0x168] sm:$0xff]
        %v1281 = vld [vmem:[%s3 + $0x170] sm:$0xff]
        %v1282 = vld [vmem:[%s3 + $0x178] sm:$0xff]
        %v1283 = vld [vmem:[%s3 + $0x180] sm:$0xff]
        %v1284 = vld [vmem:[%s3 + $0x188] sm:$0xff]
        %v1285 = vld [vmem:[%s3 + $0x190] sm:$0xff]
        %v1286 = vld [vmem:[%s3 + $0x198] sm:$0xff]
        %v1287 = vld [vmem:[%s3 + $0x1a0] sm:$0xff]
        %v1288 = vld [vmem:[%s3 + $0x1a8] sm:$0xff]
        %v1289 = vld [vmem:[%s3 + $0x1b0] sm:$0xff]
        %v1290 = vld [vmem:[%s3 + $0x1b8] sm:$0xff]
        %v1291 = vld [vmem:[%s3 + $0x1c0] sm:$0xff]
        %v1292 = vld [vmem:[%s3 + $0x1c8] sm:$0xff]
        %v1293 = vld [vmem:[%s3 + $0x1d0] sm:$0xff]
        %v1294 = vld [vmem:[%s3 + $0x1d8] sm:$0xff]
        %v1295 = vld [vmem:[%s3 + $0x1e0] sm:$0xff]
        %v1296 = vld [vmem:[%s3 + $0x1e8] sm:$0xff]
        %v1297 = vld [vmem:[%s3 + $0x1f0] sm:$0xff]
        %v1298 = vld [vmem:[%s3 + $0x1f8] sm:$0xff]
        %v1299 = vpack.c.bf16 %v1207, %v1205
        %v1300 = vpack.c.bf16 %v1208, %v1206
        %v1301 = vpack.c.bf16 %v1211, %v1209
        %v1302 = vpack.c.bf16 %v1212, %v1210
        %v1303 = vpack.c.bf16 %v1215, %v1213
        %v1304 = vpack.c.bf16 %v1216, %v1214
        %v1305 = vpack.c.bf16 %v1219, %v1217
        %v1306 = vpack.c.bf16 %v1220, %v1218
        %s1307 = scalar_lea.vmem %s3, 512
        %v1308 = vld [vmem:[%s1307] sm:$0xff]
        %v1309 = vld [vmem:[%s1307 + $0x8] sm:$0xff]
        %v1310 = vld [vmem:[%s1307 + $0x10] sm:$0xff]
        %v1311 = vld [vmem:[%s1307 + $0x18] sm:$0xff]
        %v1312 = vld [vmem:[%s1307 + $0x20] sm:$0xff]
        %v1313 = vld [vmem:[%s1307 + $0x28] sm:$0xff]
        %v1314 = vld [vmem:[%s1307 + $0x30] sm:$0xff]
        %v1315 = vld [vmem:[%s1307 + $0x38] sm:$0xff]
        %v1316 = vld [vmem:[%s1307 + $0x40] sm:$0xff]
        %v1317 = vld [vmem:[%s1307 + $0x48] sm:$0xff]
        %v1318 = vld [vmem:[%s1307 + $0x50] sm:$0xff]
        %v1319 = vld [vmem:[%s1307 + $0x58] sm:$0xff]
        %v1320 = vld [vmem:[%s1307 + $0x60] sm:$0xff]
        %v1321 = vld [vmem:[%s1307 + $0x68] sm:$0xff]
        %v1322 = vld [vmem:[%s1307 + $0x70] sm:$0xff]
        %v1323 = vld [vmem:[%s1307 + $0x78] sm:$0xff]
        %v1324 = vld [vmem:[%s1307 + $0x80] sm:$0xff]
        %v1325 = vld [vmem:[%s1307 + $0x88] sm:$0xff]
        %v1326 = vld [vmem:[%s1307 + $0x90] sm:$0xff]
        %v1327 = vld [vmem:[%s1307 + $0x98] sm:$0xff]
        %v1328 = vld [vmem:[%s1307 + $0xa0] sm:$0xff]
        %v1329 = vld [vmem:[%s1307 + $0xa8] sm:$0xff]
        %v1330 = vld [vmem:[%s1307 + $0xb0] sm:$0xff]
        %v1331 = vld [vmem:[%s1307 + $0xb8] sm:$0xff]
        %v1332 = vld [vmem:[%s1307 + $0xc0] sm:$0xff]
        %v1333 = vld [vmem:[%s1307 + $0xc8] sm:$0xff]
        %v1334 = vld [vmem:[%s1307 + $0xd0] sm:$0xff]
        %v1335 = vld [vmem:[%s1307 + $0xd8] sm:$0xff]
        %v1336 = vld [vmem:[%s1307 + $0xe0] sm:$0xff]
        %v1337 = vld [vmem:[%s1307 + $0xe8] sm:$0xff]
        %v1338 = vld [vmem:[%s1307 + $0xf0] sm:$0xff]
        %v1339 = vld [vmem:[%s1307 + $0xf8] sm:$0xff]
        %v1340 = vld [vmem:[%s1307 + $0x100] sm:$0xff]
        %v1341 = vld [vmem:[%s1307 + $0x108] sm:$0xff]
        %v1342 = vld [vmem:[%s1307 + $0x110] sm:$0xff]
        %v1343 = vld [vmem:[%s1307 + $0x118] sm:$0xff]
        %v1344 = vld [vmem:[%s1307 + $0x120] sm:$0xff]
        %v1345 = vld [vmem:[%s1307 + $0x128] sm:$0xff]
        %v1346 = vld [vmem:[%s1307 + $0x130] sm:$0xff]
        %v1347 = vld [vmem:[%s1307 + $0x138] sm:$0xff]
        %v1348 = vld [vmem:[%s1307 + $0x140] sm:$0xff]
        %v1349 = vld [vmem:[%s1307 + $0x148] sm:$0xff]
        %v1350 = vld [vmem:[%s1307 + $0x150] sm:$0xff]
        %v1351 = vld [vmem:[%s1307 + $0x158] sm:$0xff]
        %v1352 = vld [vmem:[%s1307 + $0x160] sm:$0xff]
        %v1353 = vld [vmem:[%s1307 + $0x168] sm:$0xff]
        %v1354 = vld [vmem:[%s1307 + $0x170] sm:$0xff]
        %v1355 = vld [vmem:[%s1307 + $0x178] sm:$0xff]
        %v1356 = vld [vmem:[%s1307 + $0x180] sm:$0xff]
        %v1357 = vld [vmem:[%s1307 + $0x188] sm:$0xff]
        %v1358 = vld [vmem:[%s1307 + $0x190] sm:$0xff]
        %v1359 = vld [vmem:[%s1307 + $0x198] sm:$0xff]
        %v1360 = vld [vmem:[%s1307 + $0x1a0] sm:$0xff]
        %v1361 = vld [vmem:[%s1307 + $0x1a8] sm:$0xff]
        %v1362 = vld [vmem:[%s1307 + $0x1b0] sm:$0xff]
        %v1363 = vld [vmem:[%s1307 + $0x1b8] sm:$0xff]
        %v1364 = vld [vmem:[%s1307 + $0x1c0] sm:$0xff]
        %v1365 = vld [vmem:[%s1307 + $0x1c8] sm:$0xff]
        %v1366 = vld [vmem:[%s1307 + $0x1d0] sm:$0xff]
        %v1367 = vld [vmem:[%s1307 + $0x1d8] sm:$0xff]
        %v1368 = vld [vmem:[%s1307 + $0x1e0] sm:$0xff]
        %v1369 = vld [vmem:[%s1307 + $0x1e8] sm:$0xff]
        %v1370 = vld [vmem:[%s1307 + $0x1f0] sm:$0xff]
        %v1371 = vld [vmem:[%s1307 + $0x1f8] sm:$0xff]
        %v1436 = vunpack.c.l.b16 %v1308
        %v1437 = vunpack.c.h.b16 %v1308
        %v1438 = vunpack.c.l.b16 %v1309
        %v1439 = vunpack.c.h.b16 %v1309
        %v1440 = vunpack.c.l.b16 %v1310
        %v1441 = vunpack.c.h.b16 %v1310
        %v1442 = vunpack.c.l.b16 %v1311
        %v1443 = vunpack.c.h.b16 %v1311
        %v1444 = vunpack.c.l.b16 %v1312
        %v1445 = vunpack.c.h.b16 %v1312
        %v1446 = vunpack.c.l.b16 %v1313
        %v1447 = vunpack.c.h.b16 %v1313
        %v1448 = vunpack.c.l.b16 %v1314
        %v1449 = vunpack.c.h.b16 %v1314
        %v1450 = vunpack.c.l.b16 %v1315
        %v1451 = vunpack.c.h.b16 %v1315
        %v1452 = vunpack.c.l.b16 %v1316
        %v1453 = vunpack.c.h.b16 %v1316
        %v1454 = vunpack.c.l.b16 %v1317
        %v1455 = vunpack.c.h.b16 %v1317
        %v1456 = vunpack.c.l.b16 %v1318
        %v1457 = vunpack.c.h.b16 %v1318
        %v1458 = vunpack.c.l.b16 %v1319
        %v1459 = vunpack.c.h.b16 %v1319
        %v1460 = vunpack.c.l.b16 %v1320
        %v1461 = vunpack.c.h.b16 %v1320
        %v1462 = vunpack.c.l.b16 %v1321
        %v1463 = vunpack.c.h.b16 %v1321
        %v1464 = vunpack.c.l.b16 %v1322
        %v1465 = vunpack.c.h.b16 %v1322
        %v1466 = vunpack.c.l.b16 %v1323
        %v1467 = vunpack.c.h.b16 %v1323
        %v1468 = vunpack.c.l.b16 %v1324
        %v1469 = vunpack.c.h.b16 %v1324
        %v1470 = vunpack.c.l.b16 %v1325
        %v1471 = vunpack.c.h.b16 %v1325
        %v1472 = vunpack.c.l.b16 %v1326
        %v1473 = vunpack.c.h.b16 %v1326
        %v1474 = vunpack.c.l.b16 %v1327
        %v1475 = vunpack.c.h.b16 %v1327
        %v1476 = vunpack.c.l.b16 %v1328
        %v1477 = vunpack.c.h.b16 %v1328
        %v1478 = vunpack.c.l.b16 %v1329
        %v1479 = vunpack.c.h.b16 %v1329
        %v1480 = vunpack.c.l.b16 %v1330
        %v1481 = vunpack.c.h.b16 %v1330
        %v1482 = vunpack.c.l.b16 %v1331
        %v1483 = vunpack.c.h.b16 %v1331
        %v1484 = vunpack.c.l.b16 %v1332
        %v1485 = vunpack.c.h.b16 %v1332
        %v1486 = vunpack.c.l.b16 %v1333
        %v1487 = vunpack.c.h.b16 %v1333
        %v1488 = vunpack.c.l.b16 %v1334
        %v1489 = vunpack.c.h.b16 %v1334
        %v1490 = vunpack.c.l.b16 %v1335
        %v1491 = vunpack.c.h.b16 %v1335
        %v1492 = vunpack.c.l.b16 %v1336
        %v1493 = vunpack.c.h.b16 %v1336
        %v1494 = vunpack.c.l.b16 %v1337
        %v1495 = vunpack.c.h.b16 %v1337
        %v1496 = vunpack.c.l.b16 %v1338
        %v1497 = vunpack.c.h.b16 %v1338
        %v1498 = vunpack.c.l.b16 %v1339
        %v1499 = vunpack.c.h.b16 %v1339
        %v1500 = vunpack.c.l.b16 %v1340
        %v1501 = vunpack.c.h.b16 %v1340
        %v1502 = vunpack.c.l.b16 %v1341
        %v1503 = vunpack.c.h.b16 %v1341
        %v1504 = vunpack.c.l.b16 %v1342
        %v1505 = vunpack.c.h.b16 %v1342
        %v1506 = vunpack.c.l.b16 %v1343
        %v1507 = vunpack.c.h.b16 %v1343
        %v1508 = vunpack.c.l.b16 %v1344
        %v1509 = vunpack.c.h.b16 %v1344
        %v1510 = vunpack.c.l.b16 %v1345
        %v1511 = vunpack.c.h.b16 %v1345
        %v1512 = vunpack.c.l.b16 %v1346
        %v1513 = vunpack.c.h.b16 %v1346
        %v1514 = vunpack.c.l.b16 %v1347
        %v1515 = vunpack.c.h.b16 %v1347
        %v1516 = vunpack.c.l.b16 %v1348
        %v1517 = vunpack.c.h.b16 %v1348
        %v1518 = vunpack.c.l.b16 %v1349
        %v1519 = vunpack.c.h.b16 %v1349
        %v1520 = vunpack.c.l.b16 %v1350
        %v1521 = vunpack.c.h.b16 %v1350
        %v1522 = vunpack.c.l.b16 %v1351
        %v1523 = vunpack.c.h.b16 %v1351
        %v1524 = vunpack.c.l.b16 %v1352
        %v1525 = vunpack.c.h.b16 %v1352
        %v1526 = vunpack.c.l.b16 %v1353
        %v1527 = vunpack.c.h.b16 %v1353
        %v1528 = vunpack.c.l.b16 %v1354
        %v1529 = vunpack.c.h.b16 %v1354
        %v1530 = vunpack.c.l.b16 %v1355
        %v1531 = vunpack.c.h.b16 %v1355
        %v1532 = vunpack.c.l.b16 %v1356
        %v1533 = vunpack.c.h.b16 %v1356
        %v1534 = vunpack.c.l.b16 %v1357
        %v1535 = vunpack.c.h.b16 %v1357
        %v1536 = vunpack.c.l.b16 %v1358
        %v1537 = vunpack.c.h.b16 %v1358
        %v1538 = vunpack.c.l.b16 %v1359
        %v1539 = vunpack.c.h.b16 %v1359
        %v1540 = vunpack.c.l.b16 %v1360
        %v1541 = vunpack.c.h.b16 %v1360
        %v1542 = vunpack.c.l.b16 %v1361
        %v1543 = vunpack.c.h.b16 %v1361
        %v1544 = vunpack.c.l.b16 %v1362
        %v1545 = vunpack.c.h.b16 %v1362
        %v1546 = vunpack.c.l.b16 %v1363
        %v1547 = vunpack.c.h.b16 %v1363
        %v1548 = vunpack.c.l.b16 %v1364
        %v1549 = vunpack.c.h.b16 %v1364
        %v1550 = vunpack.c.l.b16 %v1365
        %v1551 = vunpack.c.h.b16 %v1365
        %v1552 = vunpack.c.l.b16 %v1366
        %v1553 = vunpack.c.h.b16 %v1366
        %v1554 = vunpack.c.l.b16 %v1367
        %v1555 = vunpack.c.h.b16 %v1367
        %v1556 = vunpack.c.l.b16 %v1368
        %v1557 = vunpack.c.h.b16 %v1368
        %v1558 = vunpack.c.l.b16 %v1369
        %v1559 = vunpack.c.h.b16 %v1369
        %v1560 = vunpack.c.l.b16 %v1370
        %v1561 = vunpack.c.h.b16 %v1370
        %v1562 = vunpack.c.l.b16 %v1371
        %v1563 = vunpack.c.h.b16 %v1371
        %v1564 = vpack.c.b16 %v1440, %v1436
        %v1565 = vpack.c.b16 %v1441, %v1437
        %v1566 = vpack.c.b16 %v1442, %v1438
        %v1567 = vpack.c.b16 %v1443, %v1439
        %v1568 = vpack.c.b16 %v1448, %v1444
        %v1569 = vpack.c.b16 %v1449, %v1445
        %v1570 = vpack.c.b16 %v1450, %v1446
        %v1571 = vpack.c.b16 %v1451, %v1447
        %v1572 = vpack.c.b16 %v1456, %v1452
        %v1573 = vpack.c.b16 %v1457, %v1453
        %v1574 = vpack.c.b16 %v1458, %v1454
        %v1575 = vpack.c.b16 %v1459, %v1455
        %v1576 = vpack.c.b16 %v1464, %v1460
        %v1577 = vpack.c.b16 %v1465, %v1461
        %v1578 = vpack.c.b16 %v1466, %v1462
        %v1579 = vpack.c.b16 %v1467, %v1463
        %v1580 = vpack.c.b16 %v1472, %v1468
        %v1581 = vpack.c.b16 %v1473, %v1469
        %v1582 = vpack.c.b16 %v1474, %v1470
        %v1583 = vpack.c.b16 %v1475, %v1471
        %v1584 = vpack.c.b16 %v1480, %v1476
        %v1585 = vpack.c.b16 %v1481, %v1477
        %v1586 = vpack.c.b16 %v1482, %v1478
        %v1587 = vpack.c.b16 %v1483, %v1479
        %v1588 = vpack.c.b16 %v1488, %v1484
        %v1589 = vpack.c.b16 %v1489, %v1485
        %v1590 = vpack.c.b16 %v1490, %v1486
        %v1591 = vpack.c.b16 %v1491, %v1487
        %v1592 = vpack.c.b16 %v1496, %v1492
        %v1593 = vpack.c.b16 %v1497, %v1493
        %v1594 = vpack.c.b16 %v1498, %v1494
        %v1595 = vpack.c.b16 %v1499, %v1495
        %v1596 = vpack.c.b16 %v1504, %v1500
        %v1597 = vpack.c.b16 %v1505, %v1501
        %v1598 = vpack.c.b16 %v1506, %v1502
        %v1599 = vpack.c.b16 %v1507, %v1503
        %v1600 = vpack.c.b16 %v1512, %v1508
        %v1601 = vpack.c.b16 %v1513, %v1509
        %v1602 = vpack.c.b16 %v1514, %v1510
        %v1603 = vpack.c.b16 %v1515, %v1511
        %v1604 = vpack.c.b16 %v1520, %v1516
        %v1605 = vpack.c.b16 %v1521, %v1517
        %v1606 = vpack.c.b16 %v1522, %v1518
        %v1607 = vpack.c.b16 %v1523, %v1519
        %v1608 = vpack.c.b16 %v1528, %v1524
        %v1609 = vpack.c.b16 %v1529, %v1525
        %v1610 = vpack.c.b16 %v1530, %v1526
        %v1611 = vpack.c.b16 %v1531, %v1527
        %v1612 = vpack.c.b16 %v1536, %v1532
        %v1613 = vpack.c.b16 %v1537, %v1533
        %v1614 = vpack.c.b16 %v1538, %v1534
        %v1615 = vpack.c.b16 %v1539, %v1535
        %v1616 = vpack.c.b16 %v1544, %v1540
        %v1617 = vpack.c.b16 %v1545, %v1541
        %v1618 = vpack.c.b16 %v1546, %v1542
        %v1619 = vpack.c.b16 %v1547, %v1543
        %v1620 = vpack.c.b16 %v1552, %v1548
        %v1621 = vpack.c.b16 %v1553, %v1549
        %v1622 = vpack.c.b16 %v1554, %v1550
        %v1623 = vpack.c.b16 %v1555, %v1551
        %v1624 = vpack.c.b16 %v1560, %v1556
        %v1625 = vpack.c.b16 %v1561, %v1557
        %v1626 = vpack.c.b16 %v1562, %v1558
        %v1627 = vpack.c.b16 %v1563, %v1559
        %1692 = vmatprep.subr.bf16.mxu0 %v1565
        %1693 = vmatpush1.bf16.msra.mxu0 %v1564
        %1694 = vmatprep.subr.bf16.mxu0 %v1569
        %1695 = vmatpush1.bf16.msra.mxu0 %v1568
        %1696 = vmatprep.subr.bf16.mxu0 %v1573
        %1697 = vmatpush1.bf16.msra.mxu0 %v1572
        %1698 = vmatprep.subr.bf16.mxu0 %v1577
        %1699 = vmatpush1.bf16.msra.mxu0 %v1576
        %1700 = vmatprep.subr.bf16.mxu0 %v1581
        %1701 = vmatpush1.bf16.msra.mxu0 %v1580
        %1702 = vmatprep.subr.bf16.mxu0 %v1585
        %1703 = vmatpush1.bf16.msra.mxu0 %v1584
        %1704 = vmatprep.subr.bf16.mxu0 %v1589
        %1705 = vmatpush1.bf16.msra.mxu0 %v1588
        %1706 = vmatprep.subr.bf16.mxu0 %v1593
        %1707 = vmatpush1.bf16.msra.mxu0 %v1592
        %1708 = vmatprep.subr.bf16.mxu0 %v1597
        %1709 = vmatpush1.bf16.msra.mxu0 %v1596
        %1710 = vmatprep.subr.bf16.mxu0 %v1601
        %1711 = vmatpush1.bf16.msra.mxu0 %v1600
        %1712 = vmatprep.subr.bf16.mxu0 %v1605
        %1713 = vmatpush1.bf16.msra.mxu0 %v1604
        %1714 = vmatprep.subr.bf16.mxu0 %v1609
        %1715 = vmatpush1.bf16.msra.mxu0 %v1608
        %1716 = vmatprep.subr.bf16.mxu0 %v1613
        %1717 = vmatpush1.bf16.msra.mxu0 %v1612
        %1718 = vmatprep.subr.bf16.mxu0 %v1617
        %1719 = vmatpush1.bf16.msra.mxu0 %v1616
        %1720 = vmatprep.subr.bf16.mxu0 %v1621
        %1721 = vmatpush1.bf16.msra.mxu0 %v1620
        %1722 = vmatprep.subr.bf16.mxu0 %v1625
        %1723 = vmatpush1.bf16.msra.mxu0 %v1624
        %1724 = vmatprep.mubr.bf16.mxu0 %v1300
        %1725 = vmatmul.mubr.bf16.gmra.mrb[0].mxu0 %v1299
        %v1726 = vpop.f32.mrb[0].mxu0
        %v1727 = vadd.f32 0.0, %v1726
        %v1728 = vpop.f32.mrb[0].mxu0
        %v1729 = vadd.f32 0.0, %v1728
        %v1730 = vpop.f32.mrb[0].mxu0
        %v1731 = vadd.f32 0.0, %v1730
        %v1732 = vpop.f32.mrb[0].mxu0
        %v1733 = vadd.f32 0.0, %v1732
        %1734 = vmatprep.mubr.bf16.mxu0 %v1302
        %1735 = vmatmul.mubr.bf16.gmra.mrb[0].mxu0 %v1301
        %v1736 = vpop.f32.mrb[0].mxu0
        %v1737 = vadd.f32 0.0, %v1736
        %v1738 = vpop.f32.mrb[0].mxu0
        %v1739 = vadd.f32 0.0, %v1738
        %v1740 = vpop.f32.mrb[0].mxu0
        %v1741 = vadd.f32 0.0, %v1740
        %v1742 = vpop.f32.mrb[0].mxu0
        %v1743 = vadd.f32 0.0, %v1742
        %1744 = vmatprep.mubr.bf16.mxu0 %v1304
        %1745 = vmatmul.mubr.bf16.gmra.mrb[0].mxu0 %v1303
        %v1746 = vpop.f32.mrb[0].mxu0
        %v1747 = vadd.f32 0.0, %v1746
        %v1748 = vpop.f32.mrb[0].mxu0
        %v1749 = vadd.f32 0.0, %v1748
        %v1750 = vpop.f32.mrb[0].mxu0
        %v1751 = vadd.f32 0.0, %v1750
        %v1752 = vpop.f32.mrb[0].mxu0
        %v1753 = vadd.f32 0.0, %v1752
        %1754 = vmatprep.mubr.bf16.mxu0 %v1306
        %1755 = vmatmul.mubr.bf16.gmra.mrb[0].mxu0 %v1305
        %v1756 = vpop.f32.mrb[0].mxu0
        %v1757 = vadd.f32 0.0, %v1756
        %v1758 = vpop.f32.mrb[0].mxu0
        %v1759 = vadd.f32 0.0, %v1758
        %v1760 = vpop.f32.mrb[0].mxu0
        %v1761 = vadd.f32 0.0, %v1760
        %v1762 = vpop.f32.mrb[0].mxu0
        %v1763 = vadd.f32 0.0, %v1762
        %1764 = vdwg.mxu0
        %1765 = vmatprep.subr.bf16.mxu0 %v1567
        %1766 = vmatpush1.bf16.msra.mxu0 %v1566
        %1767 = vmatprep.subr.bf16.mxu0 %v1571
        %1768 = vmatpush1.bf16.msra.mxu0 %v1570
        %1769 = vmatprep.subr.bf16.mxu0 %v1575
        %1770 = vmatpush1.bf16.msra.mxu0 %v1574
        %1771 = vmatprep.subr.bf16.mxu0 %v1579
        %1772 = vmatpush1.bf16.msra.mxu0 %v1578
        %1773 = vmatprep.subr.bf16.mxu0 %v1583
        %1774 = vmatpush1.bf16.msra.mxu0 %v1582
        %1775 = vmatprep.subr.bf16.mxu0 %v1587
        %1776 = vmatpush1.bf16.msra.mxu0 %v1586
        %1777 = vmatprep.subr.bf16.mxu0 %v1591
        %1778 = vmatpush1.bf16.msra.mxu0 %v1590
        %1779 = vmatprep.subr.bf16.mxu0 %v1595
        %1780 = vmatpush1.bf16.msra.mxu0 %v1594
        %1781 = vmatprep.subr.bf16.mxu0 %v1599
        %1782 = vmatpush1.bf16.msra.mxu0 %v1598
        %1783 = vmatprep.subr.bf16.mxu0 %v1603
        %1784 = vmatpush1.bf16.msra.mxu0 %v1602
        %1785 = vmatprep.subr.bf16.mxu0 %v1607
        %1786 = vmatpush1.bf16.msra.mxu0 %v1606
        %1787 = vmatprep.subr.bf16.mxu0 %v1611
        %1788 = vmatpush1.bf16.msra.mxu0 %v1610
        %1789 = vmatprep.subr.bf16.mxu0 %v1615
        %1790 = vmatpush1.bf16.msra.mxu0 %v1614
        %1791 = vmatprep.subr.bf16.mxu0 %v1619
        %1792 = vmatpush1.bf16.msra.mxu0 %v1618
        %1793 = vmatprep.subr.bf16.mxu0 %v1623
        %1794 = vmatpush1.bf16.msra.mxu0 %v1622
        %1795 = vmatprep.subr.bf16.mxu0 %v1627
        %1796 = vmatpush1.bf16.msra.mxu0 %v1626
        %1797 = vmatprep.mubr.bf16.mxu0 %v1300
        %1798 = vmatmul.mubr.bf16.gmra.mrb[0].mxu0 %v1299
        %v1799 = vpop.f32.mrb[0].mxu0
        %v1800 = vadd.f32 0.0, %v1799
        %v1801 = vpop.f32.mrb[0].mxu0
        %v1802 = vadd.f32 0.0, %v1801
        %v1803 = vpop.f32.mrb[0].mxu0
        %v1804 = vadd.f32 0.0, %v1803
        %v1805 = vpop.f32.mrb[0].mxu0
        %v1806 = vadd.f32 0.0, %v1805
        %1807 = vmatprep.mubr.bf16.mxu0 %v1302
        %1808 = vmatmul.mubr.bf16.gmra.mrb[0].mxu0 %v1301
        %v1809 = vpop.f32.mrb[0].mxu0
        %v1810 = vadd.f32 0.0, %v1809
        %v1811 = vpop.f32.mrb[0].mxu0
        %v1812 = vadd.f32 0.0, %v1811
        %v1813 = vpop.f32.mrb[0].mxu0
        %v1814 = vadd.f32 0.0, %v1813
        %v1815 = vpop.f32.mrb[0].mxu0
        %v1816 = vadd.f32 0.0, %v1815
        %1817 = vmatprep.mubr.bf16.mxu0 %v1304
        %1818 = vmatmul.mubr.bf16.gmra.mrb[0].mxu0 %v1303
        %v1819 = vpop.f32.mrb[0].mxu0
        %v1820 = vadd.f32 0.0, %v1819
        %v1821 = vpop.f32.mrb[0].mxu0
        %v1822 = vadd.f32 0.0, %v1821
        %v1823 = vpop.f32.mrb[0].mxu0
        %v1824 = vadd.f32 0.0, %v1823
        %v1825 = vpop.f32.mrb[0].mxu0
        %v1826 = vadd.f32 0.0, %v1825
        %1827 = vmatprep.mubr.bf16.mxu0 %v1306
        %1828 = vmatmul.mubr.bf16.gmra.mrb[0].mxu0 %v1305
        %v1829 = vpop.f32.mrb[0].mxu0
        %v1830 = vadd.f32 0.0, %v1829
        %v1831 = vpop.f32.mrb[0].mxu0
        %v1832 = vadd.f32 0.0, %v1831
        %v1833 = vpop.f32.mrb[0].mxu0
        %v1834 = vadd.f32 0.0, %v1833
        %v1835 = vpop.f32.mrb[0].mxu0
        %v1836 = vadd.f32 0.0, %v1835
        %1837 = vdwg.mxu0
        %v1902 = vunpack.c.l.b16 %v1235
        %v1903 = vunpack.c.h.b16 %v1235
        %v1904 = vunpack.c.l.b16 %v1236
        %v1905 = vunpack.c.h.b16 %v1236
        %v1906 = vunpack.c.l.b16 %v1237
        %v1907 = vunpack.c.h.b16 %v1237
        %v1908 = vunpack.c.l.b16 %v1238
        %v1909 = vunpack.c.h.b16 %v1238
        %v1910 = vunpack.c.l.b16 %v1239
        %v1911 = vunpack.c.h.b16 %v1239
        %v1912 = vunpack.c.l.b16 %v1240
        %v1913 = vunpack.c.h.b16 %v1240
        %v1914 = vunpack.c.l.b16 %v1241
        %v1915 = vunpack.c.h.b16 %v1241
        %v1916 = vunpack.c.l.b16 %v1242
        %v1917 = vunpack.c.h.b16 %v1242
        %v1918 = vunpack.c.l.b16 %v1243
        %v1919 = vunpack.c.h.b16 %v1243
        %v1920 = vunpack.c.l.b16 %v1244
        %v1921 = vunpack.c.h.b16 %v1244
        %v1922 = vunpack.c.l.b16 %v1245
        %v1923 = vunpack.c.h.b16 %v1245
        %v1924 = vunpack.c.l.b16 %v1246
        %v1925 = vunpack.c.h.b16 %v1246
        %v1926 = vunpack.c.l.b16 %v1247
        %v1927 = vunpack.c.h.b16 %v1247
        %v1928 = vunpack.c.l.b16 %v1248
        %v1929 = vunpack.c.h.b16 %v1248
        %v1930 = vunpack.c.l.b16 %v1249
        %v1931 = vunpack.c.h.b16 %v1249
        %v1932 = vunpack.c.l.b16 %v1250
        %v1933 = vunpack.c.h.b16 %v1250
        %v1934 = vunpack.c.l.b16 %v1251
        %v1935 = vunpack.c.h.b16 %v1251
        %v1936 = vunpack.c.l.b16 %v1252
        %v1937 = vunpack.c.h.b16 %v1252
        %v1938 = vunpack.c.l.b16 %v1253
        %v1939 = vunpack.c.h.b16 %v1253
        %v1940 = vunpack.c.l.b16 %v1254
        %v1941 = vunpack.c.h.b16 %v1254
        %v1942 = vunpack.c.l.b16 %v1255
        %v1943 = vunpack.c.h.b16 %v1255
        %v1944 = vunpack.c.l.b16 %v1256
        %v1945 = vunpack.c.h.b16 %v1256
        %v1946 = vunpack.c.l.b16 %v1257
        %v1947 = vunpack.c.h.b16 %v1257
        %v1948 = vunpack.c.l.b16 %v1258
        %v1949 = vunpack.c.h.b16 %v1258
        %v1950 = vunpack.c.l.b16 %v1259
        %v1951 = vunpack.c.h.b16 %v1259
        %v1952 = vunpack.c.l.b16 %v1260
        %v1953 = vunpack.c.h.b16 %v1260
        %v1954 = vunpack.c.l.b16 %v1261
        %v1955 = vunpack.c.h.b16 %v1261
        %v1956 = vunpack.c.l.b16 %v1262
        %v1957 = vunpack.c.h.b16 %v1262
        %v1958 = vunpack.c.l.b16 %v1263
        %v1959 = vunpack.c.h.b16 %v1263
        %v1960 = vunpack.c.l.b16 %v1264
        %v1961 = vunpack.c.h.b16 %v1264
        %v1962 = vunpack.c.l.b16 %v1265
        %v1963 = vunpack.c.h.b16 %v1265
        %v1964 = vunpack.c.l.b16 %v1266
        %v1965 = vunpack.c.h.b16 %v1266
        %v1966 = vunpack.c.l.b16 %v1267
        %v1967 = vunpack.c.h.b16 %v1267
        %v1968 = vunpack.c.l.b16 %v1268
        %v1969 = vunpack.c.h.b16 %v1268
        %v1970 = vunpack.c.l.b16 %v1269
        %v1971 = vunpack.c.h.b16 %v1269
        %v1972 = vunpack.c.l.b16 %v1270
        %v1973 = vunpack.c.h.b16 %v1270
        %v1974 = vunpack.c.l.b16 %v1271
        %v1975 = vunpack.c.h.b16 %v1271
        %v1976 = vunpack.c.l.b16 %v1272
        %v1977 = vunpack.c.h.b16 %v1272
        %v1978 = vunpack.c.l.b16 %v1273
        %v1979 = vunpack.c.h.b16 %v1273
        %v1980 = vunpack.c.l.b16 %v1274
        %v1981 = vunpack.c.h.b16 %v1274
        %v1982 = vunpack.c.l.b16 %v1275
        %v1983 = vunpack.c.h.b16 %v1275
        %v1984 = vunpack.c.l.b16 %v1276
        %v1985 = vunpack.c.h.b16 %v1276
        %v1986 = vunpack.c.l.b16 %v1277
        %v1987 = vunpack.c.h.b16 %v1277
        %v1988 = vunpack.c.l.b16 %v1278
        %v1989 = vunpack.c.h.b16 %v1278
        %v1990 = vunpack.c.l.b16 %v1279
        %v1991 = vunpack.c.h.b16 %v1279
        %v1992 = vunpack.c.l.b16 %v1280
        %v1993 = vunpack.c.h.b16 %v1280
        %v1994 = vunpack.c.l.b16 %v1281
        %v1995 = vunpack.c.h.b16 %v1281
        %v1996 = vunpack.c.l.b16 %v1282
        %v1997 = vunpack.c.h.b16 %v1282
        %v1998 = vunpack.c.l.b16 %v1283
        %v1999 = vunpack.c.h.b16 %v1283
        %v2000 = vunpack.c.l.b16 %v1284
        %v2001 = vunpack.c.h.b16 %v1284
        %v2002 = vunpack.c.l.b16 %v1285
        %v2003 = vunpack.c.h.b16 %v1285
        %v2004 = vunpack.c.l.b16 %v1286
        %v2005 = vunpack.c.h.b16 %v1286
        %v2006 = vunpack.c.l.b16 %v1287
        %v2007 = vunpack.c.h.b16 %v1287
        %v2008 = vunpack.c.l.b16 %v1288
        %v2009 = vunpack.c.h.b16 %v1288
        %v2010 = vunpack.c.l.b16 %v1289
        %v2011 = vunpack.c.h.b16 %v1289
        %v2012 = vunpack.c.l.b16 %v1290
        %v2013 = vunpack.c.h.b16 %v1290
        %v2014 = vunpack.c.l.b16 %v1291
        %v2015 = vunpack.c.h.b16 %v1291
        %v2016 = vunpack.c.l.b16 %v1292
        %v2017 = vunpack.c.h.b16 %v1292
        %v2018 = vunpack.c.l.b16 %v1293
        %v2019 = vunpack.c.h.b16 %v1293
        %v2020 = vunpack.c.l.b16 %v1294
        %v2021 = vunpack.c.h.b16 %v1294
        %v2022 = vunpack.c.l.b16 %v1295
        %v2023 = vunpack.c.h.b16 %v1295
        %v2024 = vunpack.c.l.b16 %v1296
        %v2025 = vunpack.c.h.b16 %v1296
        %v2026 = vunpack.c.l.b16 %v1297
        %v2027 = vunpack.c.h.b16 %v1297
        %v2028 = vunpack.c.l.b16 %v1298
        %v2029 = vunpack.c.h.b16 %v1298
        %v2030 = vpack.c.b16 %v1906, %v1902
        %v2031 = vpack.c.b16 %v1907, %v1903
        %v2032 = vpack.c.b16 %v1908, %v1904
        %v2033 = vpack.c.b16 %v1909, %v1905
        %v2034 = vpack.c.b16 %v1914, %v1910
        %v2035 = vpack.c.b16 %v1915, %v1911
        %v2036 = vpack.c.b16 %v1916, %v1912
        %v2037 = vpack.c.b16 %v1917, %v1913
        %v2038 = vpack.c.b16 %v1922, %v1918
        %v2039 = vpack.c.b16 %v1923, %v1919
        %v2040 = vpack.c.b16 %v1924, %v1920
        %v2041 = vpack.c.b16 %v1925, %v1921
        %v2042 = vpack.c.b16 %v1930, %v1926
        %v2043 = vpack.c.b16 %v1931, %v1927
        %v2044 = vpack.c.b16 %v1932, %v1928
        %v2045 = vpack.c.b16 %v1933, %v1929
        %v2046 = vpack.c.b16 %v1938, %v1934
        %v2047 = vpack.c.b16 %v1939, %v1935
        %v2048 = vpack.c.b16 %v1940, %v1936
        %v2049 = vpack.c.b16 %v1941, %v1937
        %v2050 = vpack.c.b16 %v1946, %v1942
        %v2051 = vpack.c.b16 %v1947, %v1943
        %v2052 = vpack.c.b16 %v1948, %v1944
        %v2053 = vpack.c.b16 %v1949, %v1945
        %v2054 = vpack.c.b16 %v1954, %v1950
        %v2055 = vpack.c.b16 %v1955, %v1951
        %v2056 = vpack.c.b16 %v1956, %v1952
        %v2057 = vpack.c.b16 %v1957, %v1953
        %v2058 = vpack.c.b16 %v1962, %v1958
        %v2059 = vpack.c.b16 %v1963, %v1959
        %v2060 = vpack.c.b16 %v1964, %v1960
        %v2061 = vpack.c.b16 %v1965, %v1961
        %v2062 = vpack.c.b16 %v1970, %v1966
        %v2063 = vpack.c.b16 %v1971, %v1967
        %v2064 = vpack.c.b16 %v1972, %v1968
        %v2065 = vpack.c.b16 %v1973, %v1969
        %v2066 = vpack.c.b16 %v1978, %v1974
        %v2067 = vpack.c.b16 %v1979, %v1975
        %v2068 = vpack.c.b16 %v1980, %v1976
        %v2069 = vpack.c.b16 %v1981, %v1977
        %v2070 = vpack.c.b16 %v1986, %v1982
        %v2071 = vpack.c.b16 %v1987, %v1983
        %v2072 = vpack.c.b16 %v1988, %v1984
        %v2073 = vpack.c.b16 %v1989, %v1985
        %v2074 = vpack.c.b16 %v1994, %v1990
        %v2075 = vpack.c.b16 %v1995, %v1991
        %v2076 = vpack.c.b16 %v1996, %v1992
        %v2077 = vpack.c.b16 %v1997, %v1993
        %v2078 = vpack.c.b16 %v2002, %v1998
        %v2079 = vpack.c.b16 %v2003, %v1999
        %v2080 = vpack.c.b16 %v2004, %v2000
        %v2081 = vpack.c.b16 %v2005, %v2001
        %v2082 = vpack.c.b16 %v2010, %v2006
        %v2083 = vpack.c.b16 %v2011, %v2007
        %v2084 = vpack.c.b16 %v2012, %v2008
        %v2085 = vpack.c.b16 %v2013, %v2009
        %v2086 = vpack.c.b16 %v2018, %v2014
        %v2087 = vpack.c.b16 %v2019, %v2015
        %v2088 = vpack.c.b16 %v2020, %v2016
        %v2089 = vpack.c.b16 %v2021, %v2017
        %v2090 = vpack.c.b16 %v2026, %v2022
        %v2091 = vpack.c.b16 %v2027, %v2023
        %v2092 = vpack.c.b16 %v2028, %v2024
        %v2093 = vpack.c.b16 %v2029, %v2025
        %2158 = vmatprep.subr.bf16.mxu0 %v2031
        %2159 = vmatpush1.bf16.msra.mxu0 %v2030
        %2160 = vmatprep.subr.bf16.mxu0 %v2035
        %2161 = vmatpush1.bf16.msra.mxu0 %v2034
        %2162 = vmatprep.subr.bf16.mxu0 %v2039
        %2163 = vmatpush1.bf16.msra.mxu0 %v2038
        %2164 = vmatprep.subr.bf16.mxu0 %v2043
        %2165 = vmatpush1.bf16.msra.mxu0 %v2042
        %2166 = vmatprep.subr.bf16.mxu0 %v2047
        %2167 = vmatpush1.bf16.msra.mxu0 %v2046
        %2168 = vmatprep.subr.bf16.mxu0 %v2051
        %2169 = vmatpush1.bf16.msra.mxu0 %v2050
        %2170 = vmatprep.subr.bf16.mxu0 %v2055
        %2171 = vmatpush1.bf16.msra.mxu0 %v2054
        %2172 = vmatprep.subr.bf16.mxu0 %v2059
        %2173 = vmatpush1.bf16.msra.mxu0 %v2058
        %2174 = vmatprep.subr.bf16.mxu0 %v2063
        %2175 = vmatpush1.bf16.msra.mxu0 %v2062
        %2176 = vmatprep.subr.bf16.mxu0 %v2067
        %2177 = vmatpush1.bf16.msra.mxu0 %v2066
        %2178 = vmatprep.subr.bf16.mxu0 %v2071
        %2179 = vmatpush1.bf16.msra.mxu0 %v2070
        %2180 = vmatprep.subr.bf16.mxu0 %v2075
        %2181 = vmatpush1.bf16.msra.mxu0 %v2074
        %2182 = vmatprep.subr.bf16.mxu0 %v2079
        %2183 = vmatpush1.bf16.msra.mxu0 %v2078
        %2184 = vmatprep.subr.bf16.mxu0 %v2083
        %2185 = vmatpush1.bf16.msra.mxu0 %v2082
        %2186 = vmatprep.subr.bf16.mxu0 %v2087
        %2187 = vmatpush1.bf16.msra.mxu0 %v2086
        %2188 = vmatprep.subr.bf16.mxu0 %v2091
        %2189 = vmatpush1.bf16.msra.mxu0 %v2090
        %2190 = vmatprep.mubr.bf16.mxu0 %v1228
        %2191 = vmatmul.mubr.bf16.gmra.mrb[0].mxu0 %v1227
        %v2192 = vpop.f32.mrb[0].mxu0
        %v2193 = vadd.f32 %v1727, %v2192
        %v2194 = vpop.f32.mrb[0].mxu0
        %v2195 = vadd.f32 %v1729, %v2194
        %v2196 = vpop.f32.mrb[0].mxu0
        %v2197 = vadd.f32 %v1731, %v2196
        %v2198 = vpop.f32.mrb[0].mxu0
        %v2199 = vadd.f32 %v1733, %v2198
        %2200 = vmatprep.mubr.bf16.mxu0 %v1230
        %2201 = vmatmul.mubr.bf16.gmra.mrb[0].mxu0 %v1229
        %v2202 = vpop.f32.mrb[0].mxu0
        %v2203 = vadd.f32 %v1737, %v2202
        %v2204 = vpop.f32.mrb[0].mxu0
        %v2205 = vadd.f32 %v1739, %v2204
        %v2206 = vpop.f32.mrb[0].mxu0
        %v2207 = vadd.f32 %v1741, %v2206
        %v2208 = vpop.f32.mrb[0].mxu0
        %v2209 = vadd.f32 %v1743, %v2208
        %2210 = vmatprep.mubr.bf16.mxu0 %v1232
        %2211 = vmatmul.mubr.bf16.gmra.mrb[0].mxu0 %v1231
        %v2212 = vpop.f32.mrb[0].mxu0
        %v2213 = vadd.f32 %v1747, %v2212
        %v2214 = vpop.f32.mrb[0].mxu0
        %v2215 = vadd.f32 %v1749, %v2214
        %v2216 = vpop.f32.mrb[0].mxu0
        %v2217 = vadd.f32 %v1751, %v2216
        %v2218 = vpop.f32.mrb[0].mxu0
        %v2219 = vadd.f32 %v1753, %v2218
        %2220 = vmatprep.mubr.bf16.mxu0 %v1234
        %2221 = vmatmul.mubr.bf16.gmra.mrb[0].mxu0 %v1233
        %v2222 = vpop.f32.mrb[0].mxu0
        %v2223 = vadd.f32 %v1757, %v2222
        %v2224 = vpop.f32.mrb[0].mxu0
        %v2225 = vadd.f32 %v1759, %v2224
        %v2226 = vpop.f32.mrb[0].mxu0
        %v2227 = vadd.f32 %v1761, %v2226
        %v2228 = vpop.f32.mrb[0].mxu0
        %v2229 = vadd.f32 %v1763, %v2228
        %2230 = vdwg.mxu0
        %2231 = vmatprep.subr.bf16.mxu0 %v2033
        %2232 = vmatpush1.bf16.msra.mxu0 %v2032
        %2233 = vmatprep.subr.bf16.mxu0 %v2037
        %2234 = vmatpush1.bf16.msra.mxu0 %v2036
        %2235 = vmatprep.subr.bf16.mxu0 %v2041
        %2236 = vmatpush1.bf16.msra.mxu0 %v2040
        %2237 = vmatprep.subr.bf16.mxu0 %v2045
        %2238 = vmatpush1.bf16.msra.mxu0 %v2044
        %2239 = vmatprep.subr.bf16.mxu0 %v2049
        %2240 = vmatpush1.bf16.msra.mxu0 %v2048
        %2241 = vmatprep.subr.bf16.mxu0 %v2053
        %2242 = vmatpush1.bf16.msra.mxu0 %v2052
        %2243 = vmatprep.subr.bf16.mxu0 %v2057
        %2244 = vmatpush1.bf16.msra.mxu0 %v2056
        %2245 = vmatprep.subr.bf16.mxu0 %v2061
        %2246 = vmatpush1.bf16.msra.mxu0 %v2060
        %2247 = vmatprep.subr.bf16.mxu0 %v2065
        %2248 = vmatpush1.bf16.msra.mxu0 %v2064
        %2249 = vmatprep.subr.bf16.mxu0 %v2069
        %2250 = vmatpush1.bf16.msra.mxu0 %v2068
        %2251 = vmatprep.subr.bf16.mxu0 %v2073
        %2252 = vmatpush1.bf16.msra.mxu0 %v2072
        %2253 = vmatprep.subr.bf16.mxu0 %v2077
        %2254 = vmatpush1.bf16.msra.mxu0 %v2076
        %2255 = vmatprep.subr.bf16.mxu0 %v2081
        %2256 = vmatpush1.bf16.msra.mxu0 %v2080
        %2257 = vmatprep.subr.bf16.mxu0 %v2085
        %2258 = vmatpush1.bf16.msra.mxu0 %v2084
        %2259 = vmatprep.subr.bf16.mxu0 %v2089
        %2260 = vmatpush1.bf16.msra.mxu0 %v2088
        %2261 = vmatprep.subr.bf16.mxu0 %v2093
        %2262 = vmatpush1.bf16.msra.mxu0 %v2092
        %2263 = vmatprep.mubr.bf16.mxu0 %v1228
        %2264 = vmatmul.mubr.bf16.gmra.mrb[0].mxu0 %v1227
        %v2265 = vpop.f32.mrb[0].mxu0
        %v2266 = vadd.f32 %v1800, %v2265
        %v2267 = vpop.f32.mrb[0].mxu0
        %v2268 = vadd.f32 %v1802, %v2267
        %v2269 = vpop.f32.mrb[0].mxu0
        %v2270 = vadd.f32 %v1804, %v2269
        %v2271 = vpop.f32.mrb[0].mxu0
        %v2272 = vadd.f32 %v1806, %v2271
        %2273 = vmatprep.mubr.bf16.mxu0 %v1230
        %2274 = vmatmul.mubr.bf16.gmra.mrb[0].mxu0 %v1229
        %v2275 = vpop.f32.mrb[0].mxu0
        %v2276 = vadd.f32 %v1810, %v2275
        %v2277 = vpop.f32.mrb[0].mxu0
        %v2278 = vadd.f32 %v1812, %v2277
        %v2279 = vpop.f32.mrb[0].mxu0
        %v2280 = vadd.f32 %v1814, %v2279
        %v2281 = vpop.f32.mrb[0].mxu0
        %v2282 = vadd.f32 %v1816, %v2281
        %2283 = vmatprep.mubr.bf16.mxu0 %v1232
        %2284 = vmatmul.mubr.bf16.gmra.mrb[0].mxu0 %v1231
        %v2285 = vpop.f32.mrb[0].mxu0
        %v2286 = vadd.f32 %v1820, %v2285
        %v2287 = vpop.f32.mrb[0].mxu0
        %v2288 = vadd.f32 %v1822, %v2287
        %v2289 = vpop.f32.mrb[0].mxu0
        %v2290 = vadd.f32 %v1824, %v2289
        %v2291 = vpop.f32.mrb[0].mxu0
        %v2292 = vadd.f32 %v1826, %v2291
        %2293 = vmatprep.mubr.bf16.mxu0 %v1234
        %2294 = vmatmul.mubr.bf16.gmra.mrb[0].mxu0 %v1233
        %v2295 = vpop.f32.mrb[0].mxu0
        %v2296 = vadd.f32 %v1830, %v2295
        %v2297 = vpop.f32.mrb[0].mxu0
        %v2298 = vadd.f32 %v1832, %v2297
        %v2299 = vpop.f32.mrb[0].mxu0
        %v2300 = vadd.f32 %v1834, %v2299
        %v2301 = vpop.f32.mrb[0].mxu0
        %v2302 = vadd.f32 %v1836, %v2301
        %2303 = vdwg.mxu0
        %v2304 = vpack.c.bf16 %v1221, %v1219
        %v2305 = vpack.c.bf16 %v1222, %v1220
        %s2306 = scalar_lea.vmem %s3, 1024
        %v2307 = vld [vmem:[%s2306] sm:$0xff]
        %v2308 = vld [vmem:[%s2306 + $0x8] sm:$0xff]
        %v2309 = vld [vmem:[%s2306 + $0x10] sm:$0xff]
        %v2310 = vld [vmem:[%s2306 + $0x18] sm:$0xff]
        %v2311 = vld [vmem:[%s2306 + $0x20] sm:$0xff]
        %v2312 = vld [vmem:[%s2306 + $0x28] sm:$0xff]
        %v2313 = vld [vmem:[%s2306 + $0x30] sm:$0xff]
        %v2314 = vld [vmem:[%s2306 + $0x38] sm:$0xff]
        %v2315 = vld [vmem:[%s2306 + $0x40] sm:$0xff]
        %v2316 = vld [vmem:[%s2306 + $0x48] sm:$0xff]
        %v2317 = vld [vmem:[%s2306 + $0x50] sm:$0xff]
        %v2318 = vld [vmem:[%s2306 + $0x58] sm:$0xff]
        %v2319 = vld [vmem:[%s2306 + $0x60] sm:$0xff]
        %v2320 = vld [vmem:[%s2306 + $0x68] sm:$0xff]
        %v2321 = vld [vmem:[%s2306 + $0x70] sm:$0xff]
        %v2322 = vld [vmem:[%s2306 + $0x78] sm:$0xff]
        %v2323 = vld [vmem:[%s2306 + $0x80] sm:$0xff]
        %v2324 = vld [vmem:[%s2306 + $0x88] sm:$0xff]
        %v2325 = vld [vmem:[%s2306 + $0x90] sm:$0xff]
        %v2326 = vld [vmem:[%s2306 + $0x98] sm:$0xff]
        %v2327 = vld [vmem:[%s2306 + $0xa0] sm:$0xff]
        %v2328 = vld [vmem:[%s2306 + $0xa8] sm:$0xff]
        %v2329 = vld [vmem:[%s2306 + $0xb0] sm:$0xff]
        %v2330 = vld [vmem:[%s2306 + $0xb8] sm:$0xff]
        %v2331 = vld [vmem:[%s2306 + $0xc0] sm:$0xff]
        %v2332 = vld [vmem:[%s2306 + $0xc8] sm:$0xff]
        %v2333 = vld [vmem:[%s2306 + $0xd0] sm:$0xff]
        %v2334 = vld [vmem:[%s2306 + $0xd8] sm:$0xff]
        %v2335 = vld [vmem:[%s2306 + $0xe0] sm:$0xff]
        %v2336 = vld [vmem:[%s2306 + $0xe8] sm:$0xff]
        %v2337 = vld [vmem:[%s2306 + $0xf0] sm:$0xff]
        %v2338 = vld [vmem:[%s2306 + $0xf8] sm:$0xff]
        %v2339 = vld [vmem:[%s2306 + $0x100] sm:$0xff]
        %v2340 = vld [vmem:[%s2306 + $0x108] sm:$0xff]
        %v2341 = vld [vmem:[%s2306 + $0x110] sm:$0xff]
        %v2342 = vld [vmem:[%s2306 + $0x118] sm:$0xff]
        %v2343 = vld [vmem:[%s2306 + $0x120] sm:$0xff]
        %v2344 = vld [vmem:[%s2306 + $0x128] sm:$0xff]
        %v2345 = vld [vmem:[%s2306 + $0x130] sm:$0xff]
        %v2346 = vld [vmem:[%s2306 + $0x138] sm:$0xff]
        %v2347 = vld [vmem:[%s2306 + $0x140] sm:$0xff]
        %v2348 = vld [vmem:[%s2306 + $0x148] sm:$0xff]
        %v2349 = vld [vmem:[%s2306 + $0x150] sm:$0xff]
        %v2350 = vld [vmem:[%s2306 + $0x158] sm:$0xff]
        %v2351 = vld [vmem:[%s2306 + $0x160] sm:$0xff]
        %v2352 = vld [vmem:[%s2306 + $0x168] sm:$0xff]
        %v2353 = vld [vmem:[%s2306 + $0x170] sm:$0xff]
        %v2354 = vld [vmem:[%s2306 + $0x178] sm:$0xff]
        %v2355 = vld [vmem:[%s2306 + $0x180] sm:$0xff]
        %v2356 = vld [vmem:[%s2306 + $0x188] sm:$0xff]
        %v2357 = vld [vmem:[%s2306 + $0x190] sm:$0xff]
        %v2358 = vld [vmem:[%s2306 + $0x198] sm:$0xff]
        %v2359 = vld [vmem:[%s2306 + $0x1a0] sm:$0xff]
        %v2360 = vld [vmem:[%s2306 + $0x1a8] sm:$0xff]
        %v2361 = vld [vmem:[%s2306 + $0x1b0] sm:$0xff]
        %v2362 = vld [vmem:[%s2306 + $0x1b8] sm:$0xff]
        %v2363 = vld [vmem:[%s2306 + $0x1c0] sm:$0xff]
        %v2364 = vld [vmem:[%s2306 + $0x1c8] sm:$0xff]
        %v2365 = vld [vmem:[%s2306 + $0x1d0] sm:$0xff]
        %v2366 = vld [vmem:[%s2306 + $0x1d8] sm:$0xff]
        %v2367 = vld [vmem:[%s2306 + $0x1e0] sm:$0xff]
        %v2368 = vld [vmem:[%s2306 + $0x1e8] sm:$0xff]
        %v2369 = vld [vmem:[%s2306 + $0x1f0] sm:$0xff]
        %v2370 = vld [vmem:[%s2306 + $0x1f8] sm:$0xff]
        %v2435 = vunpack.c.l.b16 %v2307
        %v2436 = vunpack.c.h.b16 %v2307
        %v2437 = vunpack.c.l.b16 %v2308
        %v2438 = vunpack.c.h.b16 %v2308
        %v2439 = vunpack.c.l.b16 %v2309
        %v2440 = vunpack.c.h.b16 %v2309
        %v2441 = vunpack.c.l.b16 %v2310
        %v2442 = vunpack.c.h.b16 %v2310
        %v2443 = vunpack.c.l.b16 %v2311
        %v2444 = vunpack.c.h.b16 %v2311
        %v2445 = vunpack.c.l.b16 %v2312
        %v2446 = vunpack.c.h.b16 %v2312
        %v2447 = vunpack.c.l.b16 %v2313
        %v2448 = vunpack.c.h.b16 %v2313
        %v2449 = vunpack.c.l.b16 %v2314
        %v2450 = vunpack.c.h.b16 %v2314
        %v2451 = vunpack.c.l.b16 %v2315
        %v2452 = vunpack.c.h.b16 %v2315
        %v2453 = vunpack.c.l.b16 %v2316
        %v2454 = vunpack.c.h.b16 %v2316
        %v2455 = vunpack.c.l.b16 %v2317
        %v2456 = vunpack.c.h.b16 %v2317
        %v2457 = vunpack.c.l.b16 %v2318
        %v2458 = vunpack.c.h.b16 %v2318
        %v2459 = vunpack.c.l.b16 %v2319
        %v2460 = vunpack.c.h.b16 %v2319
        %v2461 = vunpack.c.l.b16 %v2320
        %v2462 = vunpack.c.h.b16 %v2320
        %v2463 = vunpack.c.l.b16 %v2321
        %v2464 = vunpack.c.h.b16 %v2321
        %v2465 = vunpack.c.l.b16 %v2322
        %v2466 = vunpack.c.h.b16 %v2322
        %v2467 = vunpack.c.l.b16 %v2323
        %v2468 = vunpack.c.h.b16 %v2323
        %v2469 = vunpack.c.l.b16 %v2324
        %v2470 = vunpack.c.h.b16 %v2324
        %v2471 = vunpack.c.l.b16 %v2325
        %v2472 = vunpack.c.h.b16 %v2325
        %v2473 = vunpack.c.l.b16 %v2326
        %v2474 = vunpack.c.h.b16 %v2326
        %v2475 = vunpack.c.l.b16 %v2327
        %v2476 = vunpack.c.h.b16 %v2327
        %v2477 = vunpack.c.l.b16 %v2328
        %v2478 = vunpack.c.h.b16 %v2328
        %v2479 = vunpack.c.l.b16 %v2329
        %v2480 = vunpack.c.h.b16 %v2329
        %v2481 = vunpack.c.l.b16 %v2330
        %v2482 = vunpack.c.h.b16 %v2330
        %v2483 = vunpack.c.l.b16 %v2331
        %v2484 = vunpack.c.h.b16 %v2331
        %v2485 = vunpack.c.l.b16 %v2332
        %v2486 = vunpack.c.h.b16 %v2332
        %v2487 = vunpack.c.l.b16 %v2333
        %v2488 = vunpack.c.h.b16 %v2333
        %v2489 = vunpack.c.l.b16 %v2334
        %v2490 = vunpack.c.h.b16 %v2334
        %v2491 = vunpack.c.l.b16 %v2335
        %v2492 = vunpack.c.h.b16 %v2335
        %v2493 = vunpack.c.l.b16 %v2336
        %v2494 = vunpack.c.h.b16 %v2336
        %v2495 = vunpack.c.l.b16 %v2337
        %v2496 = vunpack.c.h.b16 %v2337
        %v2497 = vunpack.c.l.b16 %v2338
        %v2498 = vunpack.c.h.b16 %v2338
        %v2499 = vunpack.c.l.b16 %v2339
        %v2500 = vunpack.c.h.b16 %v2339
        %v2501 = vunpack.c.l.b16 %v2340
        %v2502 = vunpack.c.h.b16 %v2340
        %v2503 = vunpack.c.l.b16 %v2341
        %v2504 = vunpack.c.h.b16 %v2341
        %v2505 = vunpack.c.l.b16 %v2342
        %v2506 = vunpack.c.h.b16 %v2342
        %v2507 = vunpack.c.l.b16 %v2343
        %v2508 = vunpack.c.h.b16 %v2343
        %v2509 = vunpack.c.l.b16 %v2344
        %v2510 = vunpack.c.h.b16 %v2344
        %v2511 = vunpack.c.l.b16 %v2345
        %v2512 = vunpack.c.h.b16 %v2345
        %v2513 = vunpack.c.l.b16 %v2346
        %v2514 = vunpack.c.h.b16 %v2346
        %v2515 = vunpack.c.l.b16 %v2347
        %v2516 = vunpack.c.h.b16 %v2347
        %v2517 = vunpack.c.l.b16 %v2348
        %v2518 = vunpack.c.h.b16 %v2348
        %v2519 = vunpack.c.l.b16 %v2349
        %v2520 = vunpack.c.h.b16 %v2349
        %v2521 = vunpack.c.l.b16 %v2350
        %v2522 = vunpack.c.h.b16 %v2350
        %v2523 = vunpack.c.l.b16 %v2351
        %v2524 = vunpack.c.h.b16 %v2351
        %v2525 = vunpack.c.l.b16 %v2352
        %v2526 = vunpack.c.h.b16 %v2352
        %v2527 = vunpack.c.l.b16 %v2353
        %v2528 = vunpack.c.h.b16 %v2353
        %v2529 = vunpack.c.l.b16 %v2354
        %v2530 = vunpack.c.h.b16 %v2354
        %v2531 = vunpack.c.l.b16 %v2355
        %v2532 = vunpack.c.h.b16 %v2355
        %v2533 = vunpack.c.l.b16 %v2356
        %v2534 = vunpack.c.h.b16 %v2356
        %v2535 = vunpack.c.l.b16 %v2357
        %v2536 = vunpack.c.h.b16 %v2357
        %v2537 = vunpack.c.l.b16 %v2358
        %v2538 = vunpack.c.h.b16 %v2358
        %v2539 = vunpack.c.l.b16 %v2359
        %v2540 = vunpack.c.h.b16 %v2359
        %v2541 = vunpack.c.l.b16 %v2360
        %v2542 = vunpack.c.h.b16 %v2360
        %v2543 = vunpack.c.l.b16 %v2361
        %v2544 = vunpack.c.h.b16 %v2361
        %v2545 = vunpack.c.l.b16 %v2362
        %v2546 = vunpack.c.h.b16 %v2362
        %v2547 = vunpack.c.l.b16 %v2363
        %v2548 = vunpack.c.h.b16 %v2363
        %v2549 = vunpack.c.l.b16 %v2364
        %v2550 = vunpack.c.h.b16 %v2364
        %v2551 = vunpack.c.l.b16 %v2365
        %v2552 = vunpack.c.h.b16 %v2365
        %v2553 = vunpack.c.l.b16 %v2366
        %v2554 = vunpack.c.h.b16 %v2366
        %v2555 = vunpack.c.l.b16 %v2367
        %v2556 = vunpack.c.h.b16 %v2367
        %v2557 = vunpack.c.l.b16 %v2368
        %v2558 = vunpack.c.h.b16 %v2368
        %v2559 = vunpack.c.l.b16 %v2369
        %v2560 = vunpack.c.h.b16 %v2369
        %v2561 = vunpack.c.l.b16 %v2370
        %v2562 = vunpack.c.h.b16 %v2370
        %v2563 = vpack.c.b16 %v2439, %v2435
        %v2564 = vpack.c.b16 %v2440, %v2436
        %v2565 = vpack.c.b16 %v2441, %v2437
        %v2566 = vpack.c.b16 %v2442, %v2438
        %v2567 = vpack.c.b16 %v2447, %v2443
        %v2568 = vpack.c.b16 %v2448, %v2444
        %v2569 = vpack.c.b16 %v2449, %v2445
        %v2570 = vpack.c.b16 %v2450, %v2446
        %v2571 = vpack.c.b16 %v2455, %v2451
        %v2572 = vpack.c.b16 %v2456, %v2452
        %v2573 = vpack.c.b16 %v2457, %v2453
        %v2574 = vpack.c.b16 %v2458, %v2454
        %v2575 = vpack.c.b16 %v2463, %v2459
        %v2576 = vpack.c.b16 %v2464, %v2460
        %v2577 = vpack.c.b16 %v2465, %v2461
        %v2578 = vpack.c.b16 %v2466, %v2462
        %v2579 = vpack.c.b16 %v2471, %v2467
        %v2580 = vpack.c.b16 %v2472, %v2468
        %v2581 = vpack.c.b16 %v2473, %v2469
        %v2582 = vpack.c.b16 %v2474, %v2470
        %v2583 = vpack.c.b16 %v2479, %v2475
        %v2584 = vpack.c.b16 %v2480, %v2476
        %v2585 = vpack.c.b16 %v2481, %v2477
        %v2586 = vpack.c.b16 %v2482, %v2478
        %v2587 = vpack.c.b16 %v2487, %v2483
        %v2588 = vpack.c.b16 %v2488, %v2484
        %v2589 = vpack.c.b16 %v2489, %v2485
        %v2590 = vpack.c.b16 %v2490, %v2486
        %v2591 = vpack.c.b16 %v2495, %v2491
        %v2592 = vpack.c.b16 %v2496, %v2492
        %v2593 = vpack.c.b16 %v2497, %v2493
        %v2594 = vpack.c.b16 %v2498, %v2494
        %v2595 = vpack.c.b16 %v2503, %v2499
        %v2596 = vpack.c.b16 %v2504, %v2500
        %v2597 = vpack.c.b16 %v2505, %v2501
        %v2598 = vpack.c.b16 %v2506, %v2502
        %v2599 = vpack.c.b16 %v2511, %v2507
        %v2600 = vpack.c.b16 %v2512, %v2508
        %v2601 = vpack.c.b16 %v2513, %v2509
        %v2602 = vpack.c.b16 %v2514, %v2510
        %v2603 = vpack.c.b16 %v2519, %v2515
        %v2604 = vpack.c.b16 %v2520, %v2516
        %v2605 = vpack.c.b16 %v2521, %v2517
        %v2606 = vpack.c.b16 %v2522, %v2518
        %v2607 = vpack.c.b16 %v2527, %v2523
        %v2608 = vpack.c.b16 %v2528, %v2524
        %v2609 = vpack.c.b16 %v2529, %v2525
        %v2610 = vpack.c.b16 %v2530, %v2526
        %v2611 = vpack.c.b16 %v2535, %v2531
        %v2612 = vpack.c.b16 %v2536, %v2532
        %v2613 = vpack.c.b16 %v2537, %v2533
        %v2614 = vpack.c.b16 %v2538, %v2534
        %v2615 = vpack.c.b16 %v2543, %v2539
        %v2616 = vpack.c.b16 %v2544, %v2540
        %v2617 = vpack.c.b16 %v2545, %v2541
        %v2618 = vpack.c.b16 %v2546, %v2542
        %v2619 = vpack.c.b16 %v2551, %v2547
        %v2620 = vpack.c.b16 %v2552, %v2548
        %v2621 = vpack.c.b16 %v2553, %v2549
        %v2622 = vpack.c.b16 %v2554, %v2550
        %v2623 = vpack.c.b16 %v2559, %v2555
        %v2624 = vpack.c.b16 %v2560, %v2556
        %v2625 = vpack.c.b16 %v2561, %v2557
        %v2626 = vpack.c.b16 %v2562, %v2558
        %2691 = vmatprep.subr.bf16.mxu0 %v2564
        %2692 = vmatpush1.bf16.msra.mxu0 %v2563
        %2693 = vmatprep.subr.bf16.mxu0 %v2568
        %2694 = vmatpush1.bf16.msra.mxu0 %v2567
        %2695 = vmatprep.subr.bf16.mxu0 %v2572
        %2696 = vmatpush1.bf16.msra.mxu0 %v2571
        %2697 = vmatprep.subr.bf16.mxu0 %v2576
        %2698 = vmatpush1.bf16.msra.mxu0 %v2575
        %2699 = vmatprep.subr.bf16.mxu0 %v2580
        %2700 = vmatpush1.bf16.msra.mxu0 %v2579
        %2701 = vmatprep.subr.bf16.mxu0 %v2584
        %2702 = vmatpush1.bf16.msra.mxu0 %v2583
        %2703 = vmatprep.subr.bf16.mxu0 %v2588
        %2704 = vmatpush1.bf16.msra.mxu0 %v2587
        %2705 = vmatprep.subr.bf16.mxu0 %v2592
        %2706 = vmatpush1.bf16.msra.mxu0 %v2591
        %2707 = vmatprep.subr.bf16.mxu0 %v2596
        %2708 = vmatpush1.bf16.msra.mxu0 %v2595
        %2709 = vmatprep.subr.bf16.mxu0 %v2600
        %2710 = vmatpush1.bf16.msra.mxu0 %v2599
        %2711 = vmatprep.subr.bf16.mxu0 %v2604
        %2712 = vmatpush1.bf16.msra.mxu0 %v2603
        %2713 = vmatprep.subr.bf16.mxu0 %v2608
        %2714 = vmatpush1.bf16.msra.mxu0 %v2607
        %2715 = vmatprep.subr.bf16.mxu0 %v2612
        %2716 = vmatpush1.bf16.msra.mxu0 %v2611
        %2717 = vmatprep.subr.bf16.mxu0 %v2616
        %2718 = vmatpush1.bf16.msra.mxu0 %v2615
        %2719 = vmatprep.subr.bf16.mxu0 %v2620
        %2720 = vmatpush1.bf16.msra.mxu0 %v2619
        %2721 = vmatprep.subr.bf16.mxu0 %v2624
        %2722 = vmatpush1.bf16.msra.mxu0 %v2623
        %2723 = vmatprep.mubr.bf16.mxu0 %v1230
        %2724 = vmatmul.mubr.bf16.gmra.mrb[0].mxu0 %v1229
        %v2725 = vpop.f32.mrb[0].mxu0
        %v2726 = vadd.f32 0.0, %v2725
        %v2727 = vpop.f32.mrb[0].mxu0
        %v2728 = vadd.f32 0.0, %v2727
        %v2729 = vpop.f32.mrb[0].mxu0
        %v2730 = vadd.f32 0.0, %v2729
        %v2731 = vpop.f32.mrb[0].mxu0
        %v2732 = vadd.f32 0.0, %v2731
        %2733 = vmatprep.mubr.bf16.mxu0 %v1232
        %2734 = vmatmul.mubr.bf16.gmra.mrb[0].mxu0 %v1231
        %v2735 = vpop.f32.mrb[0].mxu0
        %v2736 = vadd.f32 0.0, %v2735
        %v2737 = vpop.f32.mrb[0].mxu0
        %v2738 = vadd.f32 0.0, %v2737
        %v2739 = vpop.f32.mrb[0].mxu0
        %v2740 = vadd.f32 0.0, %v2739
        %v2741 = vpop.f32.mrb[0].mxu0
        %v2742 = vadd.f32 0.0, %v2741
        %2743 = vmatprep.mubr.bf16.mxu0 %v1234
        %2744 = vmatmul.mubr.bf16.gmra.mrb[0].mxu0 %v1233
        %v2745 = vpop.f32.mrb[0].mxu0
        %v2746 = vadd.f32 0.0, %v2745
        %v2747 = vpop.f32.mrb[0].mxu0
        %v2748 = vadd.f32 0.0, %v2747
        %v2749 = vpop.f32.mrb[0].mxu0
        %v2750 = vadd.f32 0.0, %v2749
        %v2751 = vpop.f32.mrb[0].mxu0
        %v2752 = vadd.f32 0.0, %v2751
        %2753 = vmatprep.mubr.bf16.mxu0 %v2305
        %2754 = vmatmul.mubr.bf16.gmra.mrb[0].mxu0 %v2304
        %v2755 = vpop.f32.mrb[0].mxu0
        %v2756 = vadd.f32 0.0, %v2755
        %v2757 = vpop.f32.mrb[0].mxu0
        %v2758 = vadd.f32 0.0, %v2757
        %v2759 = vpop.f32.mrb[0].mxu0
        %v2760 = vadd.f32 0.0, %v2759
        %v2761 = vpop.f32.mrb[0].mxu0
        %v2762 = vadd.f32 0.0, %v2761
        %2763 = vdwg.mxu0
        %2764 = vmatprep.subr.bf16.mxu0 %v2566
        %2765 = vmatpush1.bf16.msra.mxu0 %v2565
        %2766 = vmatprep.subr.bf16.mxu0 %v2570
        %2767 = vmatpush1.bf16.msra.mxu0 %v2569
        %2768 = vmatprep.subr.bf16.mxu0 %v2574
        %2769 = vmatpush1.bf16.msra.mxu0 %v2573
        %2770 = vmatprep.subr.bf16.mxu0 %v2578
        %2771 = vmatpush1.bf16.msra.mxu0 %v2577
        %2772 = vmatprep.subr.bf16.mxu0 %v2582
        %2773 = vmatpush1.bf16.msra.mxu0 %v2581
        %2774 = vmatprep.subr.bf16.mxu0 %v2586
        %2775 = vmatpush1.bf16.msra.mxu0 %v2585
        %2776 = vmatprep.subr.bf16.mxu0 %v2590
        %2777 = vmatpush1.bf16.msra.mxu0 %v2589
        %2778 = vmatprep.subr.bf16.mxu0 %v2594
        %2779 = vmatpush1.bf16.msra.mxu0 %v2593
        %2780 = vmatprep.subr.bf16.mxu0 %v2598
        %2781 = vmatpush1.bf16.msra.mxu0 %v2597
        %2782 = vmatprep.subr.bf16.mxu0 %v2602
        %2783 = vmatpush1.bf16.msra.mxu0 %v2601
        %2784 = vmatprep.subr.bf16.mxu0 %v2606
        %2785 = vmatpush1.bf16.msra.mxu0 %v2605
        %2786 = vmatprep.subr.bf16.mxu0 %v2610
        %2787 = vmatpush1.bf16.msra.mxu0 %v2609
        %2788 = vmatprep.subr.bf16.mxu0 %v2614
        %2789 = vmatpush1.bf16.msra.mxu0 %v2613
        %2790 = vmatprep.subr.bf16.mxu0 %v2618
        %2791 = vmatpush1.bf16.msra.mxu0 %v2617
        %2792 = vmatprep.subr.bf16.mxu0 %v2622
        %2793 = vmatpush1.bf16.msra.mxu0 %v2621
        %2794 = vmatprep.subr.bf16.mxu0 %v2626
        %2795 = vmatpush1.bf16.msra.mxu0 %v2625
        %2796 = vmatprep.mubr.bf16.mxu0 %v1230
        %2797 = vmatmul.mubr.bf16.gmra.mrb[0].mxu0 %v1229
        %v2798 = vpop.f32.mrb[0].mxu0
        %v2799 = vadd.f32 0.0, %v2798
        %v2800 = vpop.f32.mrb[0].mxu0
        %v2801 = vadd.f32 0.0, %v2800
        %v2802 = vpop.f32.mrb[0].mxu0
        %v2803 = vadd.f32 0.0, %v2802
        %v2804 = vpop.f32.mrb[0].mxu0
        %v2805 = vadd.f32 0.0, %v2804
        %2806 = vmatprep.mubr.bf16.mxu0 %v1232
        %2807 = vmatmul.mubr.bf16.gmra.mrb[0].mxu0 %v1231
        %v2808 = vpop.f32.mrb[0].mxu0
        %v2809 = vadd.f32 0.0, %v2808
        %v2810 = vpop.f32.mrb[0].mxu0
        %v2811 = vadd.f32 0.0, %v2810
        %v2812 = vpop.f32.mrb[0].mxu0
        %v2813 = vadd.f32 0.0, %v2812
        %v2814 = vpop.f32.mrb[0].mxu0
        %v2815 = vadd.f32 0.0, %v2814
        %2816 = vmatprep.mubr.bf16.mxu0 %v1234
        %2817 = vmatmul.mubr.bf16.gmra.mrb[0].mxu0 %v1233
        %v2818 = vpop.f32.mrb[0].mxu0
        %v2819 = vadd.f32 0.0, %v2818
        %v2820 = vpop.f32.mrb[0].mxu0
        %v2821 = vadd.f32 0.0, %v2820
        %v2822 = vpop.f32.mrb[0].mxu0
        %v2823 = vadd.f32 0.0, %v2822
        %v2824 = vpop.f32.mrb[0].mxu0
        %v2825 = vadd.f32 0.0, %v2824
        %2826 = vmatprep.mubr.bf16.mxu0 %v2305
        %2827 = vmatmul.mubr.bf16.gmra.mrb[0].mxu0 %v2304
        %v2828 = vpop.f32.mrb[0].mxu0
        %v2829 = vadd.f32 0.0, %v2828
        %v2830 = vpop.f32.mrb[0].mxu0
        %v2831 = vadd.f32 0.0, %v2830
        %v2832 = vpop.f32.mrb[0].mxu0
        %v2833 = vadd.f32 0.0, %v2832
        %v2834 = vpop.f32.mrb[0].mxu0
        %v2835 = vadd.f32 0.0, %v2834
        %2836 = vdwg.mxu0
        %v2837 = vadd.f32 %v2193, %v2726
        %v2838 = vadd.f32 %v2195, %v2728
        %v2839 = vadd.f32 %v2266, %v2799
        %v2840 = vadd.f32 %v2268, %v2801
        %v2841 = vadd.f32 %v2197, %v2730
        %v2842 = vadd.f32 %v2199, %v2732
        %v2843 = vadd.f32 %v2270, %v2803
        %v2844 = vadd.f32 %v2272, %v2805
        %v2845 = vadd.f32 %v2203, %v2736
        %v2846 = vadd.f32 %v2205, %v2738
        %v2847 = vadd.f32 %v2276, %v2809
        %v2848 = vadd.f32 %v2278, %v2811
        %v2849 = vadd.f32 %v2207, %v2740
        %v2850 = vadd.f32 %v2209, %v2742
        %v2851 = vadd.f32 %v2280, %v2813
        %v2852 = vadd.f32 %v2282, %v2815
        %v2853 = vadd.f32 %v2213, %v2746
        %v2854 = vadd.f32 %v2215, %v2748
        %v2855 = vadd.f32 %v2286, %v2819
        %v2856 = vadd.f32 %v2288, %v2821
        %v2857 = vadd.f32 %v2217, %v2750
        %v2858 = vadd.f32 %v2219, %v2752
        %v2859 = vadd.f32 %v2290, %v2823
        %v2860 = vadd.f32 %v2292, %v2825
        %v2861 = vadd.f32 %v2223, %v2756
        %v2862 = vadd.f32 %v2225, %v2758
        %v2863 = vadd.f32 %v2296, %v2829
        %v2864 = vadd.f32 %v2298, %v2831
        %v2865 = vadd.f32 %v2227, %v2760
        %v2866 = vadd.f32 %v2229, %v2762
        %v2867 = vadd.f32 %v2300, %v2833
        %v2868 = vadd.f32 %v2302, %v2835
        %v2869 = vpack.c.bf16 %v1223, %v1221
        %v2870 = vpack.c.bf16 %v1224, %v1222
        %s2871 = scalar_lea.vmem %s3, 1536
        %v2872 = vld [vmem:[%s2871] sm:$0xff]
        %v2873 = vld [vmem:[%s2871 + $0x8] sm:$0xff]
        %v2874 = vld [vmem:[%s2871 + $0x10] sm:$0xff]
        %v2875 = vld [vmem:[%s2871 + $0x18] sm:$0xff]
        %v2876 = vld [vmem:[%s2871 + $0x20] sm:$0xff]
        %v2877 = vld [vmem:[%s2871 + $0x28] sm:$0xff]
        %v2878 = vld [vmem:[%s2871 + $0x30] sm:$0xff]
        %v2879 = vld [vmem:[%s2871 + $0x38] sm:$0xff]
        %v2880 = vld [vmem:[%s2871 + $0x40] sm:$0xff]
        %v2881 = vld [vmem:[%s2871 + $0x48] sm:$0xff]
        %v2882 = vld [vmem:[%s2871 + $0x50] sm:$0xff]
        %v2883 = vld [vmem:[%s2871 + $0x58] sm:$0xff]
        %v2884 = vld [vmem:[%s2871 + $0x60] sm:$0xff]
        %v2885 = vld [vmem:[%s2871 + $0x68] sm:$0xff]
        %v2886 = vld [vmem:[%s2871 + $0x70] sm:$0xff]
        %v2887 = vld [vmem:[%s2871 + $0x78] sm:$0xff]
        %v2888 = vld [vmem:[%s2871 + $0x80] sm:$0xff]
        %v2889 = vld [vmem:[%s2871 + $0x88] sm:$0xff]
        %v2890 = vld [vmem:[%s2871 + $0x90] sm:$0xff]
        %v2891 = vld [vmem:[%s2871 + $0x98] sm:$0xff]
        %v2892 = vld [vmem:[%s2871 + $0xa0] sm:$0xff]
        %v2893 = vld [vmem:[%s2871 + $0xa8] sm:$0xff]
        %v2894 = vld [vmem:[%s2871 + $0xb0] sm:$0xff]
        %v2895 = vld [vmem:[%s2871 + $0xb8] sm:$0xff]
        %v2896 = vld [vmem:[%s2871 + $0xc0] sm:$0xff]
        %v2897 = vld [vmem:[%s2871 + $0xc8] sm:$0xff]
        %v2898 = vld [vmem:[%s2871 + $0xd0] sm:$0xff]
        %v2899 = vld [vmem:[%s2871 + $0xd8] sm:$0xff]
        %v2900 = vld [vmem:[%s2871 + $0xe0] sm:$0xff]
        %v2901 = vld [vmem:[%s2871 + $0xe8] sm:$0xff]
        %v2902 = vld [vmem:[%s2871 + $0xf0] sm:$0xff]
        %v2903 = vld [vmem:[%s2871 + $0xf8] sm:$0xff]
        %v2904 = vld [vmem:[%s2871 + $0x100] sm:$0xff]
        %v2905 = vld [vmem:[%s2871 + $0x108] sm:$0xff]
        %v2906 = vld [vmem:[%s2871 + $0x110] sm:$0xff]
        %v2907 = vld [vmem:[%s2871 + $0x118] sm:$0xff]
        %v2908 = vld [vmem:[%s2871 + $0x120] sm:$0xff]
        %v2909 = vld [vmem:[%s2871 + $0x128] sm:$0xff]
        %v2910 = vld [vmem:[%s2871 + $0x130] sm:$0xff]
        %v2911 = vld [vmem:[%s2871 + $0x138] sm:$0xff]
        %v2912 = vld [vmem:[%s2871 + $0x140] sm:$0xff]
        %v2913 = vld [vmem:[%s2871 + $0x148] sm:$0xff]
        %v2914 = vld [vmem:[%s2871 + $0x150] sm:$0xff]
        %v2915 = vld [vmem:[%s2871 + $0x158] sm:$0xff]
        %v2916 = vld [vmem:[%s2871 + $0x160] sm:$0xff]
        %v2917 = vld [vmem:[%s2871 + $0x168] sm:$0xff]
        %v2918 = vld [vmem:[%s2871 + $0x170] sm:$0xff]
        %v2919 = vld [vmem:[%s2871 + $0x178] sm:$0xff]
        %v2920 = vld [vmem:[%s2871 + $0x180] sm:$0xff]
        %v2921 = vld [vmem:[%s2871 + $0x188] sm:$0xff]
        %v2922 = vld [vmem:[%s2871 + $0x190] sm:$0xff]
        %v2923 = vld [vmem:[%s2871 + $0x198] sm:$0xff]
        %v2924 = vld [vmem:[%s2871 + $0x1a0] sm:$0xff]
        %v2925 = vld [vmem:[%s2871 + $0x1a8] sm:$0xff]
        %v2926 = vld [vmem:[%s2871 + $0x1b0] sm:$0xff]
        %v2927 = vld [vmem:[%s2871 + $0x1b8] sm:$0xff]
        %v2928 = vld [vmem:[%s2871 + $0x1c0] sm:$0xff]
        %v2929 = vld [vmem:[%s2871 + $0x1c8] sm:$0xff]
        %v2930 = vld [vmem:[%s2871 + $0x1d0] sm:$0xff]
        %v2931 = vld [vmem:[%s2871 + $0x1d8] sm:$0xff]
        %v2932 = vld [vmem:[%s2871 + $0x1e0] sm:$0xff]
        %v2933 = vld [vmem:[%s2871 + $0x1e8] sm:$0xff]
        %v2934 = vld [vmem:[%s2871 + $0x1f0] sm:$0xff]
        %v2935 = vld [vmem:[%s2871 + $0x1f8] sm:$0xff]
        %v3000 = vunpack.c.l.b16 %v2872
        %v3001 = vunpack.c.h.b16 %v2872
        %v3002 = vunpack.c.l.b16 %v2873
        %v3003 = vunpack.c.h.b16 %v2873
        %v3004 = vunpack.c.l.b16 %v2874
        %v3005 = vunpack.c.h.b16 %v2874
        %v3006 = vunpack.c.l.b16 %v2875
        %v3007 = vunpack.c.h.b16 %v2875
        %v3008 = vunpack.c.l.b16 %v2876
        %v3009 = vunpack.c.h.b16 %v2876
        %v3010 = vunpack.c.l.b16 %v2877
        %v3011 = vunpack.c.h.b16 %v2877
        %v3012 = vunpack.c.l.b16 %v2878
        %v3013 = vunpack.c.h.b16 %v2878
        %v3014 = vunpack.c.l.b16 %v2879
        %v3015 = vunpack.c.h.b16 %v2879
        %v3016 = vunpack.c.l.b16 %v2880
        %v3017 = vunpack.c.h.b16 %v2880
        %v3018 = vunpack.c.l.b16 %v2881
        %v3019 = vunpack.c.h.b16 %v2881
        %v3020 = vunpack.c.l.b16 %v2882
        %v3021 = vunpack.c.h.b16 %v2882
        %v3022 = vunpack.c.l.b16 %v2883
        %v3023 = vunpack.c.h.b16 %v2883
        %v3024 = vunpack.c.l.b16 %v2884
        %v3025 = vunpack.c.h.b16 %v2884
        %v3026 = vunpack.c.l.b16 %v2885
        %v3027 = vunpack.c.h.b16 %v2885
        %v3028 = vunpack.c.l.b16 %v2886
        %v3029 = vunpack.c.h.b16 %v2886
        %v3030 = vunpack.c.l.b16 %v2887
        %v3031 = vunpack.c.h.b16 %v2887
        %v3032 = vunpack.c.l.b16 %v2888
        %v3033 = vunpack.c.h.b16 %v2888
        %v3034 = vunpack.c.l.b16 %v2889
        %v3035 = vunpack.c.h.b16 %v2889
        %v3036 = vunpack.c.l.b16 %v2890
        %v3037 = vunpack.c.h.b16 %v2890
        %v3038 = vunpack.c.l.b16 %v2891
        %v3039 = vunpack.c.h.b16 %v2891
        %v3040 = vunpack.c.l.b16 %v2892
        %v3041 = vunpack.c.h.b16 %v2892
        %v3042 = vunpack.c.l.b16 %v2893
        %v3043 = vunpack.c.h.b16 %v2893
        %v3044 = vunpack.c.l.b16 %v2894
        %v3045 = vunpack.c.h.b16 %v2894
        %v3046 = vunpack.c.l.b16 %v2895
        %v3047 = vunpack.c.h.b16 %v2895
        %v3048 = vunpack.c.l.b16 %v2896
        %v3049 = vunpack.c.h.b16 %v2896
        %v3050 = vunpack.c.l.b16 %v2897
        %v3051 = vunpack.c.h.b16 %v2897
        %v3052 = vunpack.c.l.b16 %v2898
        %v3053 = vunpack.c.h.b16 %v2898
        %v3054 = vunpack.c.l.b16 %v2899
        %v3055 = vunpack.c.h.b16 %v2899
        %v3056 = vunpack.c.l.b16 %v2900
        %v3057 = vunpack.c.h.b16 %v2900
        %v3058 = vunpack.c.l.b16 %v2901
        %v3059 = vunpack.c.h.b16 %v2901
        %v3060 = vunpack.c.l.b16 %v2902
        %v3061 = vunpack.c.h.b16 %v2902
        %v3062 = vunpack.c.l.b16 %v2903
        %v3063 = vunpack.c.h.b16 %v2903
        %v3064 = vunpack.c.l.b16 %v2904
        %v3065 = vunpack.c.h.b16 %v2904
        %v3066 = vunpack.c.l.b16 %v2905
        %v3067 = vunpack.c.h.b16 %v2905
        %v3068 = vunpack.c.l.b16 %v2906
        %v3069 = vunpack.c.h.b16 %v2906
        %v3070 = vunpack.c.l.b16 %v2907
        %v3071 = vunpack.c.h.b16 %v2907
        %v3072 = vunpack.c.l.b16 %v2908
        %v3073 = vunpack.c.h.b16 %v2908
        %v3074 = vunpack.c.l.b16 %v2909
        %v3075 = vunpack.c.h.b16 %v2909
        %v3076 = vunpack.c.l.b16 %v2910
        %v3077 = vunpack.c.h.b16 %v2910
        %v3078 = vunpack.c.l.b16 %v2911
        %v3079 = vunpack.c.h.b16 %v2911
        %v3080 = vunpack.c.l.b16 %v2912
        %v3081 = vunpack.c.h.b16 %v2912
        %v3082 = vunpack.c.l.b16 %v2913
        %v3083 = vunpack.c.h.b16 %v2913
        %v3084 = vunpack.c.l.b16 %v2914
        %v3085 = vunpack.c.h.b16 %v2914
        %v3086 = vunpack.c.l.b16 %v2915
        %v3087 = vunpack.c.h.b16 %v2915
        %v3088 = vunpack.c.l.b16 %v2916
        %v3089 = vunpack.c.h.b16 %v2916
        %v3090 = vunpack.c.l.b16 %v2917
        %v3091 = vunpack.c.h.b16 %v2917
        %v3092 = vunpack.c.l.b16 %v2918
        %v3093 = vunpack.c.h.b16 %v2918
        %v3094 = vunpack.c.l.b16 %v2919
        %v3095 = vunpack.c.h.b16 %v2919
        %v3096 = vunpack.c.l.b16 %v2920
        %v3097 = vunpack.c.h.b16 %v2920
        %v3098 = vunpack.c.l.b16 %v2921
        %v3099 = vunpack.c.h.b16 %v2921
        %v3100 = vunpack.c.l.b16 %v2922
        %v3101 = vunpack.c.h.b16 %v2922
        %v3102 = vunpack.c.l.b16 %v2923
        %v3103 = vunpack.c.h.b16 %v2923
        %v3104 = vunpack.c.l.b16 %v2924
        %v3105 = vunpack.c.h.b16 %v2924
        %v3106 = vunpack.c.l.b16 %v2925
        %v3107 = vunpack.c.h.b16 %v2925
        %v3108 = vunpack.c.l.b16 %v2926
        %v3109 = vunpack.c.h.b16 %v2926
        %v3110 = vunpack.c.l.b16 %v2927
        %v3111 = vunpack.c.h.b16 %v2927
        %v3112 = vunpack.c.l.b16 %v2928
        %v3113 = vunpack.c.h.b16 %v2928
        %v3114 = vunpack.c.l.b16 %v2929
        %v3115 = vunpack.c.h.b16 %v2929
        %v3116 = vunpack.c.l.b16 %v2930
        %v3117 = vunpack.c.h.b16 %v2930
        %v3118 = vunpack.c.l.b16 %v2931
        %v3119 = vunpack.c.h.b16 %v2931
        %v3120 = vunpack.c.l.b16 %v2932
        %v3121 = vunpack.c.h.b16 %v2932
        %v3122 = vunpack.c.l.b16 %v2933
        %v3123 = vunpack.c.h.b16 %v2933
        %v3124 = vunpack.c.l.b16 %v2934
        %v3125 = vunpack.c.h.b16 %v2934
        %v3126 = vunpack.c.l.b16 %v2935
        %v3127 = vunpack.c.h.b16 %v2935
        %v3128 = vpack.c.b16 %v3004, %v3000
        %v3129 = vpack.c.b16 %v3005, %v3001
        %v3130 = vpack.c.b16 %v3006, %v3002
        %v3131 = vpack.c.b16 %v3007, %v3003
        %v3132 = vpack.c.b16 %v3012, %v3008
        %v3133 = vpack.c.b16 %v3013, %v3009
        %v3134 = vpack.c.b16 %v3014, %v3010
        %v3135 = vpack.c.b16 %v3015, %v3011
        %v3136 = vpack.c.b16 %v3020, %v3016
        %v3137 = vpack.c.b16 %v3021, %v3017
        %v3138 = vpack.c.b16 %v3022, %v3018
        %v3139 = vpack.c.b16 %v3023, %v3019
        %v3140 = vpack.c.b16 %v3028, %v3024
        %v3141 = vpack.c.b16 %v3029, %v3025
        %v3142 = vpack.c.b16 %v3030, %v3026
        %v3143 = vpack.c.b16 %v3031, %v3027
        %v3144 = vpack.c.b16 %v3036, %v3032
        %v3145 = vpack.c.b16 %v3037, %v3033
        %v3146 = vpack.c.b16 %v3038, %v3034
        %v3147 = vpack.c.b16 %v3039, %v3035
        %v3148 = vpack.c.b16 %v3044, %v3040
        %v3149 = vpack.c.b16 %v3045, %v3041
        %v3150 = vpack.c.b16 %v3046, %v3042
        %v3151 = vpack.c.b16 %v3047, %v3043
        %v3152 = vpack.c.b16 %v3052, %v3048
        %v3153 = vpack.c.b16 %v3053, %v3049
        %v3154 = vpack.c.b16 %v3054, %v3050
        %v3155 = vpack.c.b16 %v3055, %v3051
        %v3156 = vpack.c.b16 %v3060, %v3056
        %v3157 = vpack.c.b16 %v3061, %v3057
        %v3158 = vpack.c.b16 %v3062, %v3058
        %v3159 = vpack.c.b16 %v3063, %v3059
        %v3160 = vpack.c.b16 %v3068, %v3064
        %v3161 = vpack.c.b16 %v3069, %v3065
        %v3162 = vpack.c.b16 %v3070, %v3066
        %v3163 = vpack.c.b16 %v3071, %v3067
        %v3164 = vpack.c.b16 %v3076, %v3072
        %v3165 = vpack.c.b16 %v3077, %v3073
        %v3166 = vpack.c.b16 %v3078, %v3074
        %v3167 = vpack.c.b16 %v3079, %v3075
        %v3168 = vpack.c.b16 %v3084, %v3080
        %v3169 = vpack.c.b16 %v3085, %v3081
        %v3170 = vpack.c.b16 %v3086, %v3082
        %v3171 = vpack.c.b16 %v3087, %v3083
        %v3172 = vpack.c.b16 %v3092, %v3088
        %v3173 = vpack.c.b16 %v3093, %v3089
        %v3174 = vpack.c.b16 %v3094, %v3090
        %v3175 = vpack.c.b16 %v3095, %v3091
        %v3176 = vpack.c.b16 %v3100, %v3096
        %v3177 = vpack.c.b16 %v3101, %v3097
        %v3178 = vpack.c.b16 %v3102, %v3098
        %v3179 = vpack.c.b16 %v3103, %v3099
        %v3180 = vpack.c.b16 %v3108, %v3104
        %v3181 = vpack.c.b16 %v3109, %v3105
        %v3182 = vpack.c.b16 %v3110, %v3106
        %v3183 = vpack.c.b16 %v3111, %v3107
        %v3184 = vpack.c.b16 %v3116, %v3112
        %v3185 = vpack.c.b16 %v3117, %v3113
        %v3186 = vpack.c.b16 %v3118, %v3114
        %v3187 = vpack.c.b16 %v3119, %v3115
        %v3188 = vpack.c.b16 %v3124, %v3120
        %v3189 = vpack.c.b16 %v3125, %v3121
        %v3190 = vpack.c.b16 %v3126, %v3122
        %v3191 = vpack.c.b16 %v3127, %v3123
        %3256 = vmatprep.subr.bf16.mxu0 %v3129
        %3257 = vmatpush1.bf16.msra.mxu0 %v3128
        %3258 = vmatprep.subr.bf16.mxu0 %v3133
        %3259 = vmatpush1.bf16.msra.mxu0 %v3132
        %3260 = vmatprep.subr.bf16.mxu0 %v3137
        %3261 = vmatpush1.bf16.msra.mxu0 %v3136
        %3262 = vmatprep.subr.bf16.mxu0 %v3141
        %3263 = vmatpush1.bf16.msra.mxu0 %v3140
        %3264 = vmatprep.subr.bf16.mxu0 %v3145
        %3265 = vmatpush1.bf16.msra.mxu0 %v3144
        %3266 = vmatprep.subr.bf16.mxu0 %v3149
        %3267 = vmatpush1.bf16.msra.mxu0 %v3148
        %3268 = vmatprep.subr.bf16.mxu0 %v3153
        %3269 = vmatpush1.bf16.msra.mxu0 %v3152
        %3270 = vmatprep.subr.bf16.mxu0 %v3157
        %3271 = vmatpush1.bf16.msra.mxu0 %v3156
        %3272 = vmatprep.subr.bf16.mxu0 %v3161
        %3273 = vmatpush1.bf16.msra.mxu0 %v3160
        %3274 = vmatprep.subr.bf16.mxu0 %v3165
        %3275 = vmatpush1.bf16.msra.mxu0 %v3164
        %3276 = vmatprep.subr.bf16.mxu0 %v3169
        %3277 = vmatpush1.bf16.msra.mxu0 %v3168
        %3278 = vmatprep.subr.bf16.mxu0 %v3173
        %3279 = vmatpush1.bf16.msra.mxu0 %v3172
        %3280 = vmatprep.subr.bf16.mxu0 %v3177
        %3281 = vmatpush1.bf16.msra.mxu0 %v3176
        %3282 = vmatprep.subr.bf16.mxu0 %v3181
        %3283 = vmatpush1.bf16.msra.mxu0 %v3180
        %3284 = vmatprep.subr.bf16.mxu0 %v3185
        %3285 = vmatpush1.bf16.msra.mxu0 %v3184
        %3286 = vmatprep.subr.bf16.mxu0 %v3189
        %3287 = vmatpush1.bf16.msra.mxu0 %v3188
        %3288 = vmatprep.mubr.bf16.mxu0 %v1302
        %3289 = vmatmul.mubr.bf16.gmra.mrb[0].mxu0 %v1301
        %v3290 = vpop.f32.mrb[0].mxu0
        %v3291 = vadd.f32 0.0, %v3290
        %v3292 = vpop.f32.mrb[0].mxu0
        %v3293 = vadd.f32 0.0, %v3292
        %v3294 = vpop.f32.mrb[0].mxu0
        %v3295 = vadd.f32 0.0, %v3294
        %v3296 = vpop.f32.mrb[0].mxu0
        %v3297 = vadd.f32 0.0, %v3296
        %3298 = vmatprep.mubr.bf16.mxu0 %v1304
        %3299 = vmatmul.mubr.bf16.gmra.mrb[0].mxu0 %v1303
        %v3300 = vpop.f32.mrb[0].mxu0
        %v3301 = vadd.f32 0.0, %v3300
        %v3302 = vpop.f32.mrb[0].mxu0
        %v3303 = vadd.f32 0.0, %v3302
        %v3304 = vpop.f32.mrb[0].mxu0
        %v3305 = vadd.f32 0.0, %v3304
        %v3306 = vpop.f32.mrb[0].mxu0
        %v3307 = vadd.f32 0.0, %v3306
        %3308 = vmatprep.mubr.bf16.mxu0 %v1306
        %3309 = vmatmul.mubr.bf16.gmra.mrb[0].mxu0 %v1305
        %v3310 = vpop.f32.mrb[0].mxu0
        %v3311 = vadd.f32 0.0, %v3310
        %v3312 = vpop.f32.mrb[0].mxu0
        %v3313 = vadd.f32 0.0, %v3312
        %v3314 = vpop.f32.mrb[0].mxu0
        %v3315 = vadd.f32 0.0, %v3314
        %v3316 = vpop.f32.mrb[0].mxu0
        %v3317 = vadd.f32 0.0, %v3316
        %3318 = vmatprep.mubr.bf16.mxu0 %v2870
        %3319 = vmatmul.mubr.bf16.gmra.mrb[0].mxu0 %v2869
        %v3320 = vpop.f32.mrb[0].mxu0
        %v3321 = vadd.f32 0.0, %v3320
        %v3322 = vpop.f32.mrb[0].mxu0
        %v3323 = vadd.f32 0.0, %v3322
        %v3324 = vpop.f32.mrb[0].mxu0
        %v3325 = vadd.f32 0.0, %v3324
        %v3326 = vpop.f32.mrb[0].mxu0
        %v3327 = vadd.f32 0.0, %v3326
        %3328 = vdwg.mxu0
        %3329 = vmatprep.subr.bf16.mxu0 %v3131
        %3330 = vmatpush1.bf16.msra.mxu0 %v3130
        %3331 = vmatprep.subr.bf16.mxu0 %v3135
        %3332 = vmatpush1.bf16.msra.mxu0 %v3134
        %3333 = vmatprep.subr.bf16.mxu0 %v3139
        %3334 = vmatpush1.bf16.msra.mxu0 %v3138
        %3335 = vmatprep.subr.bf16.mxu0 %v3143
        %3336 = vmatpush1.bf16.msra.mxu0 %v3142
        %3337 = vmatprep.subr.bf16.mxu0 %v3147
        %3338 = vmatpush1.bf16.msra.mxu0 %v3146
        %3339 = vmatprep.subr.bf16.mxu0 %v3151
        %3340 = vmatpush1.bf16.msra.mxu0 %v3150
        %3341 = vmatprep.subr.bf16.mxu0 %v3155
        %3342 = vmatpush1.bf16.msra.mxu0 %v3154
        %3343 = vmatprep.subr.bf16.mxu0 %v3159
        %3344 = vmatpush1.bf16.msra.mxu0 %v3158
        %3345 = vmatprep.subr.bf16.mxu0 %v3163
        %3346 = vmatpush1.bf16.msra.mxu0 %v3162
        %3347 = vmatprep.subr.bf16.mxu0 %v3167
        %3348 = vmatpush1.bf16.msra.mxu0 %v3166
        %3349 = vmatprep.subr.bf16.mxu0 %v3171
        %3350 = vmatpush1.bf16.msra.mxu0 %v3170
        %3351 = vmatprep.subr.bf16.mxu0 %v3175
        %3352 = vmatpush1.bf16.msra.mxu0 %v3174
        %3353 = vmatprep.subr.bf16.mxu0 %v3179
        %3354 = vmatpush1.bf16.msra.mxu0 %v3178
        %3355 = vmatprep.subr.bf16.mxu0 %v3183
        %3356 = vmatpush1.bf16.msra.mxu0 %v3182
        %3357 = vmatprep.subr.bf16.mxu0 %v3187
        %3358 = vmatpush1.bf16.msra.mxu0 %v3186
        %3359 = vmatprep.subr.bf16.mxu0 %v3191
        %3360 = vmatpush1.bf16.msra.mxu0 %v3190
        %3361 = vmatprep.mubr.bf16.mxu0 %v1302
        %3362 = vmatmul.mubr.bf16.gmra.mrb[0].mxu0 %v1301
        %v3363 = vpop.f32.mrb[0].mxu0
        %v3364 = vadd.f32 0.0, %v3363
        %v3365 = vpop.f32.mrb[0].mxu0
        %v3366 = vadd.f32 0.0, %v3365
        %v3367 = vpop.f32.mrb[0].mxu0
        %v3368 = vadd.f32 0.0, %v3367
        %v3369 = vpop.f32.mrb[0].mxu0
        %v3370 = vadd.f32 0.0, %v3369
        %3371 = vmatprep.mubr.bf16.mxu0 %v1304
        %3372 = vmatmul.mubr.bf16.gmra.mrb[0].mxu0 %v1303
        %v3373 = vpop.f32.mrb[0].mxu0
        %v3374 = vadd.f32 0.0, %v3373
        %v3375 = vpop.f32.mrb[0].mxu0
        %v3376 = vadd.f32 0.0, %v3375
        %v3377 = vpop.f32.mrb[0].mxu0
        %v3378 = vadd.f32 0.0, %v3377
        %v3379 = vpop.f32.mrb[0].mxu0
        %v3380 = vadd.f32 0.0, %v3379
        %3381 = vmatprep.mubr.bf16.mxu0 %v1306
        %3382 = vmatmul.mubr.bf16.gmra.mrb[0].mxu0 %v1305
        %v3383 = vpop.f32.mrb[0].mxu0
        %v3384 = vadd.f32 0.0, %v3383
        %v3385 = vpop.f32.mrb[0].mxu0
        %v3386 = vadd.f32 0.0, %v3385
        %v3387 = vpop.f32.mrb[0].mxu0
        %v3388 = vadd.f32 0.0, %v3387
        %v3389 = vpop.f32.mrb[0].mxu0
        %v3390 = vadd.f32 0.0, %v3389
        %3391 = vmatprep.mubr.bf16.mxu0 %v2870
        %3392 = vmatmul.mubr.bf16.gmra.mrb[0].mxu0 %v2869
        %v3393 = vpop.f32.mrb[0].mxu0
        %v3394 = vadd.f32 0.0, %v3393
        %v3395 = vpop.f32.mrb[0].mxu0
        %v3396 = vadd.f32 0.0, %v3395
        %v3397 = vpop.f32.mrb[0].mxu0
        %v3398 = vadd.f32 0.0, %v3397
        %v3399 = vpop.f32.mrb[0].mxu0
        %v3400 = vadd.f32 0.0, %v3399
        %3401 = vdwg.mxu0
        %v3402 = vadd.f32 %v2837, %v3291
        %v3403 = vadd.f32 %v2838, %v3293
        %v3404 = vadd.f32 %v2839, %v3364
        %v3405 = vadd.f32 %v2840, %v3366
        %v3406 = vadd.f32 %v2841, %v3295
        %v3407 = vadd.f32 %v2842, %v3297
        %v3408 = vadd.f32 %v2843, %v3368
        %v3409 = vadd.f32 %v2844, %v3370
        %v3410 = vadd.f32 %v2845, %v3301
        %v3411 = vadd.f32 %v2846, %v3303
        %v3412 = vadd.f32 %v2847, %v3374
        %v3413 = vadd.f32 %v2848, %v3376
        %v3414 = vadd.f32 %v2849, %v3305
        %v3415 = vadd.f32 %v2850, %v3307
        %v3416 = vadd.f32 %v2851, %v3378
        %v3417 = vadd.f32 %v2852, %v3380
        %v3418 = vadd.f32 %v2853, %v3311
        %v3419 = vadd.f32 %v2854, %v3313
        %v3420 = vadd.f32 %v2855, %v3384
        %v3421 = vadd.f32 %v2856, %v3386
        %v3422 = vadd.f32 %v2857, %v3315
        %v3423 = vadd.f32 %v2858, %v3317
        %v3424 = vadd.f32 %v2859, %v3388
        %v3425 = vadd.f32 %v2860, %v3390
        %v3426 = vadd.f32 %v2861, %v3321
        %v3427 = vadd.f32 %v2862, %v3323
        %v3428 = vadd.f32 %v2863, %v3394
        %v3429 = vadd.f32 %v2864, %v3396
        %v3430 = vadd.f32 %v2865, %v3325
        %v3431 = vadd.f32 %v2866, %v3327
        %v3432 = vadd.f32 %v2867, %v3398
        %v3433 = vadd.f32 %v2868, %v3400
        %v3434 = vpack.c.bf16 %v1225, %v1223
        %v3435 = vpack.c.bf16 %v1226, %v1224
        %s3436 = scalar_lea.vmem %s3, 2048
        %v3437 = vld [vmem:[%s3436] sm:$0xff]
        %v3438 = vld [vmem:[%s3436 + $0x8] sm:$0xff]
        %v3439 = vld [vmem:[%s3436 + $0x10] sm:$0xff]
        %v3440 = vld [vmem:[%s3436 + $0x18] sm:$0xff]
        %v3441 = vld [vmem:[%s3436 + $0x20] sm:$0xff]
        %v3442 = vld [vmem:[%s3436 + $0x28] sm:$0xff]
        %v3443 = vld [vmem:[%s3436 + $0x30] sm:$0xff]
        %v3444 = vld [vmem:[%s3436 + $0x38] sm:$0xff]
        %v3445 = vld [vmem:[%s3436 + $0x40] sm:$0xff]
        %v3446 = vld [vmem:[%s3436 + $0x48] sm:$0xff]
        %v3447 = vld [vmem:[%s3436 + $0x50] sm:$0xff]
        %v3448 = vld [vmem:[%s3436 + $0x58] sm:$0xff]
        %v3449 = vld [vmem:[%s3436 + $0x60] sm:$0xff]
        %v3450 = vld [vmem:[%s3436 + $0x68] sm:$0xff]
        %v3451 = vld [vmem:[%s3436 + $0x70] sm:$0xff]
        %v3452 = vld [vmem:[%s3436 + $0x78] sm:$0xff]
        %v3453 = vld [vmem:[%s3436 + $0x80] sm:$0xff]
        %v3454 = vld [vmem:[%s3436 + $0x88] sm:$0xff]
        %v3455 = vld [vmem:[%s3436 + $0x90] sm:$0xff]
        %v3456 = vld [vmem:[%s3436 + $0x98] sm:$0xff]
        %v3457 = vld [vmem:[%s3436 + $0xa0] sm:$0xff]
        %v3458 = vld [vmem:[%s3436 + $0xa8] sm:$0xff]
        %v3459 = vld [vmem:[%s3436 + $0xb0] sm:$0xff]
        %v3460 = vld [vmem:[%s3436 + $0xb8] sm:$0xff]
        %v3461 = vld [vmem:[%s3436 + $0xc0] sm:$0xff]
        %v3462 = vld [vmem:[%s3436 + $0xc8] sm:$0xff]
        %v3463 = vld [vmem:[%s3436 + $0xd0] sm:$0xff]
        %v3464 = vld [vmem:[%s3436 + $0xd8] sm:$0xff]
        %v3465 = vld [vmem:[%s3436 + $0xe0] sm:$0xff]
        %v3466 = vld [vmem:[%s3436 + $0xe8] sm:$0xff]
        %v3467 = vld [vmem:[%s3436 + $0xf0] sm:$0xff]
        %v3468 = vld [vmem:[%s3436 + $0xf8] sm:$0xff]
        %v3469 = vld [vmem:[%s3436 + $0x100] sm:$0xff]
        %v3470 = vld [vmem:[%s3436 + $0x108] sm:$0xff]
        %v3471 = vld [vmem:[%s3436 + $0x110] sm:$0xff]
        %v3472 = vld [vmem:[%s3436 + $0x118] sm:$0xff]
        %v3473 = vld [vmem:[%s3436 + $0x120] sm:$0xff]
        %v3474 = vld [vmem:[%s3436 + $0x128] sm:$0xff]
        %v3475 = vld [vmem:[%s3436 + $0x130] sm:$0xff]
        %v3476 = vld [vmem:[%s3436 + $0x138] sm:$0xff]
        %v3477 = vld [vmem:[%s3436 + $0x140] sm:$0xff]
        %v3478 = vld [vmem:[%s3436 + $0x148] sm:$0xff]
        %v3479 = vld [vmem:[%s3436 + $0x150] sm:$0xff]
        %v3480 = vld [vmem:[%s3436 + $0x158] sm:$0xff]
        %v3481 = vld [vmem:[%s3436 + $0x160] sm:$0xff]
        %v3482 = vld [vmem:[%s3436 + $0x168] sm:$0xff]
        %v3483 = vld [vmem:[%s3436 + $0x170] sm:$0xff]
        %v3484 = vld [vmem:[%s3436 + $0x178] sm:$0xff]
        %v3485 = vld [vmem:[%s3436 + $0x180] sm:$0xff]
        %v3486 = vld [vmem:[%s3436 + $0x188] sm:$0xff]
        %v3487 = vld [vmem:[%s3436 + $0x190] sm:$0xff]
        %v3488 = vld [vmem:[%s3436 + $0x198] sm:$0xff]
        %v3489 = vld [vmem:[%s3436 + $0x1a0] sm:$0xff]
        %v3490 = vld [vmem:[%s3436 + $0x1a8] sm:$0xff]
        %v3491 = vld [vmem:[%s3436 + $0x1b0] sm:$0xff]
        %v3492 = vld [vmem:[%s3436 + $0x1b8] sm:$0xff]
        %v3493 = vld [vmem:[%s3436 + $0x1c0] sm:$0xff]
        %v3494 = vld [vmem:[%s3436 + $0x1c8] sm:$0xff]
        %v3495 = vld [vmem:[%s3436 + $0x1d0] sm:$0xff]
        %v3496 = vld [vmem:[%s3436 + $0x1d8] sm:$0xff]
        %v3497 = vld [vmem:[%s3436 + $0x1e0] sm:$0xff]
        %v3498 = vld [vmem:[%s3436 + $0x1e8] sm:$0xff]
        %v3499 = vld [vmem:[%s3436 + $0x1f0] sm:$0xff]
        %v3500 = vld [vmem:[%s3436 + $0x1f8] sm:$0xff]
        %v3565 = vunpack.c.l.b16 %v3437
        %v3566 = vunpack.c.h.b16 %v3437
        %v3567 = vunpack.c.l.b16 %v3438
        %v3568 = vunpack.c.h.b16 %v3438
        %v3569 = vunpack.c.l.b16 %v3439
        %v3570 = vunpack.c.h.b16 %v3439
        %v3571 = vunpack.c.l.b16 %v3440
        %v3572 = vunpack.c.h.b16 %v3440
        %v3573 = vunpack.c.l.b16 %v3441
        %v3574 = vunpack.c.h.b16 %v3441
        %v3575 = vunpack.c.l.b16 %v3442
        %v3576 = vunpack.c.h.b16 %v3442
        %v3577 = vunpack.c.l.b16 %v3443
        %v3578 = vunpack.c.h.b16 %v3443
        %v3579 = vunpack.c.l.b16 %v3444
        %v3580 = vunpack.c.h.b16 %v3444
        %v3581 = vunpack.c.l.b16 %v3445
        %v3582 = vunpack.c.h.b16 %v3445
        %v3583 = vunpack.c.l.b16 %v3446
        %v3584 = vunpack.c.h.b16 %v3446
        %v3585 = vunpack.c.l.b16 %v3447
        %v3586 = vunpack.c.h.b16 %v3447
        %v3587 = vunpack.c.l.b16 %v3448
        %v3588 = vunpack.c.h.b16 %v3448
        %v3589 = vunpack.c.l.b16 %v3449
        %v3590 = vunpack.c.h.b16 %v3449
        %v3591 = vunpack.c.l.b16 %v3450
        %v3592 = vunpack.c.h.b16 %v3450
        %v3593 = vunpack.c.l.b16 %v3451
        %v3594 = vunpack.c.h.b16 %v3451
        %v3595 = vunpack.c.l.b16 %v3452
        %v3596 = vunpack.c.h.b16 %v3452
        %v3597 = vunpack.c.l.b16 %v3453
        %v3598 = vunpack.c.h.b16 %v3453
        %v3599 = vunpack.c.l.b16 %v3454
        %v3600 = vunpack.c.h.b16 %v3454
        %v3601 = vunpack.c.l.b16 %v3455
        %v3602 = vunpack.c.h.b16 %v3455
        %v3603 = vunpack.c.l.b16 %v3456
        %v3604 = vunpack.c.h.b16 %v3456
        %v3605 = vunpack.c.l.b16 %v3457
        %v3606 = vunpack.c.h.b16 %v3457
        %v3607 = vunpack.c.l.b16 %v3458
        %v3608 = vunpack.c.h.b16 %v3458
        %v3609 = vunpack.c.l.b16 %v3459
        %v3610 = vunpack.c.h.b16 %v3459
        %v3611 = vunpack.c.l.b16 %v3460
        %v3612 = vunpack.c.h.b16 %v3460
        %v3613 = vunpack.c.l.b16 %v3461
        %v3614 = vunpack.c.h.b16 %v3461
        %v3615 = vunpack.c.l.b16 %v3462
        %v3616 = vunpack.c.h.b16 %v3462
        %v3617 = vunpack.c.l.b16 %v3463
        %v3618 = vunpack.c.h.b16 %v3463
        %v3619 = vunpack.c.l.b16 %v3464
        %v3620 = vunpack.c.h.b16 %v3464
        %v3621 = vunpack.c.l.b16 %v3465
        %v3622 = vunpack.c.h.b16 %v3465
        %v3623 = vunpack.c.l.b16 %v3466
        %v3624 = vunpack.c.h.b16 %v3466
        %v3625 = vunpack.c.l.b16 %v3467
        %v3626 = vunpack.c.h.b16 %v3467
        %v3627 = vunpack.c.l.b16 %v3468
        %v3628 = vunpack.c.h.b16 %v3468
        %v3629 = vunpack.c.l.b16 %v3469
        %v3630 = vunpack.c.h.b16 %v3469
        %v3631 = vunpack.c.l.b16 %v3470
        %v3632 = vunpack.c.h.b16 %v3470
        %v3633 = vunpack.c.l.b16 %v3471
        %v3634 = vunpack.c.h.b16 %v3471
        %v3635 = vunpack.c.l.b16 %v3472
        %v3636 = vunpack.c.h.b16 %v3472
        %v3637 = vunpack.c.l.b16 %v3473
        %v3638 = vunpack.c.h.b16 %v3473
        %v3639 = vunpack.c.l.b16 %v3474
        %v3640 = vunpack.c.h.b16 %v3474
        %v3641 = vunpack.c.l.b16 %v3475
        %v3642 = vunpack.c.h.b16 %v3475
        %v3643 = vunpack.c.l.b16 %v3476
        %v3644 = vunpack.c.h.b16 %v3476
        %v3645 = vunpack.c.l.b16 %v3477
        %v3646 = vunpack.c.h.b16 %v3477
        %v3647 = vunpack.c.l.b16 %v3478
        %v3648 = vunpack.c.h.b16 %v3478
        %v3649 = vunpack.c.l.b16 %v3479
        %v3650 = vunpack.c.h.b16 %v3479
        %v3651 = vunpack.c.l.b16 %v3480
        %v3652 = vunpack.c.h.b16 %v3480
        %v3653 = vunpack.c.l.b16 %v3481
        %v3654 = vunpack.c.h.b16 %v3481
        %v3655 = vunpack.c.l.b16 %v3482
        %v3656 = vunpack.c.h.b16 %v3482
        %v3657 = vunpack.c.l.b16 %v3483
        %v3658 = vunpack.c.h.b16 %v3483
        %v3659 = vunpack.c.l.b16 %v3484
        %v3660 = vunpack.c.h.b16 %v3484
        %v3661 = vunpack.c.l.b16 %v3485
        %v3662 = vunpack.c.h.b16 %v3485
        %v3663 = vunpack.c.l.b16 %v3486
        %v3664 = vunpack.c.h.b16 %v3486
        %v3665 = vunpack.c.l.b16 %v3487
        %v3666 = vunpack.c.h.b16 %v3487
        %v3667 = vunpack.c.l.b16 %v3488
        %v3668 = vunpack.c.h.b16 %v3488
        %v3669 = vunpack.c.l.b16 %v3489
        %v3670 = vunpack.c.h.b16 %v3489
        %v3671 = vunpack.c.l.b16 %v3490
        %v3672 = vunpack.c.h.b16 %v3490
        %v3673 = vunpack.c.l.b16 %v3491
        %v3674 = vunpack.c.h.b16 %v3491
        %v3675 = vunpack.c.l.b16 %v3492
        %v3676 = vunpack.c.h.b16 %v3492
        %v3677 = vunpack.c.l.b16 %v3493
        %v3678 = vunpack.c.h.b16 %v3493
        %v3679 = vunpack.c.l.b16 %v3494
        %v3680 = vunpack.c.h.b16 %v3494
        %v3681 = vunpack.c.l.b16 %v3495
        %v3682 = vunpack.c.h.b16 %v3495
        %v3683 = vunpack.c.l.b16 %v3496
        %v3684 = vunpack.c.h.b16 %v3496
        %v3685 = vunpack.c.l.b16 %v3497
        %v3686 = vunpack.c.h.b16 %v3497
        %v3687 = vunpack.c.l.b16 %v3498
        %v3688 = vunpack.c.h.b16 %v3498
        %v3689 = vunpack.c.l.b16 %v3499
        %v3690 = vunpack.c.h.b16 %v3499
        %v3691 = vunpack.c.l.b16 %v3500
        %v3692 = vunpack.c.h.b16 %v3500
        %v3693 = vpack.c.b16 %v3569, %v3565
        %v3694 = vpack.c.b16 %v3570, %v3566
        %v3695 = vpack.c.b16 %v3571, %v3567
        %v3696 = vpack.c.b16 %v3572, %v3568
        %v3697 = vpack.c.b16 %v3577, %v3573
        %v3698 = vpack.c.b16 %v3578, %v3574
        %v3699 = vpack.c.b16 %v3579, %v3575
        %v3700 = vpack.c.b16 %v3580, %v3576
        %v3701 = vpack.c.b16 %v3585, %v3581
        %v3702 = vpack.c.b16 %v3586, %v3582
        %v3703 = vpack.c.b16 %v3587, %v3583
        %v3704 = vpack.c.b16 %v3588, %v3584
        %v3705 = vpack.c.b16 %v3593, %v3589
        %v3706 = vpack.c.b16 %v3594, %v3590
        %v3707 = vpack.c.b16 %v3595, %v3591
        %v3708 = vpack.c.b16 %v3596, %v3592
        %v3709 = vpack.c.b16 %v3601, %v3597
        %v3710 = vpack.c.b16 %v3602, %v3598
        %v3711 = vpack.c.b16 %v3603, %v3599
        %v3712 = vpack.c.b16 %v3604, %v3600
        %v3713 = vpack.c.b16 %v3609, %v3605
        %v3714 = vpack.c.b16 %v3610, %v3606
        %v3715 = vpack.c.b16 %v3611, %v3607
        %v3716 = vpack.c.b16 %v3612, %v3608
        %v3717 = vpack.c.b16 %v3617, %v3613
        %v3718 = vpack.c.b16 %v3618, %v3614
        %v3719 = vpack.c.b16 %v3619, %v3615
        %v3720 = vpack.c.b16 %v3620, %v3616
        %v3721 = vpack.c.b16 %v3625, %v3621
        %v3722 = vpack.c.b16 %v3626, %v3622
        %v3723 = vpack.c.b16 %v3627, %v3623
        %v3724 = vpack.c.b16 %v3628, %v3624
        %v3725 = vpack.c.b16 %v3633, %v3629
        %v3726 = vpack.c.b16 %v3634, %v3630
        %v3727 = vpack.c.b16 %v3635, %v3631
        %v3728 = vpack.c.b16 %v3636, %v3632
        %v3729 = vpack.c.b16 %v3641, %v3637
        %v3730 = vpack.c.b16 %v3642, %v3638
        %v3731 = vpack.c.b16 %v3643, %v3639
        %v3732 = vpack.c.b16 %v3644, %v3640
        %v3733 = vpack.c.b16 %v3649, %v3645
        %v3734 = vpack.c.b16 %v3650, %v3646
        %v3735 = vpack.c.b16 %v3651, %v3647
        %v3736 = vpack.c.b16 %v3652, %v3648
        %v3737 = vpack.c.b16 %v3657, %v3653
        %v3738 = vpack.c.b16 %v3658, %v3654
        %v3739 = vpack.c.b16 %v3659, %v3655
        %v3740 = vpack.c.b16 %v3660, %v3656
        %v3741 = vpack.c.b16 %v3665, %v3661
        %v3742 = vpack.c.b16 %v3666, %v3662
        %v3743 = vpack.c.b16 %v3667, %v3663
        %v3744 = vpack.c.b16 %v3668, %v3664
        %v3745 = vpack.c.b16 %v3673, %v3669
        %v3746 = vpack.c.b16 %v3674, %v3670
        %v3747 = vpack.c.b16 %v3675, %v3671
        %v3748 = vpack.c.b16 %v3676, %v3672
        %v3749 = vpack.c.b16 %v3681, %v3677
        %v3750 = vpack.c.b16 %v3682, %v3678
        %v3751 = vpack.c.b16 %v3683, %v3679
        %v3752 = vpack.c.b16 %v3684, %v3680
        %v3753 = vpack.c.b16 %v3689, %v3685
        %v3754 = vpack.c.b16 %v3690, %v3686
        %v3755 = vpack.c.b16 %v3691, %v3687
        %v3756 = vpack.c.b16 %v3692, %v3688
        %3821 = vmatprep.subr.bf16.mxu0 %v3694
        %3822 = vmatpush1.bf16.msra.mxu0 %v3693
        %3823 = vmatprep.subr.bf16.mxu0 %v3698
        %3824 = vmatpush1.bf16.msra.mxu0 %v3697
        %3825 = vmatprep.subr.bf16.mxu0 %v3702
        %3826 = vmatpush1.bf16.msra.mxu0 %v3701
        %3827 = vmatprep.subr.bf16.mxu0 %v3706
        %3828 = vmatpush1.bf16.msra.mxu0 %v3705
        %3829 = vmatprep.subr.bf16.mxu0 %v3710
        %3830 = vmatpush1.bf16.msra.mxu0 %v3709
        %3831 = vmatprep.subr.bf16.mxu0 %v3714
        %3832 = vmatpush1.bf16.msra.mxu0 %v3713
        %3833 = vmatprep.subr.bf16.mxu0 %v3718
        %3834 = vmatpush1.bf16.msra.mxu0 %v3717
        %3835 = vmatprep.subr.bf16.mxu0 %v3722
        %3836 = vmatpush1.bf16.msra.mxu0 %v3721
        %3837 = vmatprep.subr.bf16.mxu0 %v3726
        %3838 = vmatpush1.bf16.msra.mxu0 %v3725
        %3839 = vmatprep.subr.bf16.mxu0 %v3730
        %3840 = vmatpush1.bf16.msra.mxu0 %v3729
        %3841 = vmatprep.subr.bf16.mxu0 %v3734
        %3842 = vmatpush1.bf16.msra.mxu0 %v3733
        %3843 = vmatprep.subr.bf16.mxu0 %v3738
        %3844 = vmatpush1.bf16.msra.mxu0 %v3737
        %3845 = vmatprep.subr.bf16.mxu0 %v3742
        %3846 = vmatpush1.bf16.msra.mxu0 %v3741
        %3847 = vmatprep.subr.bf16.mxu0 %v3746
        %3848 = vmatpush1.bf16.msra.mxu0 %v3745
        %3849 = vmatprep.subr.bf16.mxu0 %v3750
        %3850 = vmatpush1.bf16.msra.mxu0 %v3749
        %3851 = vmatprep.subr.bf16.mxu0 %v3754
        %3852 = vmatpush1.bf16.msra.mxu0 %v3753
        %3853 = vmatprep.mubr.bf16.mxu0 %v1232
        %3854 = vmatmul.mubr.bf16.gmra.mrb[0].mxu0 %v1231
        %v3855 = vpop.f32.mrb[0].mxu0
        %v3856 = vadd.f32 0.0, %v3855
        %v3857 = vpop.f32.mrb[0].mxu0
        %v3858 = vadd.f32 0.0, %v3857
        %v3859 = vpop.f32.mrb[0].mxu0
        %v3860 = vadd.f32 0.0, %v3859
        %v3861 = vpop.f32.mrb[0].mxu0
        %v3862 = vadd.f32 0.0, %v3861
        %3863 = vmatprep.mubr.bf16.mxu0 %v1234
        %3864 = vmatmul.mubr.bf16.gmra.mrb[0].mxu0 %v1233
        %v3865 = vpop.f32.mrb[0].mxu0
        %v3866 = vadd.f32 0.0, %v3865
        %v3867 = vpop.f32.mrb[0].mxu0
        %v3868 = vadd.f32 0.0, %v3867
        %v3869 = vpop.f32.mrb[0].mxu0
        %v3870 = vadd.f32 0.0, %v3869
        %v3871 = vpop.f32.mrb[0].mxu0
        %v3872 = vadd.f32 0.0, %v3871
        %3873 = vmatprep.mubr.bf16.mxu0 %v2305
        %3874 = vmatmul.mubr.bf16.gmra.mrb[0].mxu0 %v2304
        %v3875 = vpop.f32.mrb[0].mxu0
        %v3876 = vadd.f32 0.0, %v3875
        %v3877 = vpop.f32.mrb[0].mxu0
        %v3878 = vadd.f32 0.0, %v3877
        %v3879 = vpop.f32.mrb[0].mxu0
        %v3880 = vadd.f32 0.0, %v3879
        %v3881 = vpop.f32.mrb[0].mxu0
        %v3882 = vadd.f32 0.0, %v3881
        %3883 = vmatprep.mubr.bf16.mxu0 %v3435
        %3884 = vmatmul.mubr.bf16.gmra.mrb[0].mxu0 %v3434
        %v3885 = vpop.f32.mrb[0].mxu0
        %v3886 = vadd.f32 0.0, %v3885
        %v3887 = vpop.f32.mrb[0].mxu0
        %v3888 = vadd.f32 0.0, %v3887
        %v3889 = vpop.f32.mrb[0].mxu0
        %v3890 = vadd.f32 0.0, %v3889
        %v3891 = vpop.f32.mrb[0].mxu0
        %v3892 = vadd.f32 0.0, %v3891
        %3893 = vdwg.mxu0
        %3894 = vmatprep.subr.bf16.mxu0 %v3696
        %3895 = vmatpush1.bf16.msra.mxu0 %v3695
        %3896 = vmatprep.subr.bf16.mxu0 %v3700
        %3897 = vmatpush1.bf16.msra.mxu0 %v3699
        %3898 = vmatprep.subr.bf16.mxu0 %v3704
        %3899 = vmatpush1.bf16.msra.mxu0 %v3703
        %3900 = vmatprep.subr.bf16.mxu0 %v3708
        %3901 = vmatpush1.bf16.msra.mxu0 %v3707
        %3902 = vmatprep.subr.bf16.mxu0 %v3712
        %3903 = vmatpush1.bf16.msra.mxu0 %v3711
        %3904 = vmatprep.subr.bf16.mxu0 %v3716
        %3905 = vmatpush1.bf16.msra.mxu0 %v3715
        %3906 = vmatprep.subr.bf16.mxu0 %v3720
        %3907 = vmatpush1.bf16.msra.mxu0 %v3719
        %3908 = vmatprep.subr.bf16.mxu0 %v3724
        %3909 = vmatpush1.bf16.msra.mxu0 %v3723
        %3910 = vmatprep.subr.bf16.mxu0 %v3728
        %3911 = vmatpush1.bf16.msra.mxu0 %v3727
        %3912 = vmatprep.subr.bf16.mxu0 %v3732
        %3913 = vmatpush1.bf16.msra.mxu0 %v3731
        %3914 = vmatprep.subr.bf16.mxu0 %v3736
        %3915 = vmatpush1.bf16.msra.mxu0 %v3735
        %3916 = vmatprep.subr.bf16.mxu0 %v3740
        %3917 = vmatpush1.bf16.msra.mxu0 %v3739
        %3918 = vmatprep.subr.bf16.mxu0 %v3744
        %3919 = vmatpush1.bf16.msra.mxu0 %v3743
        %3920 = vmatprep.subr.bf16.mxu0 %v3748
        %3921 = vmatpush1.bf16.msra.mxu0 %v3747
        %3922 = vmatprep.subr.bf16.mxu0 %v3752
        %3923 = vmatpush1.bf16.msra.mxu0 %v3751
        %3924 = vmatprep.subr.bf16.mxu0 %v3756
        %3925 = vmatpush1.bf16.msra.mxu0 %v3755
        %3926 = vmatprep.mubr.bf16.mxu0 %v1232
        %3927 = vmatmul.mubr.bf16.gmra.mrb[0].mxu0 %v1231
        %v3928 = vpop.f32.mrb[0].mxu0
        %v3929 = vadd.f32 0.0, %v3928
        %v3930 = vpop.f32.mrb[0].mxu0
        %v3931 = vadd.f32 0.0, %v3930
        %v3932 = vpop.f32.mrb[0].mxu0
        %v3933 = vadd.f32 0.0, %v3932
        %v3934 = vpop.f32.mrb[0].mxu0
        %v3935 = vadd.f32 0.0, %v3934
        %3936 = vmatprep.mubr.bf16.mxu0 %v1234
        %3937 = vmatmul.mubr.bf16.gmra.mrb[0].mxu0 %v1233
        %v3938 = vpop.f32.mrb[0].mxu0
        %v3939 = vadd.f32 0.0, %v3938
        %v3940 = vpop.f32.mrb[0].mxu0
        %v3941 = vadd.f32 0.0, %v3940
        %v3942 = vpop.f32.mrb[0].mxu0
        %v3943 = vadd.f32 0.0, %v3942
        %v3944 = vpop.f32.mrb[0].mxu0
        %v3945 = vadd.f32 0.0, %v3944
        %3946 = vmatprep.mubr.bf16.mxu0 %v2305
        %3947 = vmatmul.mubr.bf16.gmra.mrb[0].mxu0 %v2304
        %v3948 = vpop.f32.mrb[0].mxu0
        %v3949 = vadd.f32 0.0, %v3948
        %v3950 = vpop.f32.mrb[0].mxu0
        %v3951 = vadd.f32 0.0, %v3950
        %v3952 = vpop.f32.mrb[0].mxu0
        %v3953 = vadd.f32 0.0, %v3952
        %v3954 = vpop.f32.mrb[0].mxu0
        %v3955 = vadd.f32 0.0, %v3954
        %3956 = vmatprep.mubr.bf16.mxu0 %v3435
        %3957 = vmatmul.mubr.bf16.gmra.mrb[0].mxu0 %v3434
        %v3958 = vpop.f32.mrb[0].mxu0
        %v3959 = vadd.f32 0.0, %v3958
        %v3960 = vpop.f32.mrb[0].mxu0
        %v3961 = vadd.f32 0.0, %v3960
        %v3962 = vpop.f32.mrb[0].mxu0
        %v3963 = vadd.f32 0.0, %v3962
        %v3964 = vpop.f32.mrb[0].mxu0
        %v3965 = vadd.f32 0.0, %v3964
        %3966 = vdwg.mxu0
        %v3967 = vadd.f32 %v3402, %v3856
        %v3968 = vadd.f32 %v3403, %v3858
        %v3969 = vadd.f32 %v3404, %v3929
        %v3970 = vadd.f32 %v3405, %v3931
        %v3971 = vadd.f32 %v3406, %v3860
        %v3972 = vadd.f32 %v3407, %v3862
        %v3973 = vadd.f32 %v3408, %v3933
        %v3974 = vadd.f32 %v3409, %v3935
        %v3975 = vadd.f32 %v3410, %v3866
        %v3976 = vadd.f32 %v3411, %v3868
        %v3977 = vadd.f32 %v3412, %v3939
        %v3978 = vadd.f32 %v3413, %v3941
        %v3979 = vadd.f32 %v3414, %v3870
        %v3980 = vadd.f32 %v3415, %v3872
        %v3981 = vadd.f32 %v3416, %v3943
        %v3982 = vadd.f32 %v3417, %v3945
        %v3983 = vadd.f32 %v3418, %v3876
        %v3984 = vadd.f32 %v3419, %v3878
        %v3985 = vadd.f32 %v3420, %v3949
        %v3986 = vadd.f32 %v3421, %v3951
        %v3987 = vadd.f32 %v3422, %v3880
        %v3988 = vadd.f32 %v3423, %v3882
        %v3989 = vadd.f32 %v3424, %v3953
        %v3990 = vadd.f32 %v3425, %v3955
        %v3991 = vadd.f32 %v3426, %v3886
        %v3992 = vadd.f32 %v3427, %v3888
        %v3993 = vadd.f32 %v3428, %v3959
        %v3994 = vadd.f32 %v3429, %v3961
        %v3995 = vadd.f32 %v3430, %v3890
        %v3996 = vadd.f32 %v3431, %v3892
        %v3997 = vadd.f32 %v3432, %v3963
        %v3998 = vadd.f32 %v3433, %v3965
        %v3999 = vld [vmem:[%s4] sm:$0xf]
        %v4001 = vlaneseq
        %v4002 = vshrl.u32 %v4001, 7
        %v4003 = vsub.s32 0, %v4002
        %v4004 = vrot.slane %v3999, %v4003
        %v4005 = vlaneseq
        %v4006 = vshrl.u32 %v4005, 7
        %v4007 = vsub.s32 1, %v4006
        %v4008 = vrot.slane %v3999, %v4007
        %v4009 = vlaneseq
        %v4010 = vshrl.u32 %v4009, 7
        %v4011 = vsub.s32 2, %v4010
        %v4012 = vrot.slane %v3999, %v4011
        %v4013 = vlaneseq
        %v4014 = vshrl.u32 %v4013, 7
        %v4015 = vsub.s32 3, %v4014
        %v4016 = vrot.slane %v3999, %v4015
        %v4021 = vadd.f32 %v3967, %v4004
        %v4022 = vadd.f32 %v3968, %v4008
        %v4023 = vadd.f32 %v3969, %v4012
        %v4024 = vadd.f32 %v3970, %v4016
        %v4025 = vadd.f32 %v3971, %v4004
        %v4026 = vadd.f32 %v3972, %v4008
        %v4027 = vadd.f32 %v3973, %v4012
        %v4028 = vadd.f32 %v3974, %v4016
        %v4029 = vadd.f32 %v3975, %v4004
        %v4030 = vadd.f32 %v3976, %v4008
        %v4031 = vadd.f32 %v3977, %v4012
        %v4032 = vadd.f32 %v3978, %v4016
        %v4033 = vadd.f32 %v3979, %v4004
        %v4034 = vadd.f32 %v3980, %v4008
        %v4035 = vadd.f32 %v3981, %v4012
        %v4036 = vadd.f32 %v3982, %v4016
        %v4037 = vadd.f32 %v3983, %v4004
        %v4038 = vadd.f32 %v3984, %v4008
        %v4039 = vadd.f32 %v3985, %v4012
        %v4040 = vadd.f32 %v3986, %v4016
        %v4041 = vadd.f32 %v3987, %v4004
        %v4042 = vadd.f32 %v3988, %v4008
        %v4043 = vadd.f32 %v3989, %v4012
        %v4044 = vadd.f32 %v3990, %v4016
        %v4045 = vadd.f32 %v3991, %v4004
        %v4046 = vadd.f32 %v3992, %v4008
        %v4047 = vadd.f32 %v3993, %v4012
        %v4048 = vadd.f32 %v3994, %v4016
        %v4049 = vadd.f32 %v3995, %v4004
        %v4050 = vadd.f32 %v3996, %v4008
        %v4051 = vadd.f32 %v3997, %v4012
        %v4052 = vadd.f32 %v3998, %v4016
        %v4053 = vmax.f32 %v4021, 0.0
        %v4054 = vmax.f32 %v4022, 0.0
        %v4055 = vmax.f32 %v4023, 0.0
        %v4056 = vmax.f32 %v4024, 0.0
        %v4057 = vmax.f32 %v4025, 0.0
        %v4058 = vmax.f32 %v4026, 0.0
        %v4059 = vmax.f32 %v4027, 0.0
        %v4060 = vmax.f32 %v4028, 0.0
        %v4061 = vmax.f32 %v4029, 0.0
        %v4062 = vmax.f32 %v4030, 0.0
        %v4063 = vmax.f32 %v4031, 0.0
        %v4064 = vmax.f32 %v4032, 0.0
        %v4065 = vmax.f32 %v4033, 0.0
        %v4066 = vmax.f32 %v4034, 0.0
        %v4067 = vmax.f32 %v4035, 0.0
        %v4068 = vmax.f32 %v4036, 0.0
        %v4069 = vmax.f32 %v4037, 0.0
        %v4070 = vmax.f32 %v4038, 0.0
        %v4071 = vmax.f32 %v4039, 0.0
        %v4072 = vmax.f32 %v4040, 0.0
        %v4073 = vmax.f32 %v4041, 0.0
        %v4074 = vmax.f32 %v4042, 0.0
        %v4075 = vmax.f32 %v4043, 0.0
        %v4076 = vmax.f32 %v4044, 0.0
        %v4077 = vmax.f32 %v4045, 0.0
        %v4078 = vmax.f32 %v4046, 0.0
        %v4079 = vmax.f32 %v4047, 0.0
        %v4080 = vmax.f32 %v4048, 0.0
        %v4081 = vmax.f32 %v4049, 0.0
        %v4082 = vmax.f32 %v4050, 0.0
        %v4083 = vmax.f32 %v4051, 0.0
        %v4084 = vmax.f32 %v4052, 0.0
        %v4085 = vmax.f32 %v4053, %v4055
        %v4086 = vmax.f32 %v4054, %v4056
        %v4087 = vmax.f32 %v4057, %v4059
        %v4088 = vmax.f32 %v4058, %v4060
        %v4089 = vmax.f32 %v4061, %v4063
        %v4090 = vmax.f32 %v4062, %v4064
        %v4091 = vmax.f32 %v4065, %v4067
        %v4092 = vmax.f32 %v4066, %v4068
        %v4093 = vmax.f32 %v4069, %v4071
        %v4094 = vmax.f32 %v4070, %v4072
        %v4095 = vmax.f32 %v4073, %v4075
        %v4096 = vmax.f32 %v4074, %v4076
        %v4097 = vmax.f32 %v4077, %v4079
        %v4098 = vmax.f32 %v4078, %v4080
        %v4099 = vmax.f32 %v4081, %v4083
        %v4100 = vmax.f32 %v4082, %v4084
        %v4101 = vmax.f32 %v4085, %v4087
        %v4102 = vmax.f32 %v4086, %v4088
        %v4103 = vmax.f32 %v4089, %v4091
        %v4104 = vmax.f32 %v4090, %v4092
        %v4105 = vmax.f32 %v4093, %v4095
        %v4106 = vmax.f32 %v4094, %v4096
        %v4107 = vmax.f32 %v4097, %v4099
        %v4108 = vmax.f32 %v4098, %v4100
        %v4109 = vpack.c.bf16 %v4101, %v4101
        %v4110 = vpack.c.bf16 %v4102, %v4102
        %v4111 = vpack.c.bf16 %v4103, %v4103
        %v4112 = vpack.c.bf16 %v4104, %v4104
        %v4113 = vpack.c.bf16 %v4105, %v4105
        %v4114 = vpack.c.bf16 %v4106, %v4106
        %v4115 = vpack.c.bf16 %v4107, %v4107
        %v4116 = vpack.c.bf16 %v4108, %v4108
        %v4117 = vld [vmem:[%s5] sm:$0xff]
        %v4118 = vld [vmem:[%s5 + $0x8] sm:$0xff]
        %v4119 = vld [vmem:[%s5 + $0x10] sm:$0xff]
        %v4120 = vld [vmem:[%s5 + $0x18] sm:$0xff]
        %v4121 = vld [vmem:[%s5 + $0x20] sm:$0xff]
        %v4122 = vld [vmem:[%s5 + $0x28] sm:$0xff]
        %v4123 = vld [vmem:[%s5 + $0x30] sm:$0xff]
        %v4124 = vld [vmem:[%s5 + $0x38] sm:$0xff]
        %v4125 = vld [vmem:[%s5 + $0x40] sm:$0xff]
        %v4126 = vld [vmem:[%s5 + $0x48] sm:$0xff]
        %v4127 = vld [vmem:[%s5 + $0x50] sm:$0xff]
        %v4128 = vld [vmem:[%s5 + $0x58] sm:$0xff]
        %v4129 = vld [vmem:[%s5 + $0x60] sm:$0xff]
        %v4130 = vld [vmem:[%s5 + $0x68] sm:$0xff]
        %v4131 = vld [vmem:[%s5 + $0x70] sm:$0xff]
        %v4132 = vld [vmem:[%s5 + $0x78] sm:$0xff]
        %v4133 = vld [vmem:[%s5 + $0x80] sm:$0xff]
        %v4134 = vld [vmem:[%s5 + $0x88] sm:$0xff]
        %v4135 = vld [vmem:[%s5 + $0x90] sm:$0xff]
        %v4136 = vld [vmem:[%s5 + $0x98] sm:$0xff]
        %v4137 = vld [vmem:[%s5 + $0xa0] sm:$0xff]
        %v4138 = vld [vmem:[%s5 + $0xa8] sm:$0xff]
        %v4139 = vld [vmem:[%s5 + $0xb0] sm:$0xff]
        %v4140 = vld [vmem:[%s5 + $0xb8] sm:$0xff]
        %v4141 = vld [vmem:[%s5 + $0xc0] sm:$0xff]
        %v4142 = vld [vmem:[%s5 + $0xc8] sm:$0xff]
        %v4143 = vld [vmem:[%s5 + $0xd0] sm:$0xff]
        %v4144 = vld [vmem:[%s5 + $0xd8] sm:$0xff]
        %v4145 = vld [vmem:[%s5 + $0xe0] sm:$0xff]
        %v4146 = vld [vmem:[%s5 + $0xe8] sm:$0xff]
        %v4147 = vld [vmem:[%s5 + $0xf0] sm:$0xff]
        %v4148 = vld [vmem:[%s5 + $0xf8] sm:$0xff]
        %v4149 = vld [vmem:[%s5 + $0x100] sm:$0xff]
        %v4150 = vld [vmem:[%s5 + $0x108] sm:$0xff]
        %v4151 = vld [vmem:[%s5 + $0x110] sm:$0xff]
        %v4152 = vld [vmem:[%s5 + $0x118] sm:$0xff]
        %v4153 = vld [vmem:[%s5 + $0x120] sm:$0xff]
        %v4154 = vld [vmem:[%s5 + $0x128] sm:$0xff]
        %v4155 = vld [vmem:[%s5 + $0x130] sm:$0xff]
        %v4156 = vld [vmem:[%s5 + $0x138] sm:$0xff]
        %v4157 = vld [vmem:[%s5 + $0x140] sm:$0xff]
        %v4158 = vld [vmem:[%s5 + $0x148] sm:$0xff]
        %v4159 = vld [vmem:[%s5 + $0x150] sm:$0xff]
        %v4160 = vld [vmem:[%s5 + $0x158] sm:$0xff]
        %v4161 = vld [vmem:[%s5 + $0x160] sm:$0xff]
        %v4162 = vld [vmem:[%s5 + $0x168] sm:$0xff]
        %v4163 = vld [vmem:[%s5 + $0x170] sm:$0xff]
        %v4164 = vld [vmem:[%s5 + $0x178] sm:$0xff]
        %v4165 = vld [vmem:[%s5 + $0x180] sm:$0xff]
        %v4166 = vld [vmem:[%s5 + $0x188] sm:$0xff]
        %v4167 = vld [vmem:[%s5 + $0x190] sm:$0xff]
        %v4168 = vld [vmem:[%s5 + $0x198] sm:$0xff]
        %v4169 = vld [vmem:[%s5 + $0x1a0] sm:$0xff]
        %v4170 = vld [vmem:[%s5 + $0x1a8] sm:$0xff]
        %v4171 = vld [vmem:[%s5 + $0x1b0] sm:$0xff]
        %v4172 = vld [vmem:[%s5 + $0x1b8] sm:$0xff]
        %v4173 = vld [vmem:[%s5 + $0x1c0] sm:$0xff]
        %v4174 = vld [vmem:[%s5 + $0x1c8] sm:$0xff]
        %v4175 = vld [vmem:[%s5 + $0x1d0] sm:$0xff]
        %v4176 = vld [vmem:[%s5 + $0x1d8] sm:$0xff]
        %v4177 = vld [vmem:[%s5 + $0x1e0] sm:$0xff]
        %v4178 = vld [vmem:[%s5 + $0x1e8] sm:$0xff]
        %v4179 = vld [vmem:[%s5 + $0x1f0] sm:$0xff]
        %v4180 = vld [vmem:[%s5 + $0x1f8] sm:$0xff]
        %v4181 = vld [vmem:[%s5 + $0x200] sm:$0xff]
        %v4182 = vld [vmem:[%s5 + $0x208] sm:$0xff]
        %v4183 = vld [vmem:[%s5 + $0x210] sm:$0xff]
        %v4184 = vld [vmem:[%s5 + $0x218] sm:$0xff]
        %v4185 = vld [vmem:[%s5 + $0x220] sm:$0xff]
        %v4186 = vld [vmem:[%s5 + $0x228] sm:$0xff]
        %v4187 = vld [vmem:[%s5 + $0x230] sm:$0xff]
        %v4188 = vld [vmem:[%s5 + $0x238] sm:$0xff]
        %v4189 = vld [vmem:[%s5 + $0x240] sm:$0xff]
        %v4190 = vld [vmem:[%s5 + $0x248] sm:$0xff]
        %v4191 = vld [vmem:[%s5 + $0x250] sm:$0xff]
        %v4192 = vld [vmem:[%s5 + $0x258] sm:$0xff]
        %v4193 = vld [vmem:[%s5 + $0x260] sm:$0xff]
        %v4194 = vld [vmem:[%s5 + $0x268] sm:$0xff]
        %v4195 = vld [vmem:[%s5 + $0x270] sm:$0xff]
        %v4196 = vld [vmem:[%s5 + $0x278] sm:$0xff]
        %v4197 = vld [vmem:[%s5 + $0x280] sm:$0xff]
        %v4198 = vld [vmem:[%s5 + $0x288] sm:$0xff]
        %v4199 = vld [vmem:[%s5 + $0x290] sm:$0xff]
        %v4200 = vld [vmem:[%s5 + $0x298] sm:$0xff]
        %v4201 = vld [vmem:[%s5 + $0x2a0] sm:$0xff]
        %v4202 = vld [vmem:[%s5 + $0x2a8] sm:$0xff]
        %v4203 = vld [vmem:[%s5 + $0x2b0] sm:$0xff]
        %v4204 = vld [vmem:[%s5 + $0x2b8] sm:$0xff]
        %v4205 = vld [vmem:[%s5 + $0x2c0] sm:$0xff]
        %v4206 = vld [vmem:[%s5 + $0x2c8] sm:$0xff]
        %v4207 = vld [vmem:[%s5 + $0x2d0] sm:$0xff]
        %v4208 = vld [vmem:[%s5 + $0x2d8] sm:$0xff]
        %v4209 = vld [vmem:[%s5 + $0x2e0] sm:$0xff]
        %v4210 = vld [vmem:[%s5 + $0x2e8] sm:$0xff]
        %v4211 = vld [vmem:[%s5 + $0x2f0] sm:$0xff]
        %v4212 = vld [vmem:[%s5 + $0x2f8] sm:$0xff]
        %v4213 = vld [vmem:[%s5 + $0x300] sm:$0xff]
        %v4214 = vld [vmem:[%s5 + $0x308] sm:$0xff]
        %v4215 = vld [vmem:[%s5 + $0x310] sm:$0xff]
        %v4216 = vld [vmem:[%s5 + $0x318] sm:$0xff]
        %v4217 = vld [vmem:[%s5 + $0x320] sm:$0xff]
        %v4218 = vld [vmem:[%s5 + $0x328] sm:$0xff]
        %v4219 = vld [vmem:[%s5 + $0x330] sm:$0xff]
        %v4220 = vld [vmem:[%s5 + $0x338] sm:$0xff]
        %v4221 = vld [vmem:[%s5 + $0x340] sm:$0xff]
        %v4222 = vld [vmem:[%s5 + $0x348] sm:$0xff]
        %v4223 = vld [vmem:[%s5 + $0x350] sm:$0xff]
        %v4224 = vld [vmem:[%s5 + $0x358] sm:$0xff]
        %v4225 = vld [vmem:[%s5 + $0x360] sm:$0xff]
        %v4226 = vld [vmem:[%s5 + $0x368] sm:$0xff]
        %v4227 = vld [vmem:[%s5 + $0x370] sm:$0xff]
        %v4228 = vld [vmem:[%s5 + $0x378] sm:$0xff]
        %v4229 = vld [vmem:[%s5 + $0x380] sm:$0xff]
        %v4230 = vld [vmem:[%s5 + $0x388] sm:$0xff]
        %v4231 = vld [vmem:[%s5 + $0x390] sm:$0xff]
        %v4232 = vld [vmem:[%s5 + $0x398] sm:$0xff]
        %v4233 = vld [vmem:[%s5 + $0x3a0] sm:$0xff]
        %v4234 = vld [vmem:[%s5 + $0x3a8] sm:$0xff]
        %v4235 = vld [vmem:[%s5 + $0x3b0] sm:$0xff]
        %v4236 = vld [vmem:[%s5 + $0x3b8] sm:$0xff]
        %v4237 = vld [vmem:[%s5 + $0x3c0] sm:$0xff]
        %v4238 = vld [vmem:[%s5 + $0x3c8] sm:$0xff]
        %v4239 = vld [vmem:[%s5 + $0x3d0] sm:$0xff]
        %v4240 = vld [vmem:[%s5 + $0x3d8] sm:$0xff]
        %v4241 = vld [vmem:[%s5 + $0x3e0] sm:$0xff]
        %v4242 = vld [vmem:[%s5 + $0x3e8] sm:$0xff]
        %v4243 = vld [vmem:[%s5 + $0x3f0] sm:$0xff]
        %v4244 = vld [vmem:[%s5 + $0x3f8] sm:$0xff]
        %v4245 = vld [vmem:[%s5 + $0x400] sm:$0xff]
        %v4246 = vld [vmem:[%s5 + $0x408] sm:$0xff]
        %v4247 = vld [vmem:[%s5 + $0x410] sm:$0xff]
        %v4248 = vld [vmem:[%s5 + $0x418] sm:$0xff]
        %v4249 = vld [vmem:[%s5 + $0x420] sm:$0xff]
        %v4250 = vld [vmem:[%s5 + $0x428] sm:$0xff]
        %v4251 = vld [vmem:[%s5 + $0x430] sm:$0xff]
        %v4252 = vld [vmem:[%s5 + $0x438] sm:$0xff]
        %v4253 = vld [vmem:[%s5 + $0x440] sm:$0xff]
        %v4254 = vld [vmem:[%s5 + $0x448] sm:$0xff]
        %v4255 = vld [vmem:[%s5 + $0x450] sm:$0xff]
        %v4256 = vld [vmem:[%s5 + $0x458] sm:$0xff]
        %v4257 = vld [vmem:[%s5 + $0x460] sm:$0xff]
        %v4258 = vld [vmem:[%s5 + $0x468] sm:$0xff]
        %v4259 = vld [vmem:[%s5 + $0x470] sm:$0xff]
        %v4260 = vld [vmem:[%s5 + $0x478] sm:$0xff]
        %v4261 = vld [vmem:[%s5 + $0x480] sm:$0xff]
        %v4262 = vld [vmem:[%s5 + $0x488] sm:$0xff]
        %v4263 = vld [vmem:[%s5 + $0x490] sm:$0xff]
        %v4264 = vld [vmem:[%s5 + $0x498] sm:$0xff]
        %v4265 = vld [vmem:[%s5 + $0x4a0] sm:$0xff]
        %v4266 = vld [vmem:[%s5 + $0x4a8] sm:$0xff]
        %v4267 = vld [vmem:[%s5 + $0x4b0] sm:$0xff]
        %v4268 = vld [vmem:[%s5 + $0x4b8] sm:$0xff]
        %v4269 = vld [vmem:[%s5 + $0x4c0] sm:$0xff]
        %v4270 = vld [vmem:[%s5 + $0x4c8] sm:$0xff]
        %v4271 = vld [vmem:[%s5 + $0x4d0] sm:$0xff]
        %v4272 = vld [vmem:[%s5 + $0x4d8] sm:$0xff]
        %v4273 = vld [vmem:[%s5 + $0x4e0] sm:$0xff]
        %v4274 = vld [vmem:[%s5 + $0x4e8] sm:$0xff]
        %v4275 = vld [vmem:[%s5 + $0x4f0] sm:$0xff]
        %v4276 = vld [vmem:[%s5 + $0x4f8] sm:$0xff]
        %v4277 = vld [vmem:[%s5 + $0x500] sm:$0xff]
        %v4278 = vld [vmem:[%s5 + $0x508] sm:$0xff]
        %v4279 = vld [vmem:[%s5 + $0x510] sm:$0xff]
        %v4280 = vld [vmem:[%s5 + $0x518] sm:$0xff]
        %v4281 = vld [vmem:[%s5 + $0x520] sm:$0xff]
        %v4282 = vld [vmem:[%s5 + $0x528] sm:$0xff]
        %v4283 = vld [vmem:[%s5 + $0x530] sm:$0xff]
        %v4284 = vld [vmem:[%s5 + $0x538] sm:$0xff]
        %v4285 = vld [vmem:[%s5 + $0x540] sm:$0xff]
        %v4286 = vld [vmem:[%s5 + $0x548] sm:$0xff]
        %v4287 = vld [vmem:[%s5 + $0x550] sm:$0xff]
        %v4288 = vld [vmem:[%s5 + $0x558] sm:$0xff]
        %v4289 = vld [vmem:[%s5 + $0x560] sm:$0xff]
        %v4290 = vld [vmem:[%s5 + $0x568] sm:$0xff]
        %v4291 = vld [vmem:[%s5 + $0x570] sm:$0xff]
        %v4292 = vld [vmem:[%s5 + $0x578] sm:$0xff]
        %v4293 = vld [vmem:[%s5 + $0x580] sm:$0xff]
        %v4294 = vld [vmem:[%s5 + $0x588] sm:$0xff]
        %v4295 = vld [vmem:[%s5 + $0x590] sm:$0xff]
        %v4296 = vld [vmem:[%s5 + $0x598] sm:$0xff]
        %v4297 = vld [vmem:[%s5 + $0x5a0] sm:$0xff]
        %v4298 = vld [vmem:[%s5 + $0x5a8] sm:$0xff]
        %v4299 = vld [vmem:[%s5 + $0x5b0] sm:$0xff]
        %v4300 = vld [vmem:[%s5 + $0x5b8] sm:$0xff]
        %v4301 = vld [vmem:[%s5 + $0x5c0] sm:$0xff]
        %v4302 = vld [vmem:[%s5 + $0x5c8] sm:$0xff]
        %v4303 = vld [vmem:[%s5 + $0x5d0] sm:$0xff]
        %v4304 = vld [vmem:[%s5 + $0x5d8] sm:$0xff]
        %v4305 = vld [vmem:[%s5 + $0x5e0] sm:$0xff]
        %v4306 = vld [vmem:[%s5 + $0x5e8] sm:$0xff]
        %v4307 = vld [vmem:[%s5 + $0x5f0] sm:$0xff]
        %v4308 = vld [vmem:[%s5 + $0x5f8] sm:$0xff]
        %v4309 = vld [vmem:[%s5 + $0x600] sm:$0xff]
        %v4310 = vld [vmem:[%s5 + $0x608] sm:$0xff]
        %v4311 = vld [vmem:[%s5 + $0x610] sm:$0xff]
        %v4312 = vld [vmem:[%s5 + $0x618] sm:$0xff]
        %v4313 = vld [vmem:[%s5 + $0x620] sm:$0xff]
        %v4314 = vld [vmem:[%s5 + $0x628] sm:$0xff]
        %v4315 = vld [vmem:[%s5 + $0x630] sm:$0xff]
        %v4316 = vld [vmem:[%s5 + $0x638] sm:$0xff]
        %v4317 = vld [vmem:[%s5 + $0x640] sm:$0xff]
        %v4318 = vld [vmem:[%s5 + $0x648] sm:$0xff]
        %v4319 = vld [vmem:[%s5 + $0x650] sm:$0xff]
        %v4320 = vld [vmem:[%s5 + $0x658] sm:$0xff]
        %v4321 = vld [vmem:[%s5 + $0x660] sm:$0xff]
        %v4322 = vld [vmem:[%s5 + $0x668] sm:$0xff]
        %v4323 = vld [vmem:[%s5 + $0x670] sm:$0xff]
        %v4324 = vld [vmem:[%s5 + $0x678] sm:$0xff]
        %v4325 = vld [vmem:[%s5 + $0x680] sm:$0xff]
        %v4326 = vld [vmem:[%s5 + $0x688] sm:$0xff]
        %v4327 = vld [vmem:[%s5 + $0x690] sm:$0xff]
        %v4328 = vld [vmem:[%s5 + $0x698] sm:$0xff]
        %v4329 = vld [vmem:[%s5 + $0x6a0] sm:$0xff]
        %v4330 = vld [vmem:[%s5 + $0x6a8] sm:$0xff]
        %v4331 = vld [vmem:[%s5 + $0x6b0] sm:$0xff]
        %v4332 = vld [vmem:[%s5 + $0x6b8] sm:$0xff]
        %v4333 = vld [vmem:[%s5 + $0x6c0] sm:$0xff]
        %v4334 = vld [vmem:[%s5 + $0x6c8] sm:$0xff]
        %v4335 = vld [vmem:[%s5 + $0x6d0] sm:$0xff]
        %v4336 = vld [vmem:[%s5 + $0x6d8] sm:$0xff]
        %v4337 = vld [vmem:[%s5 + $0x6e0] sm:$0xff]
        %v4338 = vld [vmem:[%s5 + $0x6e8] sm:$0xff]
        %v4339 = vld [vmem:[%s5 + $0x6f0] sm:$0xff]
        %v4340 = vld [vmem:[%s5 + $0x6f8] sm:$0xff]
        %v4341 = vld [vmem:[%s5 + $0x700] sm:$0xff]
        %v4342 = vld [vmem:[%s5 + $0x708] sm:$0xff]
        %v4343 = vld [vmem:[%s5 + $0x710] sm:$0xff]
        %v4344 = vld [vmem:[%s5 + $0x718] sm:$0xff]
        %v4345 = vld [vmem:[%s5 + $0x720] sm:$0xff]
        %v4346 = vld [vmem:[%s5 + $0x728] sm:$0xff]
        %v4347 = vld [vmem:[%s5 + $0x730] sm:$0xff]
        %v4348 = vld [vmem:[%s5 + $0x738] sm:$0xff]
        %v4349 = vld [vmem:[%s5 + $0x740] sm:$0xff]
        %v4350 = vld [vmem:[%s5 + $0x748] sm:$0xff]
        %v4351 = vld [vmem:[%s5 + $0x750] sm:$0xff]
        %v4352 = vld [vmem:[%s5 + $0x758] sm:$0xff]
        %v4353 = vld [vmem:[%s5 + $0x760] sm:$0xff]
        %v4354 = vld [vmem:[%s5 + $0x768] sm:$0xff]
        %v4355 = vld [vmem:[%s5 + $0x770] sm:$0xff]
        %v4356 = vld [vmem:[%s5 + $0x778] sm:$0xff]
        %v4357 = vld [vmem:[%s5 + $0x780] sm:$0xff]
        %v4358 = vld [vmem:[%s5 + $0x788] sm:$0xff]
        %v4359 = vld [vmem:[%s5 + $0x790] sm:$0xff]
        %v4360 = vld [vmem:[%s5 + $0x798] sm:$0xff]
        %v4361 = vld [vmem:[%s5 + $0x7a0] sm:$0xff]
        %v4362 = vld [vmem:[%s5 + $0x7a8] sm:$0xff]
        %v4363 = vld [vmem:[%s5 + $0x7b0] sm:$0xff]
        %v4364 = vld [vmem:[%s5 + $0x7b8] sm:$0xff]
        %v4365 = vld [vmem:[%s5 + $0x7c0] sm:$0xff]
        %v4366 = vld [vmem:[%s5 + $0x7c8] sm:$0xff]
        %v4367 = vld [vmem:[%s5 + $0x7d0] sm:$0xff]
        %v4368 = vld [vmem:[%s5 + $0x7d8] sm:$0xff]
        %v4369 = vld [vmem:[%s5 + $0x7e0] sm:$0xff]
        %v4370 = vld [vmem:[%s5 + $0x7e8] sm:$0xff]
        %v4371 = vld [vmem:[%s5 + $0x7f0] sm:$0xff]
        %v4372 = vld [vmem:[%s5 + $0x7f8] sm:$0xff]
        %v4373 = vld [vmem:[%s6] sm:$0xf]
        %v4375 = vlaneseq
        %v4376 = vshrl.u32 %v4375, 7
        %v4377 = vsub.s32 0, %v4376
        %v4378 = vrot.slane %v4373, %v4377
        %v4379 = vlaneseq
        %v4380 = vshrl.u32 %v4379, 7
        %v4381 = vsub.s32 1, %v4380
        %v4382 = vrot.slane %v4373, %v4381
        %v4383 = vlaneseq
        %v4384 = vshrl.u32 %v4383, 7
        %v4385 = vsub.s32 2, %v4384
        %v4386 = vrot.slane %v4373, %v4385
        %v4387 = vlaneseq
        %v4388 = vshrl.u32 %v4387, 7
        %v4389 = vsub.s32 3, %v4388
        %v4390 = vrot.slane %v4373, %v4389
        %v4651 = vunpack.c.l.b16 %v4117
        %v4652 = vunpack.c.h.b16 %v4117
        %v4653 = vunpack.c.l.b16 %v4118
        %v4654 = vunpack.c.h.b16 %v4118
        %v4655 = vunpack.c.l.b16 %v4119
        %v4656 = vunpack.c.h.b16 %v4119
        %v4657 = vunpack.c.l.b16 %v4120
        %v4658 = vunpack.c.h.b16 %v4120
        %v4659 = vunpack.c.l.b16 %v4121
        %v4660 = vunpack.c.h.b16 %v4121
        %v4661 = vunpack.c.l.b16 %v4122
        %v4662 = vunpack.c.h.b16 %v4122
        %v4663 = vunpack.c.l.b16 %v4123
        %v4664 = vunpack.c.h.b16 %v4123
        %v4665 = vunpack.c.l.b16 %v4124
        %v4666 = vunpack.c.h.b16 %v4124
        %v4667 = vunpack.c.l.b16 %v4125
        %v4668 = vunpack.c.h.b16 %v4125
        %v4669 = vunpack.c.l.b16 %v4126
        %v4670 = vunpack.c.h.b16 %v4126
        %v4671 = vunpack.c.l.b16 %v4127
        %v4672 = vunpack.c.h.b16 %v4127
        %v4673 = vunpack.c.l.b16 %v4128
        %v4674 = vunpack.c.h.b16 %v4128
        %v4675 = vunpack.c.l.b16 %v4129
        %v4676 = vunpack.c.h.b16 %v4129
        %v4677 = vunpack.c.l.b16 %v4130
        %v4678 = vunpack.c.h.b16 %v4130
        %v4679 = vunpack.c.l.b16 %v4131
        %v4680 = vunpack.c.h.b16 %v4131
        %v4681 = vunpack.c.l.b16 %v4132
        %v4682 = vunpack.c.h.b16 %v4132
        %v4683 = vunpack.c.l.b16 %v4133
        %v4684 = vunpack.c.h.b16 %v4133
        %v4685 = vunpack.c.l.b16 %v4134
        %v4686 = vunpack.c.h.b16 %v4134
        %v4687 = vunpack.c.l.b16 %v4135
        %v4688 = vunpack.c.h.b16 %v4135
        %v4689 = vunpack.c.l.b16 %v4136
        %v4690 = vunpack.c.h.b16 %v4136
        %v4691 = vunpack.c.l.b16 %v4137
        %v4692 = vunpack.c.h.b16 %v4137
        %v4693 = vunpack.c.l.b16 %v4138
        %v4694 = vunpack.c.h.b16 %v4138
        %v4695 = vunpack.c.l.b16 %v4139
        %v4696 = vunpack.c.h.b16 %v4139
        %v4697 = vunpack.c.l.b16 %v4140
        %v4698 = vunpack.c.h.b16 %v4140
        %v4699 = vunpack.c.l.b16 %v4141
        %v4700 = vunpack.c.h.b16 %v4141
        %v4701 = vunpack.c.l.b16 %v4142
        %v4702 = vunpack.c.h.b16 %v4142
        %v4703 = vunpack.c.l.b16 %v4143
        %v4704 = vunpack.c.h.b16 %v4143
        %v4705 = vunpack.c.l.b16 %v4144
        %v4706 = vunpack.c.h.b16 %v4144
        %v4707 = vunpack.c.l.b16 %v4145
        %v4708 = vunpack.c.h.b16 %v4145
        %v4709 = vunpack.c.l.b16 %v4146
        %v4710 = vunpack.c.h.b16 %v4146
        %v4711 = vunpack.c.l.b16 %v4147
        %v4712 = vunpack.c.h.b16 %v4147
        %v4713 = vunpack.c.l.b16 %v4148
        %v4714 = vunpack.c.h.b16 %v4148
        %v4715 = vunpack.c.l.b16 %v4149
        %v4716 = vunpack.c.h.b16 %v4149
        %v4717 = vunpack.c.l.b16 %v4150
        %v4718 = vunpack.c.h.b16 %v4150
        %v4719 = vunpack.c.l.b16 %v4151
        %v4720 = vunpack.c.h.b16 %v4151
        %v4721 = vunpack.c.l.b16 %v4152
        %v4722 = vunpack.c.h.b16 %v4152
        %v4723 = vunpack.c.l.b16 %v4153
        %v4724 = vunpack.c.h.b16 %v4153
        %v4725 = vunpack.c.l.b16 %v4154
        %v4726 = vunpack.c.h.b16 %v4154
        %v4727 = vunpack.c.l.b16 %v4155
        %v4728 = vunpack.c.h.b16 %v4155
        %v4729 = vunpack.c.l.b16 %v4156
        %v4730 = vunpack.c.h.b16 %v4156
        %v4731 = vunpack.c.l.b16 %v4157
        %v4732 = vunpack.c.h.b16 %v4157
        %v4733 = vunpack.c.l.b16 %v4158
        %v4734 = vunpack.c.h.b16 %v4158
        %v4735 = vunpack.c.l.b16 %v4159
        %v4736 = vunpack.c.h.b16 %v4159
        %v4737 = vunpack.c.l.b16 %v4160
        %v4738 = vunpack.c.h.b16 %v4160
        %v4739 = vunpack.c.l.b16 %v4161
        %v4740 = vunpack.c.h.b16 %v4161
        %v4741 = vunpack.c.l.b16 %v4162
        %v4742 = vunpack.c.h.b16 %v4162
        %v4743 = vunpack.c.l.b16 %v4163
        %v4744 = vunpack.c.h.b16 %v4163
        %v4745 = vunpack.c.l.b16 %v4164
        %v4746 = vunpack.c.h.b16 %v4164
        %v4747 = vunpack.c.l.b16 %v4165
        %v4748 = vunpack.c.h.b16 %v4165
        %v4749 = vunpack.c.l.b16 %v4166
        %v4750 = vunpack.c.h.b16 %v4166
        %v4751 = vunpack.c.l.b16 %v4167
        %v4752 = vunpack.c.h.b16 %v4167
        %v4753 = vunpack.c.l.b16 %v4168
        %v4754 = vunpack.c.h.b16 %v4168
        %v4755 = vunpack.c.l.b16 %v4169
        %v4756 = vunpack.c.h.b16 %v4169
        %v4757 = vunpack.c.l.b16 %v4170
        %v4758 = vunpack.c.h.b16 %v4170
        %v4759 = vunpack.c.l.b16 %v4171
        %v4760 = vunpack.c.h.b16 %v4171
        %v4761 = vunpack.c.l.b16 %v4172
        %v4762 = vunpack.c.h.b16 %v4172
        %v4763 = vunpack.c.l.b16 %v4173
        %v4764 = vunpack.c.h.b16 %v4173
        %v4765 = vunpack.c.l.b16 %v4174
        %v4766 = vunpack.c.h.b16 %v4174
        %v4767 = vunpack.c.l.b16 %v4175
        %v4768 = vunpack.c.h.b16 %v4175
        %v4769 = vunpack.c.l.b16 %v4176
        %v4770 = vunpack.c.h.b16 %v4176
        %v4771 = vunpack.c.l.b16 %v4177
        %v4772 = vunpack.c.h.b16 %v4177
        %v4773 = vunpack.c.l.b16 %v4178
        %v4774 = vunpack.c.h.b16 %v4178
        %v4775 = vunpack.c.l.b16 %v4179
        %v4776 = vunpack.c.h.b16 %v4179
        %v4777 = vunpack.c.l.b16 %v4180
        %v4778 = vunpack.c.h.b16 %v4180
        %v4779 = vunpack.c.l.b16 %v4181
        %v4780 = vunpack.c.h.b16 %v4181
        %v4781 = vunpack.c.l.b16 %v4182
        %v4782 = vunpack.c.h.b16 %v4182
        %v4783 = vunpack.c.l.b16 %v4183
        %v4784 = vunpack.c.h.b16 %v4183
        %v4785 = vunpack.c.l.b16 %v4184
        %v4786 = vunpack.c.h.b16 %v4184
        %v4787 = vunpack.c.l.b16 %v4185
        %v4788 = vunpack.c.h.b16 %v4185
        %v4789 = vunpack.c.l.b16 %v4186
        %v4790 = vunpack.c.h.b16 %v4186
        %v4791 = vunpack.c.l.b16 %v4187
        %v4792 = vunpack.c.h.b16 %v4187
        %v4793 = vunpack.c.l.b16 %v4188
        %v4794 = vunpack.c.h.b16 %v4188
        %v4795 = vunpack.c.l.b16 %v4189
        %v4796 = vunpack.c.h.b16 %v4189
        %v4797 = vunpack.c.l.b16 %v4190
        %v4798 = vunpack.c.h.b16 %v4190
        %v4799 = vunpack.c.l.b16 %v4191
        %v4800 = vunpack.c.h.b16 %v4191
        %v4801 = vunpack.c.l.b16 %v4192
        %v4802 = vunpack.c.h.b16 %v4192
        %v4803 = vunpack.c.l.b16 %v4193
        %v4804 = vunpack.c.h.b16 %v4193
        %v4805 = vunpack.c.l.b16 %v4194
        %v4806 = vunpack.c.h.b16 %v4194
        %v4807 = vunpack.c.l.b16 %v4195
        %v4808 = vunpack.c.h.b16 %v4195
        %v4809 = vunpack.c.l.b16 %v4196
        %v4810 = vunpack.c.h.b16 %v4196
        %v4811 = vunpack.c.l.b16 %v4197
        %v4812 = vunpack.c.h.b16 %v4197
        %v4813 = vunpack.c.l.b16 %v4198
        %v4814 = vunpack.c.h.b16 %v4198
        %v4815 = vunpack.c.l.b16 %v4199
        %v4816 = vunpack.c.h.b16 %v4199
        %v4817 = vunpack.c.l.b16 %v4200
        %v4818 = vunpack.c.h.b16 %v4200
        %v4819 = vunpack.c.l.b16 %v4201
        %v4820 = vunpack.c.h.b16 %v4201
        %v4821 = vunpack.c.l.b16 %v4202
        %v4822 = vunpack.c.h.b16 %v4202
        %v4823 = vunpack.c.l.b16 %v4203
        %v4824 = vunpack.c.h.b16 %v4203
        %v4825 = vunpack.c.l.b16 %v4204
        %v4826 = vunpack.c.h.b16 %v4204
        %v4827 = vunpack.c.l.b16 %v4205
        %v4828 = vunpack.c.h.b16 %v4205
        %v4829 = vunpack.c.l.b16 %v4206
        %v4830 = vunpack.c.h.b16 %v4206
        %v4831 = vunpack.c.l.b16 %v4207
        %v4832 = vunpack.c.h.b16 %v4207
        %v4833 = vunpack.c.l.b16 %v4208
        %v4834 = vunpack.c.h.b16 %v4208
        %v4835 = vunpack.c.l.b16 %v4209
        %v4836 = vunpack.c.h.b16 %v4209
        %v4837 = vunpack.c.l.b16 %v4210
        %v4838 = vunpack.c.h.b16 %v4210
        %v4839 = vunpack.c.l.b16 %v4211
        %v4840 = vunpack.c.h.b16 %v4211
        %v4841 = vunpack.c.l.b16 %v4212
        %v4842 = vunpack.c.h.b16 %v4212
        %v4843 = vunpack.c.l.b16 %v4213
        %v4844 = vunpack.c.h.b16 %v4213
        %v4845 = vunpack.c.l.b16 %v4214
        %v4846 = vunpack.c.h.b16 %v4214
        %v4847 = vunpack.c.l.b16 %v4215
        %v4848 = vunpack.c.h.b16 %v4215
        %v4849 = vunpack.c.l.b16 %v4216
        %v4850 = vunpack.c.h.b16 %v4216
        %v4851 = vunpack.c.l.b16 %v4217
        %v4852 = vunpack.c.h.b16 %v4217
        %v4853 = vunpack.c.l.b16 %v4218
        %v4854 = vunpack.c.h.b16 %v4218
        %v4855 = vunpack.c.l.b16 %v4219
        %v4856 = vunpack.c.h.b16 %v4219
        %v4857 = vunpack.c.l.b16 %v4220
        %v4858 = vunpack.c.h.b16 %v4220
        %v4859 = vunpack.c.l.b16 %v4221
        %v4860 = vunpack.c.h.b16 %v4221
        %v4861 = vunpack.c.l.b16 %v4222
        %v4862 = vunpack.c.h.b16 %v4222
        %v4863 = vunpack.c.l.b16 %v4223
        %v4864 = vunpack.c.h.b16 %v4223
        %v4865 = vunpack.c.l.b16 %v4224
        %v4866 = vunpack.c.h.b16 %v4224
        %v4867 = vunpack.c.l.b16 %v4225
        %v4868 = vunpack.c.h.b16 %v4225
        %v4869 = vunpack.c.l.b16 %v4226
        %v4870 = vunpack.c.h.b16 %v4226
        %v4871 = vunpack.c.l.b16 %v4227
        %v4872 = vunpack.c.h.b16 %v4227
        %v4873 = vunpack.c.l.b16 %v4228
        %v4874 = vunpack.c.h.b16 %v4228
        %v4875 = vunpack.c.l.b16 %v4229
        %v4876 = vunpack.c.h.b16 %v4229
        %v4877 = vunpack.c.l.b16 %v4230
        %v4878 = vunpack.c.h.b16 %v4230
        %v4879 = vunpack.c.l.b16 %v4231
        %v4880 = vunpack.c.h.b16 %v4231
        %v4881 = vunpack.c.l.b16 %v4232
        %v4882 = vunpack.c.h.b16 %v4232
        %v4883 = vunpack.c.l.b16 %v4233
        %v4884 = vunpack.c.h.b16 %v4233
        %v4885 = vunpack.c.l.b16 %v4234
        %v4886 = vunpack.c.h.b16 %v4234
        %v4887 = vunpack.c.l.b16 %v4235
        %v4888 = vunpack.c.h.b16 %v4235
        %v4889 = vunpack.c.l.b16 %v4236
        %v4890 = vunpack.c.h.b16 %v4236
        %v4891 = vunpack.c.l.b16 %v4237
        %v4892 = vunpack.c.h.b16 %v4237
        %v4893 = vunpack.c.l.b16 %v4238
        %v4894 = vunpack.c.h.b16 %v4238
        %v4895 = vunpack.c.l.b16 %v4239
        %v4896 = vunpack.c.h.b16 %v4239
        %v4897 = vunpack.c.l.b16 %v4240
        %v4898 = vunpack.c.h.b16 %v4240
        %v4899 = vunpack.c.l.b16 %v4241
        %v4900 = vunpack.c.h.b16 %v4241
        %v4901 = vunpack.c.l.b16 %v4242
        %v4902 = vunpack.c.h.b16 %v4242
        %v4903 = vunpack.c.l.b16 %v4243
        %v4904 = vunpack.c.h.b16 %v4243
        %v4905 = vunpack.c.l.b16 %v4244
        %v4906 = vunpack.c.h.b16 %v4244
        %v4907 = vunpack.c.l.b16 %v4245
        %v4908 = vunpack.c.h.b16 %v4245
        %v4909 = vunpack.c.l.b16 %v4246
        %v4910 = vunpack.c.h.b16 %v4246
        %v4911 = vunpack.c.l.b16 %v4247
        %v4912 = vunpack.c.h.b16 %v4247
        %v4913 = vunpack.c.l.b16 %v4248
        %v4914 = vunpack.c.h.b16 %v4248
        %v4915 = vunpack.c.l.b16 %v4249
        %v4916 = vunpack.c.h.b16 %v4249
        %v4917 = vunpack.c.l.b16 %v4250
        %v4918 = vunpack.c.h.b16 %v4250
        %v4919 = vunpack.c.l.b16 %v4251
        %v4920 = vunpack.c.h.b16 %v4251
        %v4921 = vunpack.c.l.b16 %v4252
        %v4922 = vunpack.c.h.b16 %v4252
        %v4923 = vunpack.c.l.b16 %v4253
        %v4924 = vunpack.c.h.b16 %v4253
        %v4925 = vunpack.c.l.b16 %v4254
        %v4926 = vunpack.c.h.b16 %v4254
        %v4927 = vunpack.c.l.b16 %v4255
        %v4928 = vunpack.c.h.b16 %v4255
        %v4929 = vunpack.c.l.b16 %v4256
        %v4930 = vunpack.c.h.b16 %v4256
        %v4931 = vunpack.c.l.b16 %v4257
        %v4932 = vunpack.c.h.b16 %v4257
        %v4933 = vunpack.c.l.b16 %v4258
        %v4934 = vunpack.c.h.b16 %v4258
        %v4935 = vunpack.c.l.b16 %v4259
        %v4936 = vunpack.c.h.b16 %v4259
        %v4937 = vunpack.c.l.b16 %v4260
        %v4938 = vunpack.c.h.b16 %v4260
        %v4939 = vunpack.c.l.b16 %v4261
        %v4940 = vunpack.c.h.b16 %v4261
        %v4941 = vunpack.c.l.b16 %v4262
        %v4942 = vunpack.c.h.b16 %v4262
        %v4943 = vunpack.c.l.b16 %v4263
        %v4944 = vunpack.c.h.b16 %v4263
        %v4945 = vunpack.c.l.b16 %v4264
        %v4946 = vunpack.c.h.b16 %v4264
        %v4947 = vunpack.c.l.b16 %v4265
        %v4948 = vunpack.c.h.b16 %v4265
        %v4949 = vunpack.c.l.b16 %v4266
        %v4950 = vunpack.c.h.b16 %v4266
        %v4951 = vunpack.c.l.b16 %v4267
        %v4952 = vunpack.c.h.b16 %v4267
        %v4953 = vunpack.c.l.b16 %v4268
        %v4954 = vunpack.c.h.b16 %v4268
        %v4955 = vunpack.c.l.b16 %v4269
        %v4956 = vunpack.c.h.b16 %v4269
        %v4957 = vunpack.c.l.b16 %v4270
        %v4958 = vunpack.c.h.b16 %v4270
        %v4959 = vunpack.c.l.b16 %v4271
        %v4960 = vunpack.c.h.b16 %v4271
        %v4961 = vunpack.c.l.b16 %v4272
        %v4962 = vunpack.c.h.b16 %v4272
        %v4963 = vunpack.c.l.b16 %v4273
        %v4964 = vunpack.c.h.b16 %v4273
        %v4965 = vunpack.c.l.b16 %v4274
        %v4966 = vunpack.c.h.b16 %v4274
        %v4967 = vunpack.c.l.b16 %v4275
        %v4968 = vunpack.c.h.b16 %v4275
        %v4969 = vunpack.c.l.b16 %v4276
        %v4970 = vunpack.c.h.b16 %v4276
        %v4971 = vunpack.c.l.b16 %v4277
        %v4972 = vunpack.c.h.b16 %v4277
        %v4973 = vunpack.c.l.b16 %v4278
        %v4974 = vunpack.c.h.b16 %v4278
        %v4975 = vunpack.c.l.b16 %v4279
        %v4976 = vunpack.c.h.b16 %v4279
        %v4977 = vunpack.c.l.b16 %v4280
        %v4978 = vunpack.c.h.b16 %v4280
        %v4979 = vunpack.c.l.b16 %v4281
        %v4980 = vunpack.c.h.b16 %v4281
        %v4981 = vunpack.c.l.b16 %v4282
        %v4982 = vunpack.c.h.b16 %v4282
        %v4983 = vunpack.c.l.b16 %v4283
        %v4984 = vunpack.c.h.b16 %v4283
        %v4985 = vunpack.c.l.b16 %v4284
        %v4986 = vunpack.c.h.b16 %v4284
        %v4987 = vunpack.c.l.b16 %v4285
        %v4988 = vunpack.c.h.b16 %v4285
        %v4989 = vunpack.c.l.b16 %v4286
        %v4990 = vunpack.c.h.b16 %v4286
        %v4991 = vunpack.c.l.b16 %v4287
        %v4992 = vunpack.c.h.b16 %v4287
        %v4993 = vunpack.c.l.b16 %v4288
        %v4994 = vunpack.c.h.b16 %v4288
        %v4995 = vunpack.c.l.b16 %v4289
        %v4996 = vunpack.c.h.b16 %v4289
        %v4997 = vunpack.c.l.b16 %v4290
        %v4998 = vunpack.c.h.b16 %v4290
        %v4999 = vunpack.c.l.b16 %v4291
        %v5000 = vunpack.c.h.b16 %v4291
        %v5001 = vunpack.c.l.b16 %v4292
        %v5002 = vunpack.c.h.b16 %v4292
        %v5003 = vunpack.c.l.b16 %v4293
        %v5004 = vunpack.c.h.b16 %v4293
        %v5005 = vunpack.c.l.b16 %v4294
        %v5006 = vunpack.c.h.b16 %v4294
        %v5007 = vunpack.c.l.b16 %v4295
        %v5008 = vunpack.c.h.b16 %v4295
        %v5009 = vunpack.c.l.b16 %v4296
        %v5010 = vunpack.c.h.b16 %v4296
        %v5011 = vunpack.c.l.b16 %v4297
        %v5012 = vunpack.c.h.b16 %v4297
        %v5013 = vunpack.c.l.b16 %v4298
        %v5014 = vunpack.c.h.b16 %v4298
        %v5015 = vunpack.c.l.b16 %v4299
        %v5016 = vunpack.c.h.b16 %v4299
        %v5017 = vunpack.c.l.b16 %v4300
        %v5018 = vunpack.c.h.b16 %v4300
        %v5019 = vunpack.c.l.b16 %v4301
        %v5020 = vunpack.c.h.b16 %v4301
        %v5021 = vunpack.c.l.b16 %v4302
        %v5022 = vunpack.c.h.b16 %v4302
        %v5023 = vunpack.c.l.b16 %v4303
        %v5024 = vunpack.c.h.b16 %v4303
        %v5025 = vunpack.c.l.b16 %v4304
        %v5026 = vunpack.c.h.b16 %v4304
        %v5027 = vunpack.c.l.b16 %v4305
        %v5028 = vunpack.c.h.b16 %v4305
        %v5029 = vunpack.c.l.b16 %v4306
        %v5030 = vunpack.c.h.b16 %v4306
        %v5031 = vunpack.c.l.b16 %v4307
        %v5032 = vunpack.c.h.b16 %v4307
        %v5033 = vunpack.c.l.b16 %v4308
        %v5034 = vunpack.c.h.b16 %v4308
        %v5035 = vunpack.c.l.b16 %v4309
        %v5036 = vunpack.c.h.b16 %v4309
        %v5037 = vunpack.c.l.b16 %v4310
        %v5038 = vunpack.c.h.b16 %v4310
        %v5039 = vunpack.c.l.b16 %v4311
        %v5040 = vunpack.c.h.b16 %v4311
        %v5041 = vunpack.c.l.b16 %v4312
        %v5042 = vunpack.c.h.b16 %v4312
        %v5043 = vunpack.c.l.b16 %v4313
        %v5044 = vunpack.c.h.b16 %v4313
        %v5045 = vunpack.c.l.b16 %v4314
        %v5046 = vunpack.c.h.b16 %v4314
        %v5047 = vunpack.c.l.b16 %v4315
        %v5048 = vunpack.c.h.b16 %v4315
        %v5049 = vunpack.c.l.b16 %v4316
        %v5050 = vunpack.c.h.b16 %v4316
        %v5051 = vunpack.c.l.b16 %v4317
        %v5052 = vunpack.c.h.b16 %v4317
        %v5053 = vunpack.c.l.b16 %v4318
        %v5054 = vunpack.c.h.b16 %v4318
        %v5055 = vunpack.c.l.b16 %v4319
        %v5056 = vunpack.c.h.b16 %v4319
        %v5057 = vunpack.c.l.b16 %v4320
        %v5058 = vunpack.c.h.b16 %v4320
        %v5059 = vunpack.c.l.b16 %v4321
        %v5060 = vunpack.c.h.b16 %v4321
        %v5061 = vunpack.c.l.b16 %v4322
        %v5062 = vunpack.c.h.b16 %v4322
        %v5063 = vunpack.c.l.b16 %v4323
        %v5064 = vunpack.c.h.b16 %v4323
        %v5065 = vunpack.c.l.b16 %v4324
        %v5066 = vunpack.c.h.b16 %v4324
        %v5067 = vunpack.c.l.b16 %v4325
        %v5068 = vunpack.c.h.b16 %v4325
        %v5069 = vunpack.c.l.b16 %v4326
        %v5070 = vunpack.c.h.b16 %v4326
        %v5071 = vunpack.c.l.b16 %v4327
        %v5072 = vunpack.c.h.b16 %v4327
        %v5073 = vunpack.c.l.b16 %v4328
        %v5074 = vunpack.c.h.b16 %v4328
        %v5075 = vunpack.c.l.b16 %v4329
        %v5076 = vunpack.c.h.b16 %v4329
        %v5077 = vunpack.c.l.b16 %v4330
        %v5078 = vunpack.c.h.b16 %v4330
        %v5079 = vunpack.c.l.b16 %v4331
        %v5080 = vunpack.c.h.b16 %v4331
        %v5081 = vunpack.c.l.b16 %v4332
        %v5082 = vunpack.c.h.b16 %v4332
        %v5083 = vunpack.c.l.b16 %v4333
        %v5084 = vunpack.c.h.b16 %v4333
        %v5085 = vunpack.c.l.b16 %v4334
        %v5086 = vunpack.c.h.b16 %v4334
        %v5087 = vunpack.c.l.b16 %v4335
        %v5088 = vunpack.c.h.b16 %v4335
        %v5089 = vunpack.c.l.b16 %v4336
        %v5090 = vunpack.c.h.b16 %v4336
        %v5091 = vunpack.c.l.b16 %v4337
        %v5092 = vunpack.c.h.b16 %v4337
        %v5093 = vunpack.c.l.b16 %v4338
        %v5094 = vunpack.c.h.b16 %v4338
        %v5095 = vunpack.c.l.b16 %v4339
        %v5096 = vunpack.c.h.b16 %v4339
        %v5097 = vunpack.c.l.b16 %v4340
        %v5098 = vunpack.c.h.b16 %v4340
        %v5099 = vunpack.c.l.b16 %v4341
        %v5100 = vunpack.c.h.b16 %v4341
        %v5101 = vunpack.c.l.b16 %v4342
        %v5102 = vunpack.c.h.b16 %v4342
        %v5103 = vunpack.c.l.b16 %v4343
        %v5104 = vunpack.c.h.b16 %v4343
        %v5105 = vunpack.c.l.b16 %v4344
        %v5106 = vunpack.c.h.b16 %v4344
        %v5107 = vunpack.c.l.b16 %v4345
        %v5108 = vunpack.c.h.b16 %v4345
        %v5109 = vunpack.c.l.b16 %v4346
        %v5110 = vunpack.c.h.b16 %v4346
        %v5111 = vunpack.c.l.b16 %v4347
        %v5112 = vunpack.c.h.b16 %v4347
        %v5113 = vunpack.c.l.b16 %v4348
        %v5114 = vunpack.c.h.b16 %v4348
        %v5115 = vunpack.c.l.b16 %v4349
        %v5116 = vunpack.c.h.b16 %v4349
        %v5117 = vunpack.c.l.b16 %v4350
        %v5118 = vunpack.c.h.b16 %v4350
        %v5119 = vunpack.c.l.b16 %v4351
        %v5120 = vunpack.c.h.b16 %v4351
        %v5121 = vunpack.c.l.b16 %v4352
        %v5122 = vunpack.c.h.b16 %v4352
        %v5123 = vunpack.c.l.b16 %v4353
        %v5124 = vunpack.c.h.b16 %v4353
        %v5125 = vunpack.c.l.b16 %v4354
        %v5126 = vunpack.c.h.b16 %v4354
        %v5127 = vunpack.c.l.b16 %v4355
        %v5128 = vunpack.c.h.b16 %v4355
        %v5129 = vunpack.c.l.b16 %v4356
        %v5130 = vunpack.c.h.b16 %v4356
        %v5131 = vunpack.c.l.b16 %v4357
        %v5132 = vunpack.c.h.b16 %v4357
        %v5133 = vunpack.c.l.b16 %v4358
        %v5134 = vunpack.c.h.b16 %v4358
        %v5135 = vunpack.c.l.b16 %v4359
        %v5136 = vunpack.c.h.b16 %v4359
        %v5137 = vunpack.c.l.b16 %v4360
        %v5138 = vunpack.c.h.b16 %v4360
        %v5139 = vunpack.c.l.b16 %v4361
        %v5140 = vunpack.c.h.b16 %v4361
        %v5141 = vunpack.c.l.b16 %v4362
        %v5142 = vunpack.c.h.b16 %v4362
        %v5143 = vunpack.c.l.b16 %v4363
        %v5144 = vunpack.c.h.b16 %v4363
        %v5145 = vunpack.c.l.b16 %v4364
        %v5146 = vunpack.c.h.b16 %v4364
        %v5147 = vunpack.c.l.b16 %v4365
        %v5148 = vunpack.c.h.b16 %v4365
        %v5149 = vunpack.c.l.b16 %v4366
        %v5150 = vunpack.c.h.b16 %v4366
        %v5151 = vunpack.c.l.b16 %v4367
        %v5152 = vunpack.c.h.b16 %v4367
        %v5153 = vunpack.c.l.b16 %v4368
        %v5154 = vunpack.c.h.b16 %v4368
        %v5155 = vunpack.c.l.b16 %v4369
        %v5156 = vunpack.c.h.b16 %v4369
        %v5157 = vunpack.c.l.b16 %v4370
        %v5158 = vunpack.c.h.b16 %v4370
        %v5159 = vunpack.c.l.b16 %v4371
        %v5160 = vunpack.c.h.b16 %v4371
        %v5161 = vunpack.c.l.b16 %v4372
        %v5162 = vunpack.c.h.b16 %v4372
        %v5163 = vpack.c.b16 %v4655, %v4651
        %v5164 = vpack.c.b16 %v4656, %v4652
        %v5165 = vpack.c.b16 %v4657, %v4653
        %v5166 = vpack.c.b16 %v4658, %v4654
        %v5167 = vpack.c.b16 %v4663, %v4659
        %v5168 = vpack.c.b16 %v4664, %v4660
        %v5169 = vpack.c.b16 %v4665, %v4661
        %v5170 = vpack.c.b16 %v4666, %v4662
        %v5171 = vpack.c.b16 %v4671, %v4667
        %v5172 = vpack.c.b16 %v4672, %v4668
        %v5173 = vpack.c.b16 %v4673, %v4669
        %v5174 = vpack.c.b16 %v4674, %v4670
        %v5175 = vpack.c.b16 %v4679, %v4675
        %v5176 = vpack.c.b16 %v4680, %v4676
        %v5177 = vpack.c.b16 %v4681, %v4677
        %v5178 = vpack.c.b16 %v4682, %v4678
        %v5179 = vpack.c.b16 %v4687, %v4683
        %v5180 = vpack.c.b16 %v4688, %v4684
        %v5181 = vpack.c.b16 %v4689, %v4685
        %v5182 = vpack.c.b16 %v4690, %v4686
        %v5183 = vpack.c.b16 %v4695, %v4691
        %v5184 = vpack.c.b16 %v4696, %v4692
        %v5185 = vpack.c.b16 %v4697, %v4693
        %v5186 = vpack.c.b16 %v4698, %v4694
        %v5187 = vpack.c.b16 %v4703, %v4699
        %v5188 = vpack.c.b16 %v4704, %v4700
        %v5189 = vpack.c.b16 %v4705, %v4701
        %v5190 = vpack.c.b16 %v4706, %v4702
        %v5191 = vpack.c.b16 %v4711, %v4707
        %v5192 = vpack.c.b16 %v4712, %v4708
        %v5193 = vpack.c.b16 %v4713, %v4709
        %v5194 = vpack.c.b16 %v4714, %v4710
        %v5195 = vpack.c.b16 %v4719, %v4715
        %v5196 = vpack.c.b16 %v4720, %v4716
        %v5197 = vpack.c.b16 %v4721, %v4717
        %v5198 = vpack.c.b16 %v4722, %v4718
        %v5199 = vpack.c.b16 %v4727, %v4723
        %v5200 = vpack.c.b16 %v4728, %v4724
        %v5201 = vpack.c.b16 %v4729, %v4725
        %v5202 = vpack.c.b16 %v4730, %v4726
        %v5203 = vpack.c.b16 %v4735, %v4731
        %v5204 = vpack.c.b16 %v4736, %v4732
        %v5205 = vpack.c.b16 %v4737, %v4733
        %v5206 = vpack.c.b16 %v4738, %v4734
        %v5207 = vpack.c.b16 %v4743, %v4739
        %v5208 = vpack.c.b16 %v4744, %v4740
        %v5209 = vpack.c.b16 %v4745, %v4741
        %v5210 = vpack.c.b16 %v4746, %v4742
        %v5211 = vpack.c.b16 %v4751, %v4747
        %v5212 = vpack.c.b16 %v4752, %v4748
        %v5213 = vpack.c.b16 %v4753, %v4749
        %v5214 = vpack.c.b16 %v4754, %v4750
        %v5215 = vpack.c.b16 %v4759, %v4755
        %v5216 = vpack.c.b16 %v4760, %v4756
        %v5217 = vpack.c.b16 %v4761, %v4757
        %v5218 = vpack.c.b16 %v4762, %v4758
        %v5219 = vpack.c.b16 %v4767, %v4763
        %v5220 = vpack.c.b16 %v4768, %v4764
        %v5221 = vpack.c.b16 %v4769, %v4765
        %v5222 = vpack.c.b16 %v4770, %v4766
        %v5223 = vpack.c.b16 %v4775, %v4771
        %v5224 = vpack.c.b16 %v4776, %v4772
        %v5225 = vpack.c.b16 %v4777, %v4773
        %v5226 = vpack.c.b16 %v4778, %v4774
        %v5227 = vpack.c.b16 %v4783, %v4779
        %v5228 = vpack.c.b16 %v4784, %v4780
        %v5229 = vpack.c.b16 %v4785, %v4781
        %v5230 = vpack.c.b16 %v4786, %v4782
        %v5231 = vpack.c.b16 %v4791, %v4787
        %v5232 = vpack.c.b16 %v4792, %v4788
        %v5233 = vpack.c.b16 %v4793, %v4789
        %v5234 = vpack.c.b16 %v4794, %v4790
        %v5235 = vpack.c.b16 %v4799, %v4795
        %v5236 = vpack.c.b16 %v4800, %v4796
        %v5237 = vpack.c.b16 %v4801, %v4797
        %v5238 = vpack.c.b16 %v4802, %v4798
        %v5239 = vpack.c.b16 %v4807, %v4803
        %v5240 = vpack.c.b16 %v4808, %v4804
        %v5241 = vpack.c.b16 %v4809, %v4805
        %v5242 = vpack.c.b16 %v4810, %v4806
        %v5243 = vpack.c.b16 %v4815, %v4811
        %v5244 = vpack.c.b16 %v4816, %v4812
        %v5245 = vpack.c.b16 %v4817, %v4813
        %v5246 = vpack.c.b16 %v4818, %v4814
        %v5247 = vpack.c.b16 %v4823, %v4819
        %v5248 = vpack.c.b16 %v4824, %v4820
        %v5249 = vpack.c.b16 %v4825, %v4821
        %v5250 = vpack.c.b16 %v4826, %v4822
        %v5251 = vpack.c.b16 %v4831, %v4827
        %v5252 = vpack.c.b16 %v4832, %v4828
        %v5253 = vpack.c.b16 %v4833, %v4829
        %v5254 = vpack.c.b16 %v4834, %v4830
        %v5255 = vpack.c.b16 %v4839, %v4835
        %v5256 = vpack.c.b16 %v4840, %v4836
        %v5257 = vpack.c.b16 %v4841, %v4837
        %v5258 = vpack.c.b16 %v4842, %v4838
        %v5259 = vpack.c.b16 %v4847, %v4843
        %v5260 = vpack.c.b16 %v4848, %v4844
        %v5261 = vpack.c.b16 %v4849, %v4845
        %v5262 = vpack.c.b16 %v4850, %v4846
        %v5263 = vpack.c.b16 %v4855, %v4851
        %v5264 = vpack.c.b16 %v4856, %v4852
        %v5265 = vpack.c.b16 %v4857, %v4853
        %v5266 = vpack.c.b16 %v4858, %v4854
        %v5267 = vpack.c.b16 %v4863, %v4859
        %v5268 = vpack.c.b16 %v4864, %v4860
        %v5269 = vpack.c.b16 %v4865, %v4861
        %v5270 = vpack.c.b16 %v4866, %v4862
        %v5271 = vpack.c.b16 %v4871, %v4867
        %v5272 = vpack.c.b16 %v4872, %v4868
        %v5273 = vpack.c.b16 %v4873, %v4869
        %v5274 = vpack.c.b16 %v4874, %v4870
        %v5275 = vpack.c.b16 %v4879, %v4875
        %v5276 = vpack.c.b16 %v4880, %v4876
        %v5277 = vpack.c.b16 %v4881, %v4877
        %v5278 = vpack.c.b16 %v4882, %v4878
        %v5279 = vpack.c.b16 %v4887, %v4883
        %v5280 = vpack.c.b16 %v4888, %v4884
        %v5281 = vpack.c.b16 %v4889, %v4885
        %v5282 = vpack.c.b16 %v4890, %v4886
        %v5283 = vpack.c.b16 %v4895, %v4891
        %v5284 = vpack.c.b16 %v4896, %v4892
        %v5285 = vpack.c.b16 %v4897, %v4893
        %v5286 = vpack.c.b16 %v4898, %v4894
        %v5287 = vpack.c.b16 %v4903, %v4899
        %v5288 = vpack.c.b16 %v4904, %v4900
        %v5289 = vpack.c.b16 %v4905, %v4901
        %v5290 = vpack.c.b16 %v4906, %v4902
        %v5291 = vpack.c.b16 %v4911, %v4907
        %v5292 = vpack.c.b16 %v4912, %v4908
        %v5293 = vpack.c.b16 %v4913, %v4909
        %v5294 = vpack.c.b16 %v4914, %v4910
        %v5295 = vpack.c.b16 %v4919, %v4915
        %v5296 = vpack.c.b16 %v4920, %v4916
        %v5297 = vpack.c.b16 %v4921, %v4917
        %v5298 = vpack.c.b16 %v4922, %v4918
        %v5299 = vpack.c.b16 %v4927, %v4923
        %v5300 = vpack.c.b16 %v4928, %v4924
        %v5301 = vpack.c.b16 %v4929, %v4925
        %v5302 = vpack.c.b16 %v4930, %v4926
        %v5303 = vpack.c.b16 %v4935, %v4931
        %v5304 = vpack.c.b16 %v4936, %v4932
        %v5305 = vpack.c.b16 %v4937, %v4933
        %v5306 = vpack.c.b16 %v4938, %v4934
        %v5307 = vpack.c.b16 %v4943, %v4939
        %v5308 = vpack.c.b16 %v4944, %v4940
        %v5309 = vpack.c.b16 %v4945, %v4941
        %v5310 = vpack.c.b16 %v4946, %v4942
        %v5311 = vpack.c.b16 %v4951, %v4947
        %v5312 = vpack.c.b16 %v4952, %v4948
        %v5313 = vpack.c.b16 %v4953, %v4949
        %v5314 = vpack.c.b16 %v4954, %v4950
        %v5315 = vpack.c.b16 %v4959, %v4955
        %v5316 = vpack.c.b16 %v4960, %v4956
        %v5317 = vpack.c.b16 %v4961, %v4957
        %v5318 = vpack.c.b16 %v4962, %v4958
        %v5319 = vpack.c.b16 %v4967, %v4963
        %v5320 = vpack.c.b16 %v4968, %v4964
        %v5321 = vpack.c.b16 %v4969, %v4965
        %v5322 = vpack.c.b16 %v4970, %v4966
        %v5323 = vpack.c.b16 %v4975, %v4971
        %v5324 = vpack.c.b16 %v4976, %v4972
        %v5325 = vpack.c.b16 %v4977, %v4973
        %v5326 = vpack.c.b16 %v4978, %v4974
        %v5327 = vpack.c.b16 %v4983, %v4979
        %v5328 = vpack.c.b16 %v4984, %v4980
        %v5329 = vpack.c.b16 %v4985, %v4981
        %v5330 = vpack.c.b16 %v4986, %v4982
        %v5331 = vpack.c.b16 %v4991, %v4987
        %v5332 = vpack.c.b16 %v4992, %v4988
        %v5333 = vpack.c.b16 %v4993, %v4989
        %v5334 = vpack.c.b16 %v4994, %v4990
        %v5335 = vpack.c.b16 %v4999, %v4995
        %v5336 = vpack.c.b16 %v5000, %v4996
        %v5337 = vpack.c.b16 %v5001, %v4997
        %v5338 = vpack.c.b16 %v5002, %v4998
        %v5339 = vpack.c.b16 %v5007, %v5003
        %v5340 = vpack.c.b16 %v5008, %v5004
        %v5341 = vpack.c.b16 %v5009, %v5005
        %v5342 = vpack.c.b16 %v5010, %v5006
        %v5343 = vpack.c.b16 %v5015, %v5011
        %v5344 = vpack.c.b16 %v5016, %v5012
        %v5345 = vpack.c.b16 %v5017, %v5013
        %v5346 = vpack.c.b16 %v5018, %v5014
        %v5347 = vpack.c.b16 %v5023, %v5019
        %v5348 = vpack.c.b16 %v5024, %v5020
        %v5349 = vpack.c.b16 %v5025, %v5021
        %v5350 = vpack.c.b16 %v5026, %v5022
        %v5351 = vpack.c.b16 %v5031, %v5027
        %v5352 = vpack.c.b16 %v5032, %v5028
        %v5353 = vpack.c.b16 %v5033, %v5029
        %v5354 = vpack.c.b16 %v5034, %v5030
        %v5355 = vpack.c.b16 %v5039, %v5035
        %v5356 = vpack.c.b16 %v5040, %v5036
        %v5357 = vpack.c.b16 %v5041, %v5037
        %v5358 = vpack.c.b16 %v5042, %v5038
        %v5359 = vpack.c.b16 %v5047, %v5043
        %v5360 = vpack.c.b16 %v5048, %v5044
        %v5361 = vpack.c.b16 %v5049, %v5045
        %v5362 = vpack.c.b16 %v5050, %v5046
        %v5363 = vpack.c.b16 %v5055, %v5051
        %v5364 = vpack.c.b16 %v5056, %v5052
        %v5365 = vpack.c.b16 %v5057, %v5053
        %v5366 = vpack.c.b16 %v5058, %v5054
        %v5367 = vpack.c.b16 %v5063, %v5059
        %v5368 = vpack.c.b16 %v5064, %v5060
        %v5369 = vpack.c.b16 %v5065, %v5061
        %v5370 = vpack.c.b16 %v5066, %v5062
        %v5371 = vpack.c.b16 %v5071, %v5067
        %v5372 = vpack.c.b16 %v5072, %v5068
        %v5373 = vpack.c.b16 %v5073, %v5069
        %v5374 = vpack.c.b16 %v5074, %v5070
        %v5375 = vpack.c.b16 %v5079, %v5075
        %v5376 = vpack.c.b16 %v5080, %v5076
        %v5377 = vpack.c.b16 %v5081, %v5077
        %v5378 = vpack.c.b16 %v5082, %v5078
        %v5379 = vpack.c.b16 %v5087, %v5083
        %v5380 = vpack.c.b16 %v5088, %v5084
        %v5381 = vpack.c.b16 %v5089, %v5085
        %v5382 = vpack.c.b16 %v5090, %v5086
        %v5383 = vpack.c.b16 %v5095, %v5091
        %v5384 = vpack.c.b16 %v5096, %v5092
        %v5385 = vpack.c.b16 %v5097, %v5093
        %v5386 = vpack.c.b16 %v5098, %v5094
        %v5387 = vpack.c.b16 %v5103, %v5099
        %v5388 = vpack.c.b16 %v5104, %v5100
        %v5389 = vpack.c.b16 %v5105, %v5101
        %v5390 = vpack.c.b16 %v5106, %v5102
        %v5391 = vpack.c.b16 %v5111, %v5107
        %v5392 = vpack.c.b16 %v5112, %v5108
        %v5393 = vpack.c.b16 %v5113, %v5109
        %v5394 = vpack.c.b16 %v5114, %v5110
        %v5395 = vpack.c.b16 %v5119, %v5115
        %v5396 = vpack.c.b16 %v5120, %v5116
        %v5397 = vpack.c.b16 %v5121, %v5117
        %v5398 = vpack.c.b16 %v5122, %v5118
        %v5399 = vpack.c.b16 %v5127, %v5123
        %v5400 = vpack.c.b16 %v5128, %v5124
        %v5401 = vpack.c.b16 %v5129, %v5125
        %v5402 = vpack.c.b16 %v5130, %v5126
        %v5403 = vpack.c.b16 %v5135, %v5131
        %v5404 = vpack.c.b16 %v5136, %v5132
        %v5405 = vpack.c.b16 %v5137, %v5133
        %v5406 = vpack.c.b16 %v5138, %v5134
        %v5407 = vpack.c.b16 %v5143, %v5139
        %v5408 = vpack.c.b16 %v5144, %v5140
        %v5409 = vpack.c.b16 %v5145, %v5141
        %v5410 = vpack.c.b16 %v5146, %v5142
        %v5411 = vpack.c.b16 %v5151, %v5147
        %v5412 = vpack.c.b16 %v5152, %v5148
        %v5413 = vpack.c.b16 %v5153, %v5149
        %v5414 = vpack.c.b16 %v5154, %v5150
        %v5415 = vpack.c.b16 %v5159, %v5155
        %v5416 = vpack.c.b16 %v5160, %v5156
        %v5417 = vpack.c.b16 %v5161, %v5157
        %v5418 = vpack.c.b16 %v5162, %v5158
        %5675 = vmatprep.subr.bf16.mxu0 %v5164
        %5676 = vmatpush1.bf16.msra.mxu0 %v5163
        %5677 = vmatprep.subr.bf16.mxu0 %v5168
        %5678 = vmatpush1.bf16.msra.mxu0 %v5167
        %5679 = vmatprep.subr.bf16.mxu0 %v5172
        %5680 = vmatpush1.bf16.msra.mxu0 %v5171
        %5681 = vmatprep.subr.bf16.mxu0 %v5176
        %5682 = vmatpush1.bf16.msra.mxu0 %v5175
        %5683 = vmatprep.subr.bf16.mxu0 %v5180
        %5684 = vmatpush1.bf16.msra.mxu0 %v5179
        %5685 = vmatprep.subr.bf16.mxu0 %v5184
        %5686 = vmatpush1.bf16.msra.mxu0 %v5183
        %5687 = vmatprep.subr.bf16.mxu0 %v5188
        %5688 = vmatpush1.bf16.msra.mxu0 %v5187
        %5689 = vmatprep.subr.bf16.mxu0 %v5192
        %5690 = vmatpush1.bf16.msra.mxu0 %v5191
        %5691 = vmatprep.subr.bf16.mxu0 %v5196
        %5692 = vmatpush1.bf16.msra.mxu0 %v5195
        %5693 = vmatprep.subr.bf16.mxu0 %v5200
        %5694 = vmatpush1.bf16.msra.mxu0 %v5199
        %5695 = vmatprep.subr.bf16.mxu0 %v5204
        %5696 = vmatpush1.bf16.msra.mxu0 %v5203
        %5697 = vmatprep.subr.bf16.mxu0 %v5208
        %5698 = vmatpush1.bf16.msra.mxu0 %v5207
        %5699 = vmatprep.subr.bf16.mxu0 %v5212
        %5700 = vmatpush1.bf16.msra.mxu0 %v5211
        %5701 = vmatprep.subr.bf16.mxu0 %v5216
        %5702 = vmatpush1.bf16.msra.mxu0 %v5215
        %5703 = vmatprep.subr.bf16.mxu0 %v5220
        %5704 = vmatpush1.bf16.msra.mxu0 %v5219
        %5705 = vmatprep.subr.bf16.mxu0 %v5224
        %5706 = vmatpush1.bf16.msra.mxu0 %v5223
        %5707 = vmatprep.mubr.bf16.mxu0 %v4110
        %5708 = vmatmul.mubr.bf16.gmra.mrb[0].mxu0 %v4109
        %v5709 = vpop.f32.mrb[0].mxu0
        %v5710 = vadd.f32 %v4378, %v5709
        %v5711 = vpop.f32.mrb[0].mxu0
        %v5712 = vadd.f32 %v4382, %v5711
        %v5713 = vpop.f32.mrb[0].mxu0
        %v5714 = vpop.f32.mrb[0].mxu0
        %5715 = vdwg.mxu0
        %5716 = vmatprep.subr.bf16.mxu0 %v5228
        %5717 = vmatpush1.bf16.msra.mxu0 %v5227
        %5718 = vmatprep.subr.bf16.mxu0 %v5232
        %5719 = vmatpush1.bf16.msra.mxu0 %v5231
        %5720 = vmatprep.subr.bf16.mxu0 %v5236
        %5721 = vmatpush1.bf16.msra.mxu0 %v5235
        %5722 = vmatprep.subr.bf16.mxu0 %v5240
        %5723 = vmatpush1.bf16.msra.mxu0 %v5239
        %5724 = vmatprep.subr.bf16.mxu0 %v5244
        %5725 = vmatpush1.bf16.msra.mxu0 %v5243
        %5726 = vmatprep.subr.bf16.mxu0 %v5248
        %5727 = vmatpush1.bf16.msra.mxu0 %v5247
        %5728 = vmatprep.subr.bf16.mxu0 %v5252
        %5729 = vmatpush1.bf16.msra.mxu0 %v5251
        %5730 = vmatprep.subr.bf16.mxu0 %v5256
        %5731 = vmatpush1.bf16.msra.mxu0 %v5255
        %5732 = vmatprep.subr.bf16.mxu0 %v5260
        %5733 = vmatpush1.bf16.msra.mxu0 %v5259
        %5734 = vmatprep.subr.bf16.mxu0 %v5264
        %5735 = vmatpush1.bf16.msra.mxu0 %v5263
        %5736 = vmatprep.subr.bf16.mxu0 %v5268
        %5737 = vmatpush1.bf16.msra.mxu0 %v5267
        %5738 = vmatprep.subr.bf16.mxu0 %v5272
        %5739 = vmatpush1.bf16.msra.mxu0 %v5271
        %5740 = vmatprep.subr.bf16.mxu0 %v5276
        %5741 = vmatpush1.bf16.msra.mxu0 %v5275
        %5742 = vmatprep.subr.bf16.mxu0 %v5280
        %5743 = vmatpush1.bf16.msra.mxu0 %v5279
        %5744 = vmatprep.subr.bf16.mxu0 %v5284
        %5745 = vmatpush1.bf16.msra.mxu0 %v5283
        %5746 = vmatprep.subr.bf16.mxu0 %v5288
        %5747 = vmatpush1.bf16.msra.mxu0 %v5287
        %5748 = vmatprep.mubr.bf16.mxu0 %v4112
        %5749 = vmatmul.mubr.bf16.gmra.mrb[0].mxu0 %v4111
        %v5750 = vpop.f32.mrb[0].mxu0
        %v5751 = vadd.f32 %v5710, %v5750
        %v5752 = vpop.f32.mrb[0].mxu0
        %v5753 = vadd.f32 %v5712, %v5752
        %v5754 = vpop.f32.mrb[0].mxu0
        %v5755 = vpop.f32.mrb[0].mxu0
        %5756 = vdwg.mxu0
        %5757 = vmatprep.subr.bf16.mxu0 %v5292
        %5758 = vmatpush1.bf16.msra.mxu0 %v5291
        %5759 = vmatprep.subr.bf16.mxu0 %v5296
        %5760 = vmatpush1.bf16.msra.mxu0 %v5295
        %5761 = vmatprep.subr.bf16.mxu0 %v5300
        %5762 = vmatpush1.bf16.msra.mxu0 %v5299
        %5763 = vmatprep.subr.bf16.mxu0 %v5304
        %5764 = vmatpush1.bf16.msra.mxu0 %v5303
        %5765 = vmatprep.subr.bf16.mxu0 %v5308
        %5766 = vmatpush1.bf16.msra.mxu0 %v5307
        %5767 = vmatprep.subr.bf16.mxu0 %v5312
        %5768 = vmatpush1.bf16.msra.mxu0 %v5311
        %5769 = vmatprep.subr.bf16.mxu0 %v5316
        %5770 = vmatpush1.bf16.msra.mxu0 %v5315
        %5771 = vmatprep.subr.bf16.mxu0 %v5320
        %5772 = vmatpush1.bf16.msra.mxu0 %v5319
        %5773 = vmatprep.subr.bf16.mxu0 %v5324
        %5774 = vmatpush1.bf16.msra.mxu0 %v5323
        %5775 = vmatprep.subr.bf16.mxu0 %v5328
        %5776 = vmatpush1.bf16.msra.mxu0 %v5327
        %5777 = vmatprep.subr.bf16.mxu0 %v5332
        %5778 = vmatpush1.bf16.msra.mxu0 %v5331
        %5779 = vmatprep.subr.bf16.mxu0 %v5336
        %5780 = vmatpush1.bf16.msra.mxu0 %v5335
        %5781 = vmatprep.subr.bf16.mxu0 %v5340
        %5782 = vmatpush1.bf16.msra.mxu0 %v5339
        %5783 = vmatprep.subr.bf16.mxu0 %v5344
        %5784 = vmatpush1.bf16.msra.mxu0 %v5343
        %5785 = vmatprep.subr.bf16.mxu0 %v5348
        %5786 = vmatpush1.bf16.msra.mxu0 %v5347
        %5787 = vmatprep.subr.bf16.mxu0 %v5352
        %5788 = vmatpush1.bf16.msra.mxu0 %v5351
        %5789 = vmatprep.mubr.bf16.mxu0 %v4114
        %5790 = vmatmul.mubr.bf16.gmra.mrb[0].mxu0 %v4113
        %v5791 = vpop.f32.mrb[0].mxu0
        %v5792 = vadd.f32 %v5751, %v5791
        %v5793 = vpop.f32.mrb[0].mxu0
        %v5794 = vadd.f32 %v5753, %v5793
        %v5795 = vpop.f32.mrb[0].mxu0
        %v5796 = vpop.f32.mrb[0].mxu0
        %5797 = vdwg.mxu0
        %5798 = vmatprep.subr.bf16.mxu0 %v5356
        %5799 = vmatpush1.bf16.msra.mxu0 %v5355
        %5800 = vmatprep.subr.bf16.mxu0 %v5360
        %5801 = vmatpush1.bf16.msra.mxu0 %v5359
        %5802 = vmatprep.subr.bf16.mxu0 %v5364
        %5803 = vmatpush1.bf16.msra.mxu0 %v5363
        %5804 = vmatprep.subr.bf16.mxu0 %v5368
        %5805 = vmatpush1.bf16.msra.mxu0 %v5367
        %5806 = vmatprep.subr.bf16.mxu0 %v5372
        %5807 = vmatpush1.bf16.msra.mxu0 %v5371
        %5808 = vmatprep.subr.bf16.mxu0 %v5376
        %5809 = vmatpush1.bf16.msra.mxu0 %v5375
        %5810 = vmatprep.subr.bf16.mxu0 %v5380
        %5811 = vmatpush1.bf16.msra.mxu0 %v5379
        %5812 = vmatprep.subr.bf16.mxu0 %v5384
        %5813 = vmatpush1.bf16.msra.mxu0 %v5383
        %5814 = vmatprep.subr.bf16.mxu0 %v5388
        %5815 = vmatpush1.bf16.msra.mxu0 %v5387
        %5816 = vmatprep.subr.bf16.mxu0 %v5392
        %5817 = vmatpush1.bf16.msra.mxu0 %v5391
        %5818 = vmatprep.subr.bf16.mxu0 %v5396
        %5819 = vmatpush1.bf16.msra.mxu0 %v5395
        %5820 = vmatprep.subr.bf16.mxu0 %v5400
        %5821 = vmatpush1.bf16.msra.mxu0 %v5399
        %5822 = vmatprep.subr.bf16.mxu0 %v5404
        %5823 = vmatpush1.bf16.msra.mxu0 %v5403
        %5824 = vmatprep.subr.bf16.mxu0 %v5408
        %5825 = vmatpush1.bf16.msra.mxu0 %v5407
        %5826 = vmatprep.subr.bf16.mxu0 %v5412
        %5827 = vmatpush1.bf16.msra.mxu0 %v5411
        %5828 = vmatprep.subr.bf16.mxu0 %v5416
        %5829 = vmatpush1.bf16.msra.mxu0 %v5415
        %5830 = vmatprep.mubr.bf16.mxu0 %v4116
        %5831 = vmatmul.mubr.bf16.gmra.mrb[0].mxu0 %v4115
        %v5832 = vpop.f32.mrb[0].mxu0
        %v5833 = vadd.f32 %v5792, %v5832
        %v5834 = vpop.f32.mrb[0].mxu0
        %v5835 = vadd.f32 %v5794, %v5834
        %v5836 = vpop.f32.mrb[0].mxu0
        %v5837 = vpop.f32.mrb[0].mxu0
        %5838 = vdwg.mxu0
        %5839 = vmatprep.subr.bf16.mxu0 %v5166
        %5840 = vmatpush1.bf16.msra.mxu0 %v5165
        %5841 = vmatprep.subr.bf16.mxu0 %v5170
        %5842 = vmatpush1.bf16.msra.mxu0 %v5169
        %5843 = vmatprep.subr.bf16.mxu0 %v5174
        %5844 = vmatpush1.bf16.msra.mxu0 %v5173
        %5845 = vmatprep.subr.bf16.mxu0 %v5178
        %5846 = vmatpush1.bf16.msra.mxu0 %v5177
        %5847 = vmatprep.subr.bf16.mxu0 %v5182
        %5848 = vmatpush1.bf16.msra.mxu0 %v5181
        %5849 = vmatprep.subr.bf16.mxu0 %v5186
        %5850 = vmatpush1.bf16.msra.mxu0 %v5185
        %5851 = vmatprep.subr.bf16.mxu0 %v5190
        %5852 = vmatpush1.bf16.msra.mxu0 %v5189
        %5853 = vmatprep.subr.bf16.mxu0 %v5194
        %5854 = vmatpush1.bf16.msra.mxu0 %v5193
        %5855 = vmatprep.subr.bf16.mxu0 %v5198
        %5856 = vmatpush1.bf16.msra.mxu0 %v5197
        %5857 = vmatprep.subr.bf16.mxu0 %v5202
        %5858 = vmatpush1.bf16.msra.mxu0 %v5201
        %5859 = vmatprep.subr.bf16.mxu0 %v5206
        %5860 = vmatpush1.bf16.msra.mxu0 %v5205
        %5861 = vmatprep.subr.bf16.mxu0 %v5210
        %5862 = vmatpush1.bf16.msra.mxu0 %v5209
        %5863 = vmatprep.subr.bf16.mxu0 %v5214
        %5864 = vmatpush1.bf16.msra.mxu0 %v5213
        %5865 = vmatprep.subr.bf16.mxu0 %v5218
        %5866 = vmatpush1.bf16.msra.mxu0 %v5217
        %5867 = vmatprep.subr.bf16.mxu0 %v5222
        %5868 = vmatpush1.bf16.msra.mxu0 %v5221
        %5869 = vmatprep.subr.bf16.mxu0 %v5226
        %5870 = vmatpush1.bf16.msra.mxu0 %v5225
        %5871 = vmatprep.mubr.bf16.mxu0 %v4110
        %5872 = vmatmul.mubr.bf16.gmra.mrb[0].mxu0 %v4109
        %v5873 = vpop.f32.mrb[0].mxu0
        %v5874 = vadd.f32 %v4386, %v5873
        %v5875 = vpop.f32.mrb[0].mxu0
        %v5876 = vadd.f32 %v4390, %v5875
        %v5877 = vpop.f32.mrb[0].mxu0
        %v5878 = vpop.f32.mrb[0].mxu0
        %5879 = vdwg.mxu0
        %5880 = vmatprep.subr.bf16.mxu0 %v5230
        %5881 = vmatpush1.bf16.msra.mxu0 %v5229
        %5882 = vmatprep.subr.bf16.mxu0 %v5234
        %5883 = vmatpush1.bf16.msra.mxu0 %v5233
        %5884 = vmatprep.subr.bf16.mxu0 %v5238
        %5885 = vmatpush1.bf16.msra.mxu0 %v5237
        %5886 = vmatprep.subr.bf16.mxu0 %v5242
        %5887 = vmatpush1.bf16.msra.mxu0 %v5241
        %5888 = vmatprep.subr.bf16.mxu0 %v5246
        %5889 = vmatpush1.bf16.msra.mxu0 %v5245
        %5890 = vmatprep.subr.bf16.mxu0 %v5250
        %5891 = vmatpush1.bf16.msra.mxu0 %v5249
        %5892 = vmatprep.subr.bf16.mxu0 %v5254
        %5893 = vmatpush1.bf16.msra.mxu0 %v5253
        %5894 = vmatprep.subr.bf16.mxu0 %v5258
        %5895 = vmatpush1.bf16.msra.mxu0 %v5257
        %5896 = vmatprep.subr.bf16.mxu0 %v5262
        %5897 = vmatpush1.bf16.msra.mxu0 %v5261
        %5898 = vmatprep.subr.bf16.mxu0 %v5266
        %5899 = vmatpush1.bf16.msra.mxu0 %v5265
        %5900 = vmatprep.subr.bf16.mxu0 %v5270
        %5901 = vmatpush1.bf16.msra.mxu0 %v5269
        %5902 = vmatprep.subr.bf16.mxu0 %v5274
        %5903 = vmatpush1.bf16.msra.mxu0 %v5273
        %5904 = vmatprep.subr.bf16.mxu0 %v5278
        %5905 = vmatpush1.bf16.msra.mxu0 %v5277
        %5906 = vmatprep.subr.bf16.mxu0 %v5282
        %5907 = vmatpush1.bf16.msra.mxu0 %v5281
        %5908 = vmatprep.subr.bf16.mxu0 %v5286
        %5909 = vmatpush1.bf16.msra.mxu0 %v5285
        %5910 = vmatprep.subr.bf16.mxu0 %v5290
        %5911 = vmatpush1.bf16.msra.mxu0 %v5289
        %5912 = vmatprep.mubr.bf16.mxu0 %v4112
        %5913 = vmatmul.mubr.bf16.gmra.mrb[0].mxu0 %v4111
        %v5914 = vpop.f32.mrb[0].mxu0
        %v5915 = vadd.f32 %v5874, %v5914
        %v5916 = vpop.f32.mrb[0].mxu0
        %v5917 = vadd.f32 %v5876, %v5916
        %v5918 = vpop.f32.mrb[0].mxu0
        %v5919 = vpop.f32.mrb[0].mxu0
        %5920 = vdwg.mxu0
        %5921 = vmatprep.subr.bf16.mxu0 %v5294
        %5922 = vmatpush1.bf16.msra.mxu0 %v5293
        %5923 = vmatprep.subr.bf16.mxu0 %v5298
        %5924 = vmatpush1.bf16.msra.mxu0 %v5297
        %5925 = vmatprep.subr.bf16.mxu0 %v5302
        %5926 = vmatpush1.bf16.msra.mxu0 %v5301
        %5927 = vmatprep.subr.bf16.mxu0 %v5306
        %5928 = vmatpush1.bf16.msra.mxu0 %v5305
        %5929 = vmatprep.subr.bf16.mxu0 %v5310
        %5930 = vmatpush1.bf16.msra.mxu0 %v5309
        %5931 = vmatprep.subr.bf16.mxu0 %v5314
        %5932 = vmatpush1.bf16.msra.mxu0 %v5313
        %5933 = vmatprep.subr.bf16.mxu0 %v5318
        %5934 = vmatpush1.bf16.msra.mxu0 %v5317
        %5935 = vmatprep.subr.bf16.mxu0 %v5322
        %5936 = vmatpush1.bf16.msra.mxu0 %v5321
        %5937 = vmatprep.subr.bf16.mxu0 %v5326
        %5938 = vmatpush1.bf16.msra.mxu0 %v5325
        %5939 = vmatprep.subr.bf16.mxu0 %v5330
        %5940 = vmatpush1.bf16.msra.mxu0 %v5329
        %5941 = vmatprep.subr.bf16.mxu0 %v5334
        %5942 = vmatpush1.bf16.msra.mxu0 %v5333
        %5943 = vmatprep.subr.bf16.mxu0 %v5338
        %5944 = vmatpush1.bf16.msra.mxu0 %v5337
        %5945 = vmatprep.subr.bf16.mxu0 %v5342
        %5946 = vmatpush1.bf16.msra.mxu0 %v5341
        %5947 = vmatprep.subr.bf16.mxu0 %v5346
        %5948 = vmatpush1.bf16.msra.mxu0 %v5345
        %5949 = vmatprep.subr.bf16.mxu0 %v5350
        %5950 = vmatpush1.bf16.msra.mxu0 %v5349
        %5951 = vmatprep.subr.bf16.mxu0 %v5354
        %5952 = vmatpush1.bf16.msra.mxu0 %v5353
        %5953 = vmatprep.mubr.bf16.mxu0 %v4114
        %5954 = vmatmul.mubr.bf16.gmra.mrb[0].mxu0 %v4113
        %v5955 = vpop.f32.mrb[0].mxu0
        %v5956 = vadd.f32 %v5915, %v5955
        %v5957 = vpop.f32.mrb[0].mxu0
        %v5958 = vadd.f32 %v5917, %v5957
        %v5959 = vpop.f32.mrb[0].mxu0
        %v5960 = vpop.f32.mrb[0].mxu0
        %5961 = vdwg.mxu0
        %5962 = vmatprep.subr.bf16.mxu0 %v5358
        %5963 = vmatpush1.bf16.msra.mxu0 %v5357
        %5964 = vmatprep.subr.bf16.mxu0 %v5362
        %5965 = vmatpush1.bf16.msra.mxu0 %v5361
        %5966 = vmatprep.subr.bf16.mxu0 %v5366
        %5967 = vmatpush1.bf16.msra.mxu0 %v5365
        %5968 = vmatprep.subr.bf16.mxu0 %v5370
        %5969 = vmatpush1.bf16.msra.mxu0 %v5369
        %5970 = vmatprep.subr.bf16.mxu0 %v5374
        %5971 = vmatpush1.bf16.msra.mxu0 %v5373
        %5972 = vmatprep.subr.bf16.mxu0 %v5378
        %5973 = vmatpush1.bf16.msra.mxu0 %v5377
        %5974 = vmatprep.subr.bf16.mxu0 %v5382
        %5975 = vmatpush1.bf16.msra.mxu0 %v5381
        %5976 = vmatprep.subr.bf16.mxu0 %v5386
        %5977 = vmatpush1.bf16.msra.mxu0 %v5385
        %5978 = vmatprep.subr.bf16.mxu0 %v5390
        %5979 = vmatpush1.bf16.msra.mxu0 %v5389
        %5980 = vmatprep.subr.bf16.mxu0 %v5394
        %5981 = vmatpush1.bf16.msra.mxu0 %v5393
        %5982 = vmatprep.subr.bf16.mxu0 %v5398
        %5983 = vmatpush1.bf16.msra.mxu0 %v5397
        %5984 = vmatprep.subr.bf16.mxu0 %v5402
        %5985 = vmatpush1.bf16.msra.mxu0 %v5401
        %5986 = vmatprep.subr.bf16.mxu0 %v5406
        %5987 = vmatpush1.bf16.msra.mxu0 %v5405
        %5988 = vmatprep.subr.bf16.mxu0 %v5410
        %5989 = vmatpush1.bf16.msra.mxu0 %v5409
        %5990 = vmatprep.subr.bf16.mxu0 %v5414
        %5991 = vmatpush1.bf16.msra.mxu0 %v5413
        %5992 = vmatprep.subr.bf16.mxu0 %v5418
        %5993 = vmatpush1.bf16.msra.mxu0 %v5417
        %5994 = vmatprep.mubr.bf16.mxu0 %v4116
        %5995 = vmatmul.mubr.bf16.gmra.mrb[0].mxu0 %v4115
        %v5996 = vpop.f32.mrb[0].mxu0
        %v5997 = vadd.f32 %v5956, %v5996
        %v5998 = vpop.f32.mrb[0].mxu0
        %v5999 = vadd.f32 %v5958, %v5998
        %v6000 = vpop.f32.mrb[0].mxu0
        %v6001 = vpop.f32.mrb[0].mxu0
        %6002 = vdwg.mxu0
        %v6003 = vmax.f32 %v5833, 0.0
        %v6004 = vmax.f32 %v5835, 0.0
        %v6005 = vmax.f32 %v5997, 0.0
        %v6006 = vmax.f32 %v5999, 0.0
        %v6007 = vpack.c.bf16 %v6003, %v6003
        %v6008 = vpack.c.bf16 %v6004, %v6004
        %v6009 = vpack.c.bf16 %v6005, %v6005
        %v6010 = vpack.c.bf16 %v6006, %v6006
        %v6011 = vld [vmem:[%s7] sm:$0xf]
        %v6012 = vld [vmem:[%s7 + $0x4] sm:$0xf]
        %v6013 = vld [vmem:[%s7 + $0x8] sm:$0xf]
        %v6014 = vld [vmem:[%s7 + $0xc] sm:$0xf]
        %v6015 = vld [vmem:[%s7 + $0x10] sm:$0xf]
        %v6016 = vld [vmem:[%s7 + $0x14] sm:$0xf]
        %v6017 = vld [vmem:[%s7 + $0x18] sm:$0xf]
        %v6018 = vld [vmem:[%s7 + $0x1c] sm:$0xf]
        %v6019 = vld [vmem:[%s7 + $0x20] sm:$0xf]
        %v6020 = vld [vmem:[%s7 + $0x24] sm:$0xf]
        %v6021 = vld [vmem:[%s7 + $0x28] sm:$0xf]
        %v6022 = vld [vmem:[%s7 + $0x2c] sm:$0xf]
        %v6023 = vld [vmem:[%s7 + $0x30] sm:$0xf]
        %v6024 = vld [vmem:[%s7 + $0x34] sm:$0xf]
        %v6025 = vld [vmem:[%s7 + $0x38] sm:$0xf]
        %v6026 = vld [vmem:[%s7 + $0x3c] sm:$0xf]
        %v6027 = vld [vmem:[%s7 + $0x40] sm:$0xf]
        %v6028 = vld [vmem:[%s7 + $0x44] sm:$0xf]
        %v6029 = vld [vmem:[%s7 + $0x48] sm:$0xf]
        %v6030 = vld [vmem:[%s7 + $0x4c] sm:$0xf]
        %v6031 = vld [vmem:[%s7 + $0x50] sm:$0xf]
        %v6032 = vld [vmem:[%s7 + $0x54] sm:$0xf]
        %v6033 = vld [vmem:[%s7 + $0x58] sm:$0xf]
        %v6034 = vld [vmem:[%s7 + $0x5c] sm:$0xf]
        %v6035 = vld [vmem:[%s7 + $0x60] sm:$0xf]
        %v6036 = vld [vmem:[%s7 + $0x64] sm:$0xf]
        %v6037 = vld [vmem:[%s7 + $0x68] sm:$0xf]
        %v6038 = vld [vmem:[%s7 + $0x6c] sm:$0xf]
        %v6039 = vld [vmem:[%s7 + $0x70] sm:$0xf]
        %v6040 = vld [vmem:[%s7 + $0x74] sm:$0xf]
        %v6041 = vld [vmem:[%s7 + $0x78] sm:$0xf]
        %v6042 = vld [vmem:[%s7 + $0x7c] sm:$0xf]
        %v6043 = vld [vmem:[%s7 + $0x80] sm:$0xf]
        %v6044 = vld [vmem:[%s7 + $0x84] sm:$0xf]
        %v6045 = vld [vmem:[%s7 + $0x88] sm:$0xf]
        %v6046 = vld [vmem:[%s7 + $0x8c] sm:$0xf]
        %v6047 = vld [vmem:[%s7 + $0x90] sm:$0xf]
        %v6048 = vld [vmem:[%s7 + $0x94] sm:$0xf]
        %v6049 = vld [vmem:[%s7 + $0x98] sm:$0xf]
        %v6050 = vld [vmem:[%s7 + $0x9c] sm:$0xf]
        %v6051 = vld [vmem:[%s7 + $0xa0] sm:$0xf]
        %v6052 = vld [vmem:[%s7 + $0xa4] sm:$0xf]
        %v6053 = vld [vmem:[%s7 + $0xa8] sm:$0xf]
        %v6054 = vld [vmem:[%s7 + $0xac] sm:$0xf]
        %v6055 = vld [vmem:[%s7 + $0xb0] sm:$0xf]
        %v6056 = vld [vmem:[%s7 + $0xb4] sm:$0xf]
        %v6057 = vld [vmem:[%s7 + $0xb8] sm:$0xf]
        %v6058 = vld [vmem:[%s7 + $0xbc] sm:$0xf]
        %v6059 = vld [vmem:[%s7 + $0xc0] sm:$0xf]
        %v6060 = vld [vmem:[%s7 + $0xc4] sm:$0xf]
        %v6061 = vld [vmem:[%s7 + $0xc8] sm:$0xf]
        %v6062 = vld [vmem:[%s7 + $0xcc] sm:$0xf]
        %v6063 = vld [vmem:[%s7 + $0xd0] sm:$0xf]
        %v6064 = vld [vmem:[%s7 + $0xd4] sm:$0xf]
        %v6065 = vld [vmem:[%s7 + $0xd8] sm:$0xf]
        %v6066 = vld [vmem:[%s7 + $0xdc] sm:$0xf]
        %v6067 = vld [vmem:[%s7 + $0xe0] sm:$0xf]
        %v6068 = vld [vmem:[%s7 + $0xe4] sm:$0xf]
        %v6069 = vld [vmem:[%s7 + $0xe8] sm:$0xf]
        %v6070 = vld [vmem:[%s7 + $0xec] sm:$0xf]
        %v6071 = vld [vmem:[%s7 + $0xf0] sm:$0xf]
        %v6072 = vld [vmem:[%s7 + $0xf4] sm:$0xf]
        %v6073 = vld [vmem:[%s7 + $0xf8] sm:$0x3]
        %v6074 = vld [vmem:[%s8] sm:$0x1]
        %v6076 = vlaneseq
        %v6077 = vshrl.u32 %v6076, 7
        %v6078 = vsub.s32 0, %v6077
        %v6079 = vrot.slane %v6074, %v6078
        %v6144 = vunpack.c.l.b16 %v6011
        %v6145 = vunpack.c.l.b16 %v6012
        %v6146 = vunpack.c.l.b16 %v6013
        %v6147 = vunpack.c.l.b16 %v6014
        %v6148 = vunpack.c.l.b16 %v6015
        %v6149 = vunpack.c.l.b16 %v6016
        %v6150 = vunpack.c.l.b16 %v6017
        %v6151 = vunpack.c.l.b16 %v6018
        %v6152 = vunpack.c.l.b16 %v6019
        %v6153 = vunpack.c.l.b16 %v6020
        %v6154 = vunpack.c.l.b16 %v6021
        %v6155 = vunpack.c.l.b16 %v6022
        %v6156 = vunpack.c.l.b16 %v6023
        %v6157 = vunpack.c.l.b16 %v6024
        %v6158 = vunpack.c.l.b16 %v6025
        %v6159 = vunpack.c.l.b16 %v6026
        %v6160 = vunpack.c.l.b16 %v6027
        %v6161 = vunpack.c.l.b16 %v6028
        %v6162 = vunpack.c.l.b16 %v6029
        %v6163 = vunpack.c.l.b16 %v6030
        %v6164 = vunpack.c.l.b16 %v6031
        %v6165 = vunpack.c.l.b16 %v6032
        %v6166 = vunpack.c.l.b16 %v6033
        %v6167 = vunpack.c.l.b16 %v6034
        %v6168 = vunpack.c.l.b16 %v6035
        %v6169 = vunpack.c.l.b16 %v6036
        %v6170 = vunpack.c.l.b16 %v6037
        %v6171 = vunpack.c.l.b16 %v6038
        %v6172 = vunpack.c.l.b16 %v6039
        %v6173 = vunpack.c.l.b16 %v6040
        %v6174 = vunpack.c.l.b16 %v6041
        %v6175 = vunpack.c.l.b16 %v6042
        %v6176 = vunpack.c.l.b16 %v6043
        %v6177 = vunpack.c.l.b16 %v6044
        %v6178 = vunpack.c.l.b16 %v6045
        %v6179 = vunpack.c.l.b16 %v6046
        %v6180 = vunpack.c.l.b16 %v6047
        %v6181 = vunpack.c.l.b16 %v6048
        %v6182 = vunpack.c.l.b16 %v6049
        %v6183 = vunpack.c.l.b16 %v6050
        %v6184 = vunpack.c.l.b16 %v6051
        %v6185 = vunpack.c.l.b16 %v6052
        %v6186 = vunpack.c.l.b16 %v6053
        %v6187 = vunpack.c.l.b16 %v6054
        %v6188 = vunpack.c.l.b16 %v6055
        %v6189 = vunpack.c.l.b16 %v6056
        %v6190 = vunpack.c.l.b16 %v6057
        %v6191 = vunpack.c.l.b16 %v6058
        %v6192 = vunpack.c.l.b16 %v6059
        %v6193 = vunpack.c.l.b16 %v6060
        %v6194 = vunpack.c.l.b16 %v6061
        %v6195 = vunpack.c.l.b16 %v6062
        %v6196 = vunpack.c.l.b16 %v6063
        %v6197 = vunpack.c.l.b16 %v6064
        %v6198 = vunpack.c.l.b16 %v6065
        %v6199 = vunpack.c.l.b16 %v6066
        %v6200 = vunpack.c.l.b16 %v6067
        %v6201 = vunpack.c.l.b16 %v6068
        %v6202 = vunpack.c.l.b16 %v6069
        %v6203 = vunpack.c.l.b16 %v6070
        %v6204 = vunpack.c.l.b16 %v6071
        %v6205 = vunpack.c.l.b16 %v6072
        %v6206 = vunpack.c.l.b16 %v6073
        %v6207 = vpack.c.b16 %v6145, %v6144
        %v6208 = vpack.c.b16 %v6147, %v6146
        %v6209 = vpack.c.b16 %v6149, %v6148
        %v6210 = vpack.c.b16 %v6151, %v6150
        %v6211 = vpack.c.b16 %v6153, %v6152
        %v6212 = vpack.c.b16 %v6155, %v6154
        %v6213 = vpack.c.b16 %v6157, %v6156
        %v6214 = vpack.c.b16 %v6159, %v6158
        %v6215 = vpack.c.b16 %v6161, %v6160
        %v6216 = vpack.c.b16 %v6163, %v6162
        %v6217 = vpack.c.b16 %v6165, %v6164
        %v6218 = vpack.c.b16 %v6167, %v6166
        %v6219 = vpack.c.b16 %v6169, %v6168
        %v6220 = vpack.c.b16 %v6171, %v6170
        %v6221 = vpack.c.b16 %v6173, %v6172
        %v6222 = vpack.c.b16 %v6175, %v6174
        %v6223 = vpack.c.b16 %v6177, %v6176
        %v6224 = vpack.c.b16 %v6179, %v6178
        %v6225 = vpack.c.b16 %v6181, %v6180
        %v6226 = vpack.c.b16 %v6183, %v6182
        %v6227 = vpack.c.b16 %v6185, %v6184
        %v6228 = vpack.c.b16 %v6187, %v6186
        %v6229 = vpack.c.b16 %v6189, %v6188
        %v6230 = vpack.c.b16 %v6191, %v6190
        %v6231 = vpack.c.b16 %v6193, %v6192
        %v6232 = vpack.c.b16 %v6195, %v6194
        %v6233 = vpack.c.b16 %v6197, %v6196
        %v6234 = vpack.c.b16 %v6199, %v6198
        %v6235 = vpack.c.b16 %v6201, %v6200
        %v6236 = vpack.c.b16 %v6203, %v6202
        %v6237 = vpack.c.b16 %v6205, %v6204
        %v6238 = vpack.c.b16 %v6206, %v6206
        %vm6270 = vcmask 949248
        %v6272 = vsel %vm6270, %v6010, 0
        %vm6274 = vcmask 1041408
        %v6276 = vsel %vm6274, %v6238, 0
        %6278 = vmatprep.subr.bf16.mxu0 0
        %6279 = vmatpush1.bf16.msra.mxu0 %v6207
        %6280 = vmatprep.subr.bf16.mxu0 0
        %6281 = vmatpush1.bf16.msra.mxu0 %v6208
        %6282 = vmatprep.subr.bf16.mxu0 0
        %6283 = vmatpush1.bf16.msra.mxu0 %v6209
        %6284 = vmatprep.subr.bf16.mxu0 0
        %6285 = vmatpush1.bf16.msra.mxu0 %v6210
        %6286 = vmatprep.subr.bf16.mxu0 0
        %6287 = vmatpush1.bf16.msra.mxu0 %v6211
        %6288 = vmatprep.subr.bf16.mxu0 0
        %6289 = vmatpush1.bf16.msra.mxu0 %v6212
        %6290 = vmatprep.subr.bf16.mxu0 0
        %6291 = vmatpush1.bf16.msra.mxu0 %v6213
        %6292 = vmatprep.subr.bf16.mxu0 0
        %6293 = vmatpush1.bf16.msra.mxu0 %v6214
        %6294 = vmatprep.subr.bf16.mxu0 0
        %6295 = vmatpush1.bf16.msra.mxu0 %v6215
        %6296 = vmatprep.subr.bf16.mxu0 0
        %6297 = vmatpush1.bf16.msra.mxu0 %v6216
        %6298 = vmatprep.subr.bf16.mxu0 0
        %6299 = vmatpush1.bf16.msra.mxu0 %v6217
        %6300 = vmatprep.subr.bf16.mxu0 0
        %6301 = vmatpush1.bf16.msra.mxu0 %v6218
        %6302 = vmatprep.subr.bf16.mxu0 0
        %6303 = vmatpush1.bf16.msra.mxu0 %v6219
        %6304 = vmatprep.subr.bf16.mxu0 0
        %6305 = vmatpush1.bf16.msra.mxu0 %v6220
        %6306 = vmatprep.subr.bf16.mxu0 0
        %6307 = vmatpush1.bf16.msra.mxu0 %v6221
        %6308 = vmatprep.subr.bf16.mxu0 0
        %6309 = vmatpush1.bf16.msra.mxu0 %v6222
        %6310 = vmatprep.mubr.bf16.mxu0 %v6008
        %6311 = vmatmul.mubr.bf16.gmra.mrb[0].mxu0 %v6007
        %v6312 = vpop.f32.mrb[0].mxu0
        %v6313 = vadd.f32 %v6079, %v6312
        %v6314 = vpop.f32.mrb[0].mxu0
        %v6315 = vpop.f32.mrb[0].mxu0
        %v6316 = vpop.f32.mrb[0].mxu0
        %6317 = vdwg.mxu0
        %6318 = vmatprep.subr.bf16.mxu0 0
        %6319 = vmatpush1.bf16.msra.mxu0 %v6223
        %6320 = vmatprep.subr.bf16.mxu0 0
        %6321 = vmatpush1.bf16.msra.mxu0 %v6224
        %6322 = vmatprep.subr.bf16.mxu0 0
        %6323 = vmatpush1.bf16.msra.mxu0 %v6225
        %6324 = vmatprep.subr.bf16.mxu0 0
        %6325 = vmatpush1.bf16.msra.mxu0 %v6226
        %6326 = vmatprep.subr.bf16.mxu0 0
        %6327 = vmatpush1.bf16.msra.mxu0 %v6227
        %6328 = vmatprep.subr.bf16.mxu0 0
        %6329 = vmatpush1.bf16.msra.mxu0 %v6228
        %6330 = vmatprep.subr.bf16.mxu0 0
        %6331 = vmatpush1.bf16.msra.mxu0 %v6229
        %6332 = vmatprep.subr.bf16.mxu0 0
        %6333 = vmatpush1.bf16.msra.mxu0 %v6230
        %6334 = vmatprep.subr.bf16.mxu0 0
        %6335 = vmatpush1.bf16.msra.mxu0 %v6231
        %6336 = vmatprep.subr.bf16.mxu0 0
        %6337 = vmatpush1.bf16.msra.mxu0 %v6232
        %6338 = vmatprep.subr.bf16.mxu0 0
        %6339 = vmatpush1.bf16.msra.mxu0 %v6233
        %6340 = vmatprep.subr.bf16.mxu0 0
        %6341 = vmatpush1.bf16.msra.mxu0 %v6234
        %6342 = vmatprep.subr.bf16.mxu0 0
        %6343 = vmatpush1.bf16.msra.mxu0 %v6235
        %6344 = vmatprep.subr.bf16.mxu0 0
        %6345 = vmatpush1.bf16.msra.mxu0 %v6236
        %6346 = vmatprep.subr.bf16.mxu0 0
        %6347 = vmatpush1.bf16.msra.mxu0 %v6237
        %6348 = vmatprep.subr.bf16.mxu0 0
        %6349 = vmatpush1.bf16.msra.mxu0 %v6276
        %6350 = vmatprep.mubr.bf16.mxu0 %v6272
        %6351 = vmatmul.mubr.bf16.gmra.mrb[0].mxu0 %v6009
        %v6352 = vpop.f32.mrb[0].mxu0
        %v6353 = vadd.f32 %v6313, %v6352
        %v6354 = vpop.f32.mrb[0].mxu0
        %v6355 = vpop.f32.mrb[0].mxu0
        %v6356 = vpop.f32.mrb[0].mxu0
        %6357 = vdwg.mxu0
        %6358 = vmax.xlane.f32.xlu0 %v6353
        %v6359 = vpop.xlane.xlu0 %6358
        %v6360 = vsub.f32 %v6353, %v6359
        %v6361 = vmul.f32 %v6360, 1.442695
        %v6362 = vpow.pop %v6361
        %6363 = vadd.xlane.f32.xlu0 %v6362
        %v6364 = vpop.xlane.xlu0 %6363
        %v6365 = vlog2.pop %v6364
        %v6366 = vmul.f32 %v6365, 0.6931472
        %v6367 = vsub.f32 %v6360, %v6366
        %6368 = vst [vmem:[%s328] sm:$0xff] %v6367
        %s6369 = sand.u32 %s225, 1
        %s6370 = scalar_lea.sflag [#allocation3], %s6369
        %s6371 = sand.u32 %s225, 1
        %s6372 = smul.addr %s6371, 8
        %s6373 = scalar_lea.vmem [#allocation2], %s6372
        // Predicated region
        $region57: #{famnist_forward.1} parent=55 // pred_check
          %p6374 = pneg %p235
        $region58: #{famnist_forward.1} parent=55 // pred_check_branch
          %6376 = sbr.rel (%p6374) target = $region60
        $region59: #{famnist_forward.1} parent=55 // pred_region
          %s6378 = ssub.s32 128, 128
          %6379 = vsyncadd %s6370, %s6378
          %s6380 = smul.addr %s23, 128
          %s6381 = scalar_lea.hbm %s9, %s6380
          %s6383 = sshll.u32 %s6373, 4
          %s6384 = int_to_ptr.vmem [resolvable:$true] %s6383
          %6386 = dma.vmem_to_hbm [thread:$0]  %s6384, 128, %s6381, %s6370
        $region60: #{famnist_forward.1} parent=55 // pred_fallthru
          _
      $region56: #{famnist_forward.1} parent=5 // pred_fallthru
        _
      %p6387 = scmp.le.s32.totalorder 2, %s18
      // Predicated region
      $region61: #{famnist_forward.1} parent=5 // pred_check
        %p6388 = pneg %p6387
      $region62: #{famnist_forward.1} parent=5 // pred_check_branch
        %6390 = sbr.rel (%p6388) target = $region64
      $region63: #{famnist_forward.1} parent=5 // pred_region
        %s6391 = ssub.s32 %s18, 2
        // Predicated region
        $region65: #{famnist_forward.1} parent=63 // pred_check
          %p6392 = pneg %p241
        $region66: #{famnist_forward.1} parent=63 // pred_check_branch
          %6394 = sbr.rel (%p6392) target = $region68
        $region67: #{famnist_forward.1} parent=63 // pred_region
          %s6395 = sand.u32 %s226, 1
          %s6396 = scalar_lea.sflag [#allocation3], %s6395
          %s6397 = sand.u32 %s226, 1
          %s6398 = smul.addr %s6397, 8
          %s6399 = scalar_lea.vmem [#allocation2], %s6398
          %6400 = dma.done %s6396, 128
        $region68: #{famnist_forward.1} parent=63 // pred_fallthru
          _
      $region64: #{famnist_forward.1} parent=5 // pred_fallthru
        _
    $region6: #{famnist_forward.1} parent=1 // loop_footer
      %s22 = sadd.s32 1, %s18
    $region7: #{famnist_forward.1} parent=1 // loop_footer_branch
      %17 = sbr.rel target = $region3
    $region8: #{famnist_forward.1} parent=1 // loop_exit
      _
    %6401 = vsyncpa [#allocation3], 1
    %s6402 = scalar_lea.sflag [#allocation3], 1
    %6403 = vsyncpa %s6402, 1

</llo_original>
